<compile_context>
chip_gen: v5e
topology: v5e:2x2
jax: 0.10.0
libtpu: 0.0.40
codegen_flags: <defaults>
</compile_context>

<pallas_src>
import functools

import jax
import jax.numpy as jnp
import numpy as np
from jax import lax
from jax.experimental import pallas as pl
from jax.experimental.pallas import tpu as pltpu


# Tap order: t = (dy + 1) * 3 + (dx + 1); the center tap (t == 4) needs no edge mask.
_MASK_IDX = (0, 1, 2, 3, None, 4, 5, 6, 7)


def _build_tap_masks(nb, H, W, dtype):
    """(8, nb*H*W, 1) 0/1 'keep' masks, one column per non-center tap.

    Pre-shift zeroing of the appropriate image border makes the flattened roll
    equivalent to zero padding (and kills cross-image / wrap-around contamination).
    Built with numpy so they become compile-time constants (zero in-kernel VPU work).
    """
    M = nb * H * W
    idx = np.arange(M)
    row = (idx // W) % H
    col = idx % W
    keep_row = {1: row >= 1, -1: row <= H - 2}   # dy == +1 drops row 0, dy == -1 drops row H-1
    keep_col = {1: col >= 1, -1: col <= W - 2}   # dx == +1 drops col 0, dx == -1 drops col W-1
    masks = []
    for dy in (-1, 0, 1):
        for dx in (-1, 0, 1):
            if dy == 0 and dx == 0:
                continue
            m = np.ones(M, dtype=bool)
            if dy != 0:
                m &= keep_row[dy]
            if dx != 0:
                m &= keep_col[dx]
            masks.append(m)
    return jnp.asarray(np.stack(masks)[..., None], dtype=dtype)   # (8, M, 1)


def _conv3x3_accum(x2d, w_ref, masks_ref, shifts):
    """3x3 'same' conv as 9 accumulated K=C MXU dots (no im2col slab).

    x2d       : (M, C) activations in compute_dtype, M = nb*H*W.
    w_ref     : (9, C, C) weight ref (compute_dtype), tap-major, each tap (Cin, Cout).
    masks_ref : (8, M, 1) 0/1 edge masks in compute_dtype.
    shifts    : 9 static flattened-roll shifts in tap order.
    Returns an f32 (M, C) accumulator.
    """
    acc = None
    for t in range(9):
        mi = _MASK_IDX[t]
        v = x2d if mi is None else x2d * masks_ref[mi]      # (M,1) lane-broadcast mask
        if shifts[t]:
            v = pltpu.roll(v, shift=shifts[t], axis=0)      # XLU sublane rotation
        d = jnp.dot(v, w_ref[t], preferred_element_type=jnp.float32)
        acc = d if acc is None else acc + d                 # f32 accumulate (VPU / MRB)
    return acc


def _residual_block_kernel(x_ref, masks_ref, w1_ref, w2_ref,
                           s1_ref, b1_ref, s2_ref, b2_ref, o_ref):
    nb, H, W, C = x_ref.shape
    M = nb * H * W
    cdtype = x_ref.dtype

    # Single activation load (compute_dtype); also serves as the residual.
    x2d = x_ref[...].reshape(M, C)

    # Static per-tap flattened-roll shifts (dy, dx order).
    shifts = tuple((-(dy * W + dx)) % M for dy in (-1, 0, 1) for dx in (-1, 0, 1))

    # conv1 -> bn1 (folded affine, f32) -> relu -> back to compute_dtype for conv2.
    h1 = _conv3x3_accum(x2d, w1_ref, masks_ref, shifts)
    a1 = jnp.maximum(h1 * s1_ref[...] + b1_ref[...], 0.0).astype(cdtype)

    # conv2 -> bn2 -> + residual (upcast only here) -> relu.
    h2 = _conv3x3_accum(a1, w2_ref, masks_ref, shifts)
    out = jnp.maximum(h2 * s2_ref[...] + b2_ref[...] + x2d.astype(jnp.float32), 0.0)

    o_ref[...] = out.reshape(nb, H, W, C).astype(o_ref.dtype)


@functools.partial(jax.jit,
                   static_argnames=("compute_dtype", "nb", "vmem_limit_bytes"))
def residual_block(x_nchw, w1_oihw, w2_oihw, scale1, bias1, scale2, bias2,
                   *, compute_dtype=jnp.float32, nb=1, vmem_limit_bytes=None):
    """x_nchw: (N, C, H, W) float32. Returns (N, C, H, W) float32.

    compute_dtype: dtype of the MXU operands, masks/rolls and the activation HBM
                   stream.  RECOMMENDED: jnp.bfloat16 in production -- the MXU is
                   bf16-native on v5e/v6e/v7x (f32 matmul is emulated on v5e), it
                   halves activation HBM traffic, and accumulation / BN / ReLU /
                   residual stay in f32.  Default f32 keeps exact module semantics.
    nb:            images per grid step (amortizes per-step overhead for tiny H*W*C);
                   keep N // nb >= 2 so both v7x TensorCores get work.
    vmem_limit_bytes: optional explicit scoped-VMEM limit for very large shapes
                   (only needed well beyond 56x56x256 now that the 9C slab is gone).
    """
    N, C, H, W = x_nchw.shape
    assert N % nb == 0
    assert H >= 2 and W >= 2, "halo masks assume H >= 2 and W >= 2"

    # NCHW -> NHWC (channels on the lane axis); halo handled in-kernel, no padding.
    x = jnp.transpose(x_nchw, (0, 2, 3, 1)).astype(compute_dtype)

    # Conv weights (Cout, Cin, 3, 3) -> tap-major (9, Cin, Cout), tap t = ky*3 + kx.
    w1 = jnp.transpose(w1_oihw, (2, 3, 1, 0)).reshape(9, C, C).astype(compute_dtype)
    w2 = jnp.transpose(w2_oihw, (2, 3, 1, 0)).reshape(9, C, C).astype(compute_dtype)

    s1 = scale1.reshape(1, C).astype(jnp.float32)
    b1 = bias1.reshape(1, C).astype(jnp.float32)
    s2 = scale2.reshape(1, C).astype(jnp.float32)
    b2 = bias2.reshape(1, C).astype(jnp.float32)

    M = nb * H * W
    masks = _build_tap_masks(nb, H, W, compute_dtype)   # (8, M, 1) constants

    cp_kwargs = dict(dimension_semantics=("parallel",))
    if vmem_limit_bytes is not None:
        cp_kwargs["vmem_limit_bytes"] = vmem_limit_bytes

    out_nhwc = pl.pallas_call(
        _residual_block_kernel,
        out_shape=jax.ShapeDtypeStruct((N, H, W, C), jnp.float32),
        grid_spec=pltpu.PrefetchScalarGridSpec(
            num_scalar_prefetch=0,
            grid=(N // nb,),
            in_specs=[
                pl.BlockSpec((nb, H, W, C), lambda n: (n, 0, 0, 0)),   # x (only act stream)
                pl.BlockSpec((8, M, 1), lambda n: (0, 0, 0)),          # edge masks (resident)
                pl.BlockSpec((9, C, C), lambda n: (0, 0, 0)),          # w1 (resident)
                pl.BlockSpec((9, C, C), lambda n: (0, 0, 0)),          # w2 (resident)
                pl.BlockSpec((1, C), lambda n: (0, 0)),                # bn1 scale
                pl.BlockSpec((1, C), lambda n: (0, 0)),                # bn1 bias
                pl.BlockSpec((1, C), lambda n: (0, 0)),                # bn2 scale
                pl.BlockSpec((1, C), lambda n: (0, 0)),                # bn2 bias
            ],
            out_specs=pl.BlockSpec((nb, H, W, C), lambda n: (n, 0, 0, 0)),
        ),
        compiler_params=pltpu.CompilerParams(**cp_kwargs),
    )(x, masks, w1, w2, s1, b1, s2, b2)

    # NHWC -> NCHW
    return jnp.transpose(out_nhwc, (0, 3, 1, 2))


def _reference(x_nchw, w1, w2, s1, b1, s2, b2):
    """Pure-JAX reference (same math, XLA convs) for verification."""
    dn = ('NCHW', 'OIHW', 'NCHW')
    out = lax.conv_general_dilated(x_nchw, w1, (1, 1), ((1, 1), (1, 1)),
                                   dimension_numbers=dn)
    out = out * s1[None, :, None, None] + b1[None, :, None, None]
    out = jnp.maximum(out, 0.0)
    out = lax.conv_general_dilated(out, w2, (1, 1), ((1, 1), (1, 1)),
                                   dimension_numbers=dn)
    out = out * s2[None, :, None, None] + b2[None, :, None, None]
    out = out + x_nchw
    return jnp.maximum(out, 0.0)


if __name__ == "__main__":
    N, C, H, W = 2, 8, 16, 16
    eps = 1e-5

    key = jax.random.PRNGKey(0)
    kx, kw1, kw2, kg1, kb1, km1, kv1, kg2, kb2, km2, kv2 = jax.random.split(key, 11)

    # Deterministic synthetic parameters (shapes from ResidualBlock.__init__).
    x = jax.random.normal(kx, (N, C, H, W), jnp.float32)
    w1 = jax.random.normal(kw1, (C, C, 3, 3), jnp.float32) * 0.1   # conv1 (no bias)
    w2 = jax.random.normal(kw2, (C, C, 3, 3), jnp.float32) * 0.1   # conv2 (no bias)

    # BatchNorm2d params + running stats (eval-mode), folded to scale/bias.
    gamma1 = 1.0 + 0.1 * jax.random.normal(kg1, (C,), jnp.float32)
    beta1 = 0.1 * jax.random.normal(kb1, (C,), jnp.float32)
    mean1 = 0.1 * jax.random.normal(km1, (C,), jnp.float32)
    var1 = 0.5 + jnp.abs(jax.random.normal(kv1, (C,), jnp.float32))
    gamma2 = 1.0 + 0.1 * jax.random.normal(kg2, (C,), jnp.float32)
    beta2 = 0.1 * jax.random.normal(kb2, (C,), jnp.float32)
    mean2 = 0.1 * jax.random.normal(km2, (C,), jnp.float32)
    var2 = 0.5 + jnp.abs(jax.random.normal(kv2, (C,), jnp.float32))

    scale1 = gamma1 / jnp.sqrt(var1 + eps)
    bias1 = beta1 - mean1 * scale1
    scale2 = gamma2 / jnp.sqrt(var2 + eps)
    bias2 = beta2 - mean2 * scale2

    ref = _reference(x, w1, w2, scale1, bias1, scale2, bias2)

    # f32 path (default): exact module semantics, tight tolerance.
    out_f32 = jax.block_until_ready(
        residual_block(x, w1, w2, scale1, bias1, scale2, bias2))
    np.testing.assert_allclose(np.asarray(out_f32), np.asarray(ref),
                               rtol=2e-4, atol=2e-4)

    # bf16 MXU-operand path (recommended in production; f32 accumulation/BN/ReLU/add):
    out_bf16 = jax.block_until_ready(
        residual_block(x, w1, w2, scale1, bias1, scale2, bias2,
                       compute_dtype=jnp.bfloat16))
    np.testing.assert_allclose(np.asarray(out_bf16), np.asarray(ref),
                               rtol=1e-1, atol=1e-1)

    print("KERNEL_OK")
</pallas_src>

<mosaic_0001>
module attributes {stable_mosaic.version = 11 : i64} {
  func.func @_residual_block_kernel(%arg0: i32, %arg1: memref<1x16x16x8xf32, #tpu.memory_space<vmem>>, %arg2: memref<8x256x1xf32, #tpu.memory_space<vmem>>, %arg3: memref<9x8x8xf32, #tpu.memory_space<vmem>>, %arg4: memref<9x8x8xf32, #tpu.memory_space<vmem>>, %arg5: memref<1x8xf32, #tpu.memory_space<vmem>>, %arg6: memref<1x8xf32, #tpu.memory_space<vmem>>, %arg7: memref<1x8xf32, #tpu.memory_space<vmem>>, %arg8: memref<1x8xf32, #tpu.memory_space<vmem>>, %arg9: memref<1x16x16x8xf32, #tpu.memory_space<vmem>>) attributes {dimension_semantics = [#tpu.dimension_semantics<parallel>], iteration_bounds = array<i64: 2>, scalar_prefetch = 0 : i64, scratch_operands = 0 : i64, tpu.core_type = #tpu.core_type<tc>, window_params = [{transform_indices = @transform_0, window_bounds = array<i64: 1, 16, 16, 8>}, {pipeline_mode = #tpu.pipeline_mode<synchronous>, transform_indices = @transform_1, window_bounds = array<i64: 8, 256, 1>}, {pipeline_mode = #tpu.pipeline_mode<synchronous>, transform_indices = @transform_2, window_bounds = array<i64: 9, 8, 8>}, {pipeline_mode = #tpu.pipeline_mode<synchronous>, transform_indices = @transform_3, window_bounds = array<i64: 9, 8, 8>}, {pipeline_mode = #tpu.pipeline_mode<synchronous>, transform_indices = @transform_4, window_bounds = array<i64: 1, 8>}, {pipeline_mode = #tpu.pipeline_mode<synchronous>, transform_indices = @transform_5, window_bounds = array<i64: 1, 8>}, {pipeline_mode = #tpu.pipeline_mode<synchronous>, transform_indices = @transform_6, window_bounds = array<i64: 1, 8>}, {pipeline_mode = #tpu.pipeline_mode<synchronous>, transform_indices = @transform_7, window_bounds = array<i64: 1, 8>}, {transform_indices = @transform_8, window_bounds = array<i64: 1, 16, 16, 8>}]} {
    %c0 = arith.constant 0 : index
    %c0_0 = arith.constant 0 : index
    %c0_1 = arith.constant 0 : index
    %c0_2 = arith.constant 0 : index
    %0 = vector.load %arg1[%c0, %c0_0, %c0_1, %c0_2] : memref<1x16x16x8xf32, #tpu.memory_space<vmem>>, vector<1x16x16x8xf32>
    %1 = vector.shape_cast %0 : vector<1x16x16x8xf32> to vector<256x8xf32>
    %c0_3 = arith.constant 0 : index
    %c0_4 = arith.constant 0 : index
    %c0_5 = arith.constant 0 : index
    %2 = vector.load %arg2[%c0_3, %c0_4, %c0_5] : memref<8x256x1xf32, #tpu.memory_space<vmem>>, vector<1x256x1xf32>
    %3 = vector.shape_cast %2 : vector<1x256x1xf32> to vector<256x1xf32>
    %4 = vector.broadcast %3 : vector<256x1xf32> to vector<256x8xf32>
    %5 = arith.mulf %1, %4 : vector<256x8xf32>
    %c17_i32 = arith.constant 17 : i32
    %6 = tpu.dynamic_rotate %5 by %c17_i32 dim 0 : vector<256x8xf32>, i32 -> vector<256x8xf32>
    %c0_6 = arith.constant 0 : index
    %c0_7 = arith.constant 0 : index
    %c0_8 = arith.constant 0 : index
    %7 = vector.load %arg3[%c0_6, %c0_7, %c0_8] : memref<9x8x8xf32, #tpu.memory_space<vmem>>, vector<1x8x8xf32>
    %8 = vector.shape_cast %7 : vector<1x8x8xf32> to vector<8x8xf32>
    %cst = arith.constant dense<0.000000e+00> : vector<256x8xf32>
    %9 = tpu.matmul %6, %8, %cst {dimension_numbers = #tpu.dot_dimension_numbers<[1], [0], [0], [1], [0, 0, 1, 1], [], []>} : vector<256x8xf32>, vector<8x8xf32>, vector<256x8xf32> -> vector<256x8xf32>
    %c1 = arith.constant 1 : index
    %c0_9 = arith.constant 0 : index
    %c0_10 = arith.constant 0 : index
    %10 = vector.load %arg2[%c1, %c0_9, %c0_10] : memref<8x256x1xf32, #tpu.memory_space<vmem>>, vector<1x256x1xf32>
    %11 = vector.shape_cast %10 : vector<1x256x1xf32> to vector<256x1xf32>
    %12 = vector.broadcast %11 : vector<256x1xf32> to vector<256x8xf32>
    %13 = arith.mulf %1, %12 : vector<256x8xf32>
    %c16_i32 = arith.constant 16 : i32
    %14 = tpu.dynamic_rotate %13 by %c16_i32 dim 0 : vector<256x8xf32>, i32 -> vector<256x8xf32>
    %c1_11 = arith.constant 1 : index
    %c0_12 = arith.constant 0 : index
    %c0_13 = arith.constant 0 : index
    %15 = vector.load %arg3[%c1_11, %c0_12, %c0_13] : memref<9x8x8xf32, #tpu.memory_space<vmem>>, vector<1x8x8xf32>
    %16 = vector.shape_cast %15 : vector<1x8x8xf32> to vector<8x8xf32>
    %cst_14 = arith.constant dense<0.000000e+00> : vector<256x8xf32>
    %17 = tpu.matmul %14, %16, %cst_14 {dimension_numbers = #tpu.dot_dimension_numbers<[1], [0], [0], [1], [0, 0, 1, 1], [], []>} : vector<256x8xf32>, vector<8x8xf32>, vector<256x8xf32> -> vector<256x8xf32>
    %18 = arith.addf %9, %17 : vector<256x8xf32>
    %c2 = arith.constant 2 : index
    %c0_15 = arith.constant 0 : index
    %c0_16 = arith.constant 0 : index
    %19 = vector.load %arg2[%c2, %c0_15, %c0_16] : memref<8x256x1xf32, #tpu.memory_space<vmem>>, vector<1x256x1xf32>
    %20 = vector.shape_cast %19 : vector<1x256x1xf32> to vector<256x1xf32>
    %21 = vector.broadcast %20 : vector<256x1xf32> to vector<256x8xf32>
    %22 = arith.mulf %1, %21 : vector<256x8xf32>
    %c15_i32 = arith.constant 15 : i32
    %23 = tpu.dynamic_rotate %22 by %c15_i32 dim 0 : vector<256x8xf32>, i32 -> vector<256x8xf32>
    %c2_17 = arith.constant 2 : index
    %c0_18 = arith.constant 0 : index
    %c0_19 = arith.constant 0 : index
    %24 = vector.load %arg3[%c2_17, %c0_18, %c0_19] : memref<9x8x8xf32, #tpu.memory_space<vmem>>, vector<1x8x8xf32>
    %25 = vector.shape_cast %24 : vector<1x8x8xf32> to vector<8x8xf32>
    %cst_20 = arith.constant dense<0.000000e+00> : vector<256x8xf32>
    %26 = tpu.matmul %23, %25, %cst_20 {dimension_numbers = #tpu.dot_dimension_numbers<[1], [0], [0], [1], [0, 0, 1, 1], [], []>} : vector<256x8xf32>, vector<8x8xf32>, vector<256x8xf32> -> vector<256x8xf32>
    %27 = arith.addf %18, %26 : vector<256x8xf32>
    %c3 = arith.constant 3 : index
    %c0_21 = arith.constant 0 : index
    %c0_22 = arith.constant 0 : index
    %28 = vector.load %arg2[%c3, %c0_21, %c0_22] : memref<8x256x1xf32, #tpu.memory_space<vmem>>, vector<1x256x1xf32>
    %29 = vector.shape_cast %28 : vector<1x256x1xf32> to vector<256x1xf32>
    %30 = vector.broadcast %29 : vector<256x1xf32> to vector<256x8xf32>
    %31 = arith.mulf %1, %30 : vector<256x8xf32>
    %c1_i32 = arith.constant 1 : i32
    %32 = tpu.dynamic_rotate %31 by %c1_i32 dim 0 : vector<256x8xf32>, i32 -> vector<256x8xf32>
    %c3_23 = arith.constant 3 : index
    %c0_24 = arith.constant 0 : index
    %c0_25 = arith.constant 0 : index
    %33 = vector.load %arg3[%c3_23, %c0_24, %c0_25] : memref<9x8x8xf32, #tpu.memory_space<vmem>>, vector<1x8x8xf32>
    %34 = vector.shape_cast %33 : vector<1x8x8xf32> to vector<8x8xf32>
    %cst_26 = arith.constant dense<0.000000e+00> : vector<256x8xf32>
    %35 = tpu.matmul %32, %34, %cst_26 {dimension_numbers = #tpu.dot_dimension_numbers<[1], [0], [0], [1], [0, 0, 1, 1], [], []>} : vector<256x8xf32>, vector<8x8xf32>, vector<256x8xf32> -> vector<256x8xf32>
    %36 = arith.addf %27, %35 : vector<256x8xf32>
    %c4 = arith.constant 4 : index
    %c0_27 = arith.constant 0 : index
    %c0_28 = arith.constant 0 : index
    %37 = vector.load %arg3[%c4, %c0_27, %c0_28] : memref<9x8x8xf32, #tpu.memory_space<vmem>>, vector<1x8x8xf32>
    %38 = vector.shape_cast %37 : vector<1x8x8xf32> to vector<8x8xf32>
    %cst_29 = arith.constant dense<0.000000e+00> : vector<256x8xf32>
    %39 = tpu.matmul %1, %38, %cst_29 {dimension_numbers = #tpu.dot_dimension_numbers<[1], [0], [0], [1], [0, 0, 1, 1], [], []>} : vector<256x8xf32>, vector<8x8xf32>, vector<256x8xf32> -> vector<256x8xf32>
    %40 = arith.addf %36, %39 : vector<256x8xf32>
    %c4_30 = arith.constant 4 : index
    %c0_31 = arith.constant 0 : index
    %c0_32 = arith.constant 0 : index
    %41 = vector.load %arg2[%c4_30, %c0_31, %c0_32] : memref<8x256x1xf32, #tpu.memory_space<vmem>>, vector<1x256x1xf32>
    %42 = vector.shape_cast %41 : vector<1x256x1xf32> to vector<256x1xf32>
    %43 = vector.broadcast %42 : vector<256x1xf32> to vector<256x8xf32>
    %44 = arith.mulf %1, %43 : vector<256x8xf32>
    %c255_i32 = arith.constant 255 : i32
    %45 = tpu.dynamic_rotate %44 by %c255_i32 dim 0 : vector<256x8xf32>, i32 -> vector<256x8xf32>
    %c5 = arith.constant 5 : index
    %c0_33 = arith.constant 0 : index
    %c0_34 = arith.constant 0 : index
    %46 = vector.load %arg3[%c5, %c0_33, %c0_34] : memref<9x8x8xf32, #tpu.memory_space<vmem>>, vector<1x8x8xf32>
    %47 = vector.shape_cast %46 : vector<1x8x8xf32> to vector<8x8xf32>
    %cst_35 = arith.constant dense<0.000000e+00> : vector<256x8xf32>
    %48 = tpu.matmul %45, %47, %cst_35 {dimension_numbers = #tpu.dot_dimension_numbers<[1], [0], [0], [1], [0, 0, 1, 1], [], []>} : vector<256x8xf32>, vector<8x8xf32>, vector<256x8xf32> -> vector<256x8xf32>
    %49 = arith.addf %40, %48 : vector<256x8xf32>
    %c5_36 = arith.constant 5 : index
    %c0_37 = arith.constant 0 : index
    %c0_38 = arith.constant 0 : index
    %50 = vector.load %arg2[%c5_36, %c0_37, %c0_38] : memref<8x256x1xf32, #tpu.memory_space<vmem>>, vector<1x256x1xf32>
    %51 = vector.shape_cast %50 : vector<1x256x1xf32> to vector<256x1xf32>
    %52 = vector.broadcast %51 : vector<256x1xf32> to vector<256x8xf32>
    %53 = arith.mulf %1, %52 : vector<256x8xf32>
    %c241_i32 = arith.constant 241 : i32
    %54 = tpu.dynamic_rotate %53 by %c241_i32 dim 0 : vector<256x8xf32>, i32 -> vector<256x8xf32>
    %c6 = arith.constant 6 : index
    %c0_39 = arith.constant 0 : index
    %c0_40 = arith.constant 0 : index
    %55 = vector.load %arg3[%c6, %c0_39, %c0_40] : memref<9x8x8xf32, #tpu.memory_space<vmem>>, vector<1x8x8xf32>
    %56 = vector.shape_cast %55 : vector<1x8x8xf32> to vector<8x8xf32>
    %cst_41 = arith.constant dense<0.000000e+00> : vector<256x8xf32>
    %57 = tpu.matmul %54, %56, %cst_41 {dimension_numbers = #tpu.dot_dimension_numbers<[1], [0], [0], [1], [0, 0, 1, 1], [], []>} : vector<256x8xf32>, vector<8x8xf32>, vector<256x8xf32> -> vector<256x8xf32>
    %58 = arith.addf %49, %57 : vector<256x8xf32>
    %c6_42 = arith.constant 6 : index
    %c0_43 = arith.constant 0 : index
    %c0_44 = arith.constant 0 : index
    %59 = vector.load %arg2[%c6_42, %c0_43, %c0_44] : memref<8x256x1xf32, #tpu.memory_space<vmem>>, vector<1x256x1xf32>
    %60 = vector.shape_cast %59 : vector<1x256x1xf32> to vector<256x1xf32>
    %61 = vector.broadcast %60 : vector<256x1xf32> to vector<256x8xf32>
    %62 = arith.mulf %1, %61 : vector<256x8xf32>
    %c240_i32 = arith.constant 240 : i32
    %63 = tpu.dynamic_rotate %62 by %c240_i32 dim 0 : vector<256x8xf32>, i32 -> vector<256x8xf32>
    %c7 = arith.constant 7 : index
    %c0_45 = arith.constant 0 : index
    %c0_46 = arith.constant 0 : index
    %64 = vector.load %arg3[%c7, %c0_45, %c0_46] : memref<9x8x8xf32, #tpu.memory_space<vmem>>, vector<1x8x8xf32>
    %65 = vector.shape_cast %64 : vector<1x8x8xf32> to vector<8x8xf32>
    %cst_47 = arith.constant dense<0.000000e+00> : vector<256x8xf32>
    %66 = tpu.matmul %63, %65, %cst_47 {dimension_numbers = #tpu.dot_dimension_numbers<[1], [0], [0], [1], [0, 0, 1, 1], [], []>} : vector<256x8xf32>, vector<8x8xf32>, vector<256x8xf32> -> vector<256x8xf32>
    %67 = arith.addf %58, %66 : vector<256x8xf32>
    %c7_48 = arith.constant 7 : index
    %c0_49 = arith.constant 0 : index
    %c0_50 = arith.constant 0 : index
    %68 = vector.load %arg2[%c7_48, %c0_49, %c0_50] : memref<8x256x1xf32, #tpu.memory_space<vmem>>, vector<1x256x1xf32>
    %69 = vector.shape_cast %68 : vector<1x256x1xf32> to vector<256x1xf32>
    %70 = vector.broadcast %69 : vector<256x1xf32> to vector<256x8xf32>
    %71 = arith.mulf %1, %70 : vector<256x8xf32>
    %c239_i32 = arith.constant 239 : i32
    %72 = tpu.dynamic_rotate %71 by %c239_i32 dim 0 : vector<256x8xf32>, i32 -> vector<256x8xf32>
    %c8 = arith.constant 8 : index
    %c0_51 = arith.constant 0 : index
    %c0_52 = arith.constant 0 : index
    %73 = vector.load %arg3[%c8, %c0_51, %c0_52] : memref<9x8x8xf32, #tpu.memory_space<vmem>>, vector<1x8x8xf32>
    %74 = vector.shape_cast %73 : vector<1x8x8xf32> to vector<8x8xf32>
    %cst_53 = arith.constant dense<0.000000e+00> : vector<256x8xf32>
    %75 = tpu.matmul %72, %74, %cst_53 {dimension_numbers = #tpu.dot_dimension_numbers<[1], [0], [0], [1], [0, 0, 1, 1], [], []>} : vector<256x8xf32>, vector<8x8xf32>, vector<256x8xf32> -> vector<256x8xf32>
    %76 = arith.addf %67, %75 : vector<256x8xf32>
    %c0_54 = arith.constant 0 : index
    %c0_55 = arith.constant 0 : index
    %77 = vector.load %arg5[%c0_54, %c0_55] : memref<1x8xf32, #tpu.memory_space<vmem>>, vector<1x8xf32>
    %78 = vector.broadcast %77 : vector<1x8xf32> to vector<256x8xf32>
    %79 = arith.mulf %76, %78 : vector<256x8xf32>
    %c0_56 = arith.constant 0 : index
    %c0_57 = arith.constant 0 : index
    %80 = vector.load %arg6[%c0_56, %c0_57] : memref<1x8xf32, #tpu.memory_space<vmem>>, vector<1x8xf32>
    %81 = vector.broadcast %80 : vector<1x8xf32> to vector<256x8xf32>
    %82 = arith.addf %79, %81 : vector<256x8xf32>
    %cst_58 = arith.constant 0.000000e+00 : f32
    %83 = vector.broadcast %cst_58 : f32 to vector<256x8xf32>
    %84 = arith.maximumf %82, %83 : vector<256x8xf32>
    %c0_59 = arith.constant 0 : index
    %c0_60 = arith.constant 0 : index
    %c0_61 = arith.constant 0 : index
    %85 = vector.load %arg2[%c0_59, %c0_60, %c0_61] : memref<8x256x1xf32, #tpu.memory_space<vmem>>, vector<1x256x1xf32>
    %86 = vector.shape_cast %85 : vector<1x256x1xf32> to vector<256x1xf32>
    %87 = vector.broadcast %86 : vector<256x1xf32> to vector<256x8xf32>
    %88 = arith.mulf %84, %87 : vector<256x8xf32>
    %c17_i32_62 = arith.constant 17 : i32
    %89 = tpu.dynamic_rotate %88 by %c17_i32_62 dim 0 : vector<256x8xf32>, i32 -> vector<256x8xf32>
    %c0_63 = arith.constant 0 : index
    %c0_64 = arith.constant 0 : index
    %c0_65 = arith.constant 0 : index
    %90 = vector.load %arg4[%c0_63, %c0_64, %c0_65] : memref<9x8x8xf32, #tpu.memory_space<vmem>>, vector<1x8x8xf32>
    %91 = vector.shape_cast %90 : vector<1x8x8xf32> to vector<8x8xf32>
    %cst_66 = arith.constant dense<0.000000e+00> : vector<256x8xf32>
    %92 = tpu.matmul %89, %91, %cst_66 {dimension_numbers = #tpu.dot_dimension_numbers<[1], [0], [0], [1], [0, 0, 1, 1], [], []>} : vector<256x8xf32>, vector<8x8xf32>, vector<256x8xf32> -> vector<256x8xf32>
    %c1_67 = arith.constant 1 : index
    %c0_68 = arith.constant 0 : index
    %c0_69 = arith.constant 0 : index
    %93 = vector.load %arg2[%c1_67, %c0_68, %c0_69] : memref<8x256x1xf32, #tpu.memory_space<vmem>>, vector<1x256x1xf32>
    %94 = vector.shape_cast %93 : vector<1x256x1xf32> to vector<256x1xf32>
    %95 = vector.broadcast %94 : vector<256x1xf32> to vector<256x8xf32>
    %96 = arith.mulf %84, %95 : vector<256x8xf32>
    %c16_i32_70 = arith.constant 16 : i32
    %97 = tpu.dynamic_rotate %96 by %c16_i32_70 dim 0 : vector<256x8xf32>, i32 -> vector<256x8xf32>
    %c1_71 = arith.constant 1 : index
    %c0_72 = arith.constant 0 : index
    %c0_73 = arith.constant 0 : index
    %98 = vector.load %arg4[%c1_71, %c0_72, %c0_73] : memref<9x8x8xf32, #tpu.memory_space<vmem>>, vector<1x8x8xf32>
    %99 = vector.shape_cast %98 : vector<1x8x8xf32> to vector<8x8xf32>
    %cst_74 = arith.constant dense<0.000000e+00> : vector<256x8xf32>
    %100 = tpu.matmul %97, %99, %cst_74 {dimension_numbers = #tpu.dot_dimension_numbers<[1], [0], [0], [1], [0, 0, 1, 1], [], []>} : vector<256x8xf32>, vector<8x8xf32>, vector<256x8xf32> -> vector<256x8xf32>
    %101 = arith.addf %92, %100 : vector<256x8xf32>
    %c2_75 = arith.constant 2 : index
    %c0_76 = arith.constant 0 : index
    %c0_77 = arith.constant 0 : index
    %102 = vector.load %arg2[%c2_75, %c0_76, %c0_77] : memref<8x256x1xf32, #tpu.memory_space<vmem>>, vector<1x256x1xf32>
    %103 = vector.shape_cast %102 : vector<1x256x1xf32> to vector<256x1xf32>
    %104 = vector.broadcast %103 : vector<256x1xf32> to vector<256x8xf32>
    %105 = arith.mulf %84, %104 : vector<256x8xf32>
    %c15_i32_78 = arith.constant 15 : i32
    %106 = tpu.dynamic_rotate %105 by %c15_i32_78 dim 0 : vector<256x8xf32>, i32 -> vector<256x8xf32>
    %c2_79 = arith.constant 2 : index
    %c0_80 = arith.constant 0 : index
    %c0_81 = arith.constant 0 : index
    %107 = vector.load %arg4[%c2_79, %c0_80, %c0_81] : memref<9x8x8xf32, #tpu.memory_space<vmem>>, vector<1x8x8xf32>
    %108 = vector.shape_cast %107 : vector<1x8x8xf32> to vector<8x8xf32>
    %cst_82 = arith.constant dense<0.000000e+00> : vector<256x8xf32>
    %109 = tpu.matmul %106, %108, %cst_82 {dimension_numbers = #tpu.dot_dimension_numbers<[1], [0], [0], [1], [0, 0, 1, 1], [], []>} : vector<256x8xf32>, vector<8x8xf32>, vector<256x8xf32> -> vector<256x8xf32>
    %110 = arith.addf %101, %109 : vector<256x8xf32>
    %c3_83 = arith.constant 3 : index
    %c0_84 = arith.constant 0 : index
    %c0_85 = arith.constant 0 : index
    %111 = vector.load %arg2[%c3_83, %c0_84, %c0_85] : memref<8x256x1xf32, #tpu.memory_space<vmem>>, vector<1x256x1xf32>
    %112 = vector.shape_cast %111 : vector<1x256x1xf32> to vector<256x1xf32>
    %113 = vector.broadcast %112 : vector<256x1xf32> to vector<256x8xf32>
    %114 = arith.mulf %84, %113 : vector<256x8xf32>
    %c1_i32_86 = arith.constant 1 : i32
    %115 = tpu.dynamic_rotate %114 by %c1_i32_86 dim 0 : vector<256x8xf32>, i32 -> vector<256x8xf32>
    %c3_87 = arith.constant 3 : index
    %c0_88 = arith.constant 0 : index
    %c0_89 = arith.constant 0 : index
    %116 = vector.load %arg4[%c3_87, %c0_88, %c0_89] : memref<9x8x8xf32, #tpu.memory_space<vmem>>, vector<1x8x8xf32>
    %117 = vector.shape_cast %116 : vector<1x8x8xf32> to vector<8x8xf32>
    %cst_90 = arith.constant dense<0.000000e+00> : vector<256x8xf32>
    %118 = tpu.matmul %115, %117, %cst_90 {dimension_numbers = #tpu.dot_dimension_numbers<[1], [0], [0], [1], [0, 0, 1, 1], [], []>} : vector<256x8xf32>, vector<8x8xf32>, vector<256x8xf32> -> vector<256x8xf32>
    %119 = arith.addf %110, %118 : vector<256x8xf32>
    %c4_91 = arith.constant 4 : index
    %c0_92 = arith.constant 0 : index
    %c0_93 = arith.constant 0 : index
    %120 = vector.load %arg4[%c4_91, %c0_92, %c0_93] : memref<9x8x8xf32, #tpu.memory_space<vmem>>, vector<1x8x8xf32>
    %121 = vector.shape_cast %120 : vector<1x8x8xf32> to vector<8x8xf32>
    %cst_94 = arith.constant dense<0.000000e+00> : vector<256x8xf32>
    %122 = tpu.matmul %84, %121, %cst_94 {dimension_numbers = #tpu.dot_dimension_numbers<[1], [0], [0], [1], [0, 0, 1, 1], [], []>} : vector<256x8xf32>, vector<8x8xf32>, vector<256x8xf32> -> vector<256x8xf32>
    %123 = arith.addf %119, %122 : vector<256x8xf32>
    %c4_95 = arith.constant 4 : index
    %c0_96 = arith.constant 0 : index
    %c0_97 = arith.constant 0 : index
    %124 = vector.load %arg2[%c4_95, %c0_96, %c0_97] : memref<8x256x1xf32, #tpu.memory_space<vmem>>, vector<1x256x1xf32>
    %125 = vector.shape_cast %124 : vector<1x256x1xf32> to vector<256x1xf32>
    %126 = vector.broadcast %125 : vector<256x1xf32> to vector<256x8xf32>
    %127 = arith.mulf %84, %126 : vector<256x8xf32>
    %c255_i32_98 = arith.constant 255 : i32
    %128 = tpu.dynamic_rotate %127 by %c255_i32_98 dim 0 : vector<256x8xf32>, i32 -> vector<256x8xf32>
    %c5_99 = arith.constant 5 : index
    %c0_100 = arith.constant 0 : index
    %c0_101 = arith.constant 0 : index
    %129 = vector.load %arg4[%c5_99, %c0_100, %c0_101] : memref<9x8x8xf32, #tpu.memory_space<vmem>>, vector<1x8x8xf32>
    %130 = vector.shape_cast %129 : vector<1x8x8xf32> to vector<8x8xf32>
    %cst_102 = arith.constant dense<0.000000e+00> : vector<256x8xf32>
    %131 = tpu.matmul %128, %130, %cst_102 {dimension_numbers = #tpu.dot_dimension_numbers<[1], [0], [0], [1], [0, 0, 1, 1], [], []>} : vector<256x8xf32>, vector<8x8xf32>, vector<256x8xf32> -> vector<256x8xf32>
    %132 = arith.addf %123, %131 : vector<256x8xf32>
    %c5_103 = arith.constant 5 : index
    %c0_104 = arith.constant 0 : index
    %c0_105 = arith.constant 0 : index
    %133 = vector.load %arg2[%c5_103, %c0_104, %c0_105] : memref<8x256x1xf32, #tpu.memory_space<vmem>>, vector<1x256x1xf32>
    %134 = vector.shape_cast %133 : vector<1x256x1xf32> to vector<256x1xf32>
    %135 = vector.broadcast %134 : vector<256x1xf32> to vector<256x8xf32>
    %136 = arith.mulf %84, %135 : vector<256x8xf32>
    %c241_i32_106 = arith.constant 241 : i32
    %137 = tpu.dynamic_rotate %136 by %c241_i32_106 dim 0 : vector<256x8xf32>, i32 -> vector<256x8xf32>
    %c6_107 = arith.constant 6 : index
    %c0_108 = arith.constant 0 : index
    %c0_109 = arith.constant 0 : index
    %138 = vector.load %arg4[%c6_107, %c0_108, %c0_109] : memref<9x8x8xf32, #tpu.memory_space<vmem>>, vector<1x8x8xf32>
    %139 = vector.shape_cast %138 : vector<1x8x8xf32> to vector<8x8xf32>
    %cst_110 = arith.constant dense<0.000000e+00> : vector<256x8xf32>
    %140 = tpu.matmul %137, %139, %cst_110 {dimension_numbers = #tpu.dot_dimension_numbers<[1], [0], [0], [1], [0, 0, 1, 1], [], []>} : vector<256x8xf32>, vector<8x8xf32>, vector<256x8xf32> -> vector<256x8xf32>
    %141 = arith.addf %132, %140 : vector<256x8xf32>
    %c6_111 = arith.constant 6 : index
    %c0_112 = arith.constant 0 : index
    %c0_113 = arith.constant 0 : index
    %142 = vector.load %arg2[%c6_111, %c0_112, %c0_113] : memref<8x256x1xf32, #tpu.memory_space<vmem>>, vector<1x256x1xf32>
    %143 = vector.shape_cast %142 : vector<1x256x1xf32> to vector<256x1xf32>
    %144 = vector.broadcast %143 : vector<256x1xf32> to vector<256x8xf32>
    %145 = arith.mulf %84, %144 : vector<256x8xf32>
    %c240_i32_114 = arith.constant 240 : i32
    %146 = tpu.dynamic_rotate %145 by %c240_i32_114 dim 0 : vector<256x8xf32>, i32 -> vector<256x8xf32>
    %c7_115 = arith.constant 7 : index
    %c0_116 = arith.constant 0 : index
    %c0_117 = arith.constant 0 : index
    %147 = vector.load %arg4[%c7_115, %c0_116, %c0_117] : memref<9x8x8xf32, #tpu.memory_space<vmem>>, vector<1x8x8xf32>
    %148 = vector.shape_cast %147 : vector<1x8x8xf32> to vector<8x8xf32>
    %cst_118 = arith.constant dense<0.000000e+00> : vector<256x8xf32>
    %149 = tpu.matmul %146, %148, %cst_118 {dimension_numbers = #tpu.dot_dimension_numbers<[1], [0], [0], [1], [0, 0, 1, 1], [], []>} : vector<256x8xf32>, vector<8x8xf32>, vector<256x8xf32> -> vector<256x8xf32>
    %150 = arith.addf %141, %149 : vector<256x8xf32>
    %c7_119 = arith.constant 7 : index
    %c0_120 = arith.constant 0 : index
    %c0_121 = arith.constant 0 : index
    %151 = vector.load %arg2[%c7_119, %c0_120, %c0_121] : memref<8x256x1xf32, #tpu.memory_space<vmem>>, vector<1x256x1xf32>
    %152 = vector.shape_cast %151 : vector<1x256x1xf32> to vector<256x1xf32>
    %153 = vector.broadcast %152 : vector<256x1xf32> to vector<256x8xf32>
    %154 = arith.mulf %84, %153 : vector<256x8xf32>
    %c239_i32_122 = arith.constant 239 : i32
    %155 = tpu.dynamic_rotate %154 by %c239_i32_122 dim 0 : vector<256x8xf32>, i32 -> vector<256x8xf32>
    %c8_123 = arith.constant 8 : index
    %c0_124 = arith.constant 0 : index
    %c0_125 = arith.constant 0 : index
    %156 = vector.load %arg4[%c8_123, %c0_124, %c0_125] : memref<9x8x8xf32, #tpu.memory_space<vmem>>, vector<1x8x8xf32>
    %157 = vector.shape_cast %156 : vector<1x8x8xf32> to vector<8x8xf32>
    %cst_126 = arith.constant dense<0.000000e+00> : vector<256x8xf32>
    %158 = tpu.matmul %155, %157, %cst_126 {dimension_numbers = #tpu.dot_dimension_numbers<[1], [0], [0], [1], [0, 0, 1, 1], [], []>} : vector<256x8xf32>, vector<8x8xf32>, vector<256x8xf32> -> vector<256x8xf32>
    %159 = arith.addf %150, %158 : vector<256x8xf32>
    %c0_127 = arith.constant 0 : index
    %c0_128 = arith.constant 0 : index
    %160 = vector.load %arg7[%c0_127, %c0_128] : memref<1x8xf32, #tpu.memory_space<vmem>>, vector<1x8xf32>
    %161 = vector.broadcast %160 : vector<1x8xf32> to vector<256x8xf32>
    %162 = arith.mulf %159, %161 : vector<256x8xf32>
    %c0_129 = arith.constant 0 : index
    %c0_130 = arith.constant 0 : index
    %163 = vector.load %arg8[%c0_129, %c0_130] : memref<1x8xf32, #tpu.memory_space<vmem>>, vector<1x8xf32>
    %164 = vector.broadcast %163 : vector<1x8xf32> to vector<256x8xf32>
    %165 = arith.addf %162, %164 : vector<256x8xf32>
    %166 = arith.addf %165, %1 : vector<256x8xf32>
    %cst_131 = arith.constant 0.000000e+00 : f32
    %167 = vector.broadcast %cst_131 : f32 to vector<256x8xf32>
    %168 = arith.maximumf %166, %167 : vector<256x8xf32>
    %169 = vector.shape_cast %168 : vector<256x8xf32> to vector<1x16x16x8xf32>
    %c0_132 = arith.constant 0 : index
    %c0_133 = arith.constant 0 : index
    %c0_134 = arith.constant 0 : index
    %c0_135 = arith.constant 0 : index
    %170 = vector.load %arg9[%c0_132, %c0_133, %c0_134, %c0_135] : memref<1x16x16x8xf32, #tpu.memory_space<vmem>>, vector<1x16x16x8xf32>
    tpu.vector_store %arg9[%c0_132, %c0_133, %c0_134, %c0_135], %169 {strides = array<i32>} : memref<1x16x16x8xf32, #tpu.memory_space<vmem>>, vector<1x16x16x8xf32>,
    return
  }
  func.func @transform_0(%arg0: i32) -> (i32, i32, i32, i32) {
    %c0_i32 = arith.constant 0 : i32
    %c0_i32_0 = arith.constant 0 : i32
    %c0_i32_1 = arith.constant 0 : i32
    %c0_i32_2 = arith.constant 0 : i32
    return %arg0, %c0_i32, %c0_i32_0, %c0_i32_1 : i32, i32, i32, i32
  }
  func.func @transform_1(%arg0: i32) -> (i32, i32, i32) {
    %c0_i32 = arith.constant 0 : i32
    %c0_i32_0 = arith.constant 0 : i32
    %c0_i32_1 = arith.constant 0 : i32
    %c0_i32_2 = arith.constant 0 : i32
    return %c0_i32, %c0_i32_0, %c0_i32_1 : i32, i32, i32
  }
  func.func @transform_2(%arg0: i32) -> (i32, i32, i32) {
    %c0_i32 = arith.constant 0 : i32
    %c0_i32_0 = arith.constant 0 : i32
    %c0_i32_1 = arith.constant 0 : i32
    %c0_i32_2 = arith.constant 0 : i32
    return %c0_i32, %c0_i32_0, %c0_i32_1 : i32, i32, i32
  }
  func.func @transform_3(%arg0: i32) -> (i32, i32, i32) {
    %c0_i32 = arith.constant 0 : i32
    %c0_i32_0 = arith.constant 0 : i32
    %c0_i32_1 = arith.constant 0 : i32
    %c0_i32_2 = arith.constant 0 : i32
    return %c0_i32, %c0_i32_0, %c0_i32_1 : i32, i32, i32
  }
  func.func @transform_4(%arg0: i32) -> (i32, i32) {
    %c0_i32 = arith.constant 0 : i32
    %c0_i32_0 = arith.constant 0 : i32
    %c0_i32_1 = arith.constant 0 : i32
    return %c0_i32, %c0_i32_0 : i32, i32
  }
  func.func @transform_5(%arg0: i32) -> (i32, i32) {
    %c0_i32 = arith.constant 0 : i32
    %c0_i32_0 = arith.constant 0 : i32
    %c0_i32_1 = arith.constant 0 : i32
    return %c0_i32, %c0_i32_0 : i32, i32
  }
  func.func @transform_6(%arg0: i32) -> (i32, i32) {
    %c0_i32 = arith.constant 0 : i32
    %c0_i32_0 = arith.constant 0 : i32
    %c0_i32_1 = arith.constant 0 : i32
    return %c0_i32, %c0_i32_0 : i32, i32
  }
  func.func @transform_7(%arg0: i32) -> (i32, i32) {
    %c0_i32 = arith.constant 0 : i32
    %c0_i32_0 = arith.constant 0 : i32
    %c0_i32_1 = arith.constant 0 : i32
    return %c0_i32, %c0_i32_0 : i32, i32
  }
  func.func @transform_8(%arg0: i32) -> (i32, i32, i32, i32) {
    %c0_i32 = arith.constant 0 : i32
    %c0_i32_0 = arith.constant 0 : i32
    %c0_i32_1 = arith.constant 0 : i32
    %c0_i32_2 = arith.constant 0 : i32
    return %arg0, %c0_i32, %c0_i32_0, %c0_i32_1 : i32, i32, i32, i32
  }
}

</mosaic_0001>

<llo_original>
// kernel: residual_block.1
$region0: #{residual_block.1}
  #allocation0 [shape = 'u32[]', space=smem, size = 0x4, offset = 0x4, fixed_abs, tag = 'smem constant byte address 0x4 - core index']
  #allocation1 [shape = 'u32[72,128]{1,0:T(1,128)}', space=vmem, size = 0x9000, scoped, tag = 'internal scratch']
  %s0 = inlined_call_operand.vmem [shape: f32[2,16,16,8], index: 0, kind: input, shape index: {}]
  %s1 = inlined_call_operand.hbm [shape: f32[8,256,1], index: 1, kind: input, shape index: {}]
  %s2 = inlined_call_operand.vmem [shape: f32[9,8,8], index: 2, kind: input, shape index: {}]
  %s3 = inlined_call_operand.vmem [shape: f32[9,8,8], index: 3, kind: input, shape index: {}]
  %s4 = inlined_call_operand.vmem [shape: f32[1,8], index: 4, kind: input, shape index: {}]
  %s5 = inlined_call_operand.vmem [shape: f32[1,8], index: 5, kind: input, shape index: {}]
  %s6 = inlined_call_operand.vmem [shape: f32[1,8], index: 6, kind: input, shape index: {}]
  %s7 = inlined_call_operand.vmem [shape: f32[1,8], index: 7, kind: input, shape index: {}]
  %s8 = inlined_call_operand.vmem [shape: f32[2,16,16,8], index: 8, kind: output, shape index: {}]
  %s9 = sld [smem:[#allocation0]]
  $region69: #{residual_block.1} parent=0
    _
  %s11 = ssub.s32 1, %s9
  %s12 = scalar_select 0, %s11, %s9
  $region1: #{residual_block.1} parent=0
    #allocation2 [shape = 'u8[1048576]{0}', space=vmem, size = 0x100000, scoped, tag = 'input window, operand 1, single buffered']
    #allocation3 [shape = 's32[2]{0}', space=sflag, size = 0x8, scoped, tag = 'scoped memory for residual_block.1']
    %13 = vsyncpa [#allocation3], 0
    loop: start=0, step=1, limit=4
    $region2: #{residual_block.1} parent=1 // loop_pre_header
      _
    $region3: #{residual_block.1} parent=1 // loop_header
      %s15 = sphi 0, %s19
      %p16 = scmp.ge.s32.totalorder %s15, 4
      %s25 = sphi 0, %s27
      %s28 = sphi 0, %s25
      %s29 = sphi 0, %s28
      %s45 = sphi 0, %s29
      %s49 = sphi 0, %s49
      %s51 = sphi 0, %s49
      %s52 = sphi 0, %s51
      %s66 = sphi 0, %s52
      %s70 = sphi 0, %s70
      %s72 = sphi 0, %s70
      %s73 = sphi 0, %s72
      %s87 = sphi 0, %s73
      %s91 = sphi 0, %s91
      %s93 = sphi 0, %s91
      %s94 = sphi 0, %s93
      %s108 = sphi 0, %s94
      %s112 = sphi 0, %s112
      %s114 = sphi 0, %s112
      %s115 = sphi 0, %s114
      %s129 = sphi 0, %s115
      %s133 = sphi 0, %s133
      %s135 = sphi 0, %s133
      %s136 = sphi 0, %s135
      %s150 = sphi 0, %s136
      %s154 = sphi 0, %s154
      %s156 = sphi 0, %s154
      %s157 = sphi 0, %s156
      %s171 = sphi 0, %s157
      %s175 = sphi 0, %s175
      %s177 = sphi 0, %s175
      %s178 = sphi 0, %s177
      %s192 = sphi 0, %s178
      %s198 = sphi 0, %s200
      %s201 = sphi 0, %s198
      %s202 = sphi 0, %s201
      %s218 = sphi 0, %s202
    $region4: #{residual_block.1} parent=1 // loop_header_branch
      %18 = sbr.rel (%p16) target = $region8
    $region5: #{residual_block.1} parent=1 // loop_body
      %s20 = ssub.s32 %s15, 1
      %s21 = ssub.s32 %s15, 2
      %s22 = sadd.s32 %s15, 1
      %s23 = ssub.s32 %s15, %s22
      %p24 = scmp.eq.s32.totalorder %s23, 0
      %s26 = sadd.s32 %s25, 1
      %s27 = scalar_select %p24, %s25, %s26
      %p30 = pneg %p24
      %p31 = scmp.eq.s32.totalorder %s15, 1
      %p32 = por %p30, %p31
      %p33 = scmp.ne.s32.totalorder %s25, %s28
      %p34 = scmp.eq.s32.totalorder %s15, 0
      %p35 = por %p33, %p34
      %p36 = scmp.ne.s32.totalorder %s25, %s28
      %p37 = scmp.eq.s32.totalorder %s20, 1
      %p38 = por %p36, %p37
      %p39 = scmp.ne.s32.totalorder %s28, %s29
      %p40 = scmp.eq.s32.totalorder %s20, 0
      %p41 = por %p39, %p40
      %p42 = scmp.ne.s32.totalorder %s28, %s29
      %p43 = scmp.eq.s32.totalorder %s21, 1
      %p44 = por %p42, %p43
      %p46 = scmp.ne.s32.totalorder %s29, %s45
      %p47 = scmp.eq.s32.totalorder %s21, 0
      %p48 = por %p46, %p47
      %s50 = sadd.s32 %s49, 1
      %p53 = scmp.eq.s32.totalorder %s15, 1
      %p54 = scmp.ne.s32.totalorder %s49, %s51
      %p55 = scmp.eq.s32.totalorder %s15, 0
      %p56 = por %p54, %p55
      %p57 = scmp.ne.s32.totalorder %s49, %s51
      %p58 = scmp.eq.s32.totalorder %s20, 1
      %p59 = por %p57, %p58
      %p60 = scmp.ne.s32.totalorder %s51, %s52
      %p61 = scmp.eq.s32.totalorder %s20, 0
      %p62 = por %p60, %p61
      %p63 = scmp.ne.s32.totalorder %s51, %s52
      %p64 = scmp.eq.s32.totalorder %s21, 1
      %p65 = por %p63, %p64
      %p67 = scmp.ne.s32.totalorder %s52, %s66
      %p68 = scmp.eq.s32.totalorder %s21, 0
      %p69 = por %p67, %p68
      %s71 = sadd.s32 %s70, 1
      %p74 = scmp.eq.s32.totalorder %s15, 1
      %p75 = scmp.ne.s32.totalorder %s70, %s72
      %p76 = scmp.eq.s32.totalorder %s15, 0
      %p77 = por %p75, %p76
      %p78 = scmp.ne.s32.totalorder %s70, %s72
      %p79 = scmp.eq.s32.totalorder %s20, 1
      %p80 = por %p78, %p79
      %p81 = scmp.ne.s32.totalorder %s72, %s73
      %p82 = scmp.eq.s32.totalorder %s20, 0
      %p83 = por %p81, %p82
      %p84 = scmp.ne.s32.totalorder %s72, %s73
      %p85 = scmp.eq.s32.totalorder %s21, 1
      %p86 = por %p84, %p85
      %p88 = scmp.ne.s32.totalorder %s73, %s87
      %p89 = scmp.eq.s32.totalorder %s21, 0
      %p90 = por %p88, %p89
      %s92 = sadd.s32 %s91, 1
      %p95 = scmp.eq.s32.totalorder %s15, 1
      %p96 = scmp.ne.s32.totalorder %s91, %s93
      %p97 = scmp.eq.s32.totalorder %s15, 0
      %p98 = por %p96, %p97
      %p99 = scmp.ne.s32.totalorder %s91, %s93
      %p100 = scmp.eq.s32.totalorder %s20, 1
      %p101 = por %p99, %p100
      %p102 = scmp.ne.s32.totalorder %s93, %s94
      %p103 = scmp.eq.s32.totalorder %s20, 0
      %p104 = por %p102, %p103
      %p105 = scmp.ne.s32.totalorder %s93, %s94
      %p106 = scmp.eq.s32.totalorder %s21, 1
      %p107 = por %p105, %p106
      %p109 = scmp.ne.s32.totalorder %s94, %s108
      %p110 = scmp.eq.s32.totalorder %s21, 0
      %p111 = por %p109, %p110
      %s113 = sadd.s32 %s112, 1
      %p116 = scmp.eq.s32.totalorder %s15, 1
      %p117 = scmp.ne.s32.totalorder %s112, %s114
      %p118 = scmp.eq.s32.totalorder %s15, 0
      %p119 = por %p117, %p118
      %p120 = scmp.ne.s32.totalorder %s112, %s114
      %p121 = scmp.eq.s32.totalorder %s20, 1
      %p122 = por %p120, %p121
      %p123 = scmp.ne.s32.totalorder %s114, %s115
      %p124 = scmp.eq.s32.totalorder %s20, 0
      %p125 = por %p123, %p124
      %p126 = scmp.ne.s32.totalorder %s114, %s115
      %p127 = scmp.eq.s32.totalorder %s21, 1
      %p128 = por %p126, %p127
      %p130 = scmp.ne.s32.totalorder %s115, %s129
      %p131 = scmp.eq.s32.totalorder %s21, 0
      %p132 = por %p130, %p131
      %s134 = sadd.s32 %s133, 1
      %p137 = scmp.eq.s32.totalorder %s15, 1
      %p138 = scmp.ne.s32.totalorder %s133, %s135
      %p139 = scmp.eq.s32.totalorder %s15, 0
      %p140 = por %p138, %p139
      %p141 = scmp.ne.s32.totalorder %s133, %s135
      %p142 = scmp.eq.s32.totalorder %s20, 1
      %p143 = por %p141, %p142
      %p144 = scmp.ne.s32.totalorder %s135, %s136
      %p145 = scmp.eq.s32.totalorder %s20, 0
      %p146 = por %p144, %p145
      %p147 = scmp.ne.s32.totalorder %s135, %s136
      %p148 = scmp.eq.s32.totalorder %s21, 1
      %p149 = por %p147, %p148
      %p151 = scmp.ne.s32.totalorder %s136, %s150
      %p152 = scmp.eq.s32.totalorder %s21, 0
      %p153 = por %p151, %p152
      %s155 = sadd.s32 %s154, 1
      %p158 = scmp.eq.s32.totalorder %s15, 1
      %p159 = scmp.ne.s32.totalorder %s154, %s156
      %p160 = scmp.eq.s32.totalorder %s15, 0
      %p161 = por %p159, %p160
      %p162 = scmp.ne.s32.totalorder %s154, %s156
      %p163 = scmp.eq.s32.totalorder %s20, 1
      %p164 = por %p162, %p163
      %p165 = scmp.ne.s32.totalorder %s156, %s157
      %p166 = scmp.eq.s32.totalorder %s20, 0
      %p167 = por %p165, %p166
      %p168 = scmp.ne.s32.totalorder %s156, %s157
      %p169 = scmp.eq.s32.totalorder %s21, 1
      %p170 = por %p168, %p169
      %p172 = scmp.ne.s32.totalorder %s157, %s171
      %p173 = scmp.eq.s32.totalorder %s21, 0
      %p174 = por %p172, %p173
      %s176 = sadd.s32 %s175, 1
      %p179 = scmp.eq.s32.totalorder %s15, 1
      %p180 = scmp.ne.s32.totalorder %s175, %s177
      %p181 = scmp.eq.s32.totalorder %s15, 0
      %p182 = por %p180, %p181
      %p183 = scmp.ne.s32.totalorder %s175, %s177
      %p184 = scmp.eq.s32.totalorder %s20, 1
      %p185 = por %p183, %p184
      %p186 = scmp.ne.s32.totalorder %s177, %s178
      %p187 = scmp.eq.s32.totalorder %s20, 0
      %p188 = por %p186, %p187
      %p189 = scmp.ne.s32.totalorder %s177, %s178
      %p190 = scmp.eq.s32.totalorder %s21, 1
      %p191 = por %p189, %p190
      %p193 = scmp.ne.s32.totalorder %s178, %s192
      %p194 = scmp.eq.s32.totalorder %s21, 0
      %p195 = por %p193, %p194
      %s196 = ssub.s32 %s15, %s22
      %p197 = scmp.eq.s32.totalorder %s196, 0
      %s199 = sadd.s32 %s198, 1
      %s200 = scalar_select %p197, %s198, %s199
      %p203 = pneg %p197
      %p204 = scmp.eq.s32.totalorder %s15, 1
      %p205 = por %p203, %p204
      %p206 = scmp.ne.s32.totalorder %s198, %s201
      %p207 = scmp.eq.s32.totalorder %s15, 0
      %p208 = por %p206, %p207
      %p209 = scmp.ne.s32.totalorder %s198, %s201
      %p210 = scmp.eq.s32.totalorder %s20, 1
      %p211 = por %p209, %p210
      %p212 = scmp.ne.s32.totalorder %s201, %s202
      %p213 = scmp.eq.s32.totalorder %s20, 0
      %p214 = por %p212, %p213
      %p215 = scmp.ne.s32.totalorder %s201, %s202
      %p216 = scmp.eq.s32.totalorder %s21, 1
      %p217 = por %p215, %p216
      %p219 = scmp.ne.s32.totalorder %s202, %s218
      %p220 = scmp.eq.s32.totalorder %s21, 0
      %p221 = por %p219, %p220
      %p222 = scmp.le.s32.totalorder 1, %s15
      %p223 = scmp.lt.s32.totalorder %s15, 3
      %p224 = pnand %p222, %p223
      %p225 = pneg %p224
      // Predicated region
      $region9: #{residual_block.1} parent=5 // pred_check
        _
      $region10: #{residual_block.1} parent=5 // pred_check_branch
        %227 = sbr.rel (%p224) target = $region12
      $region11: #{residual_block.1} parent=5 // pred_region
        %s228 = ssub.s32 %s15, 1
        // Predicated region
        $region13: #{residual_block.1} parent=11 // pred_check
          %p229 = pneg %p62
        $region14: #{residual_block.1} parent=11 // pred_check_branch
          %231 = sbr.rel (%p229) target = $region16
        $region15: #{residual_block.1} parent=11 // pred_region
          %233 = vsyncadd [#allocation3], 0
          %s234 = sshll.u32 %s1, 4
          %s235 = int_to_ptr.hbm [resolvable:$true] %s234
          %s236 = sshll.u32 [#allocation2], 4
          %s237 = int_to_ptr.vmem [resolvable:$true] %s236
          %242 = dma.hbm_to_vmem [thread:$0]  %s235, 32768, %s237, [#allocation3], 128, 128, 8
        $region16: #{residual_block.1} parent=11 // pred_fallthru
          _
        // Predicated region
        $region17: #{residual_block.1} parent=11 // pred_check
          %p243 = pneg %p83
        $region18: #{residual_block.1} parent=11 // pred_check_branch
          %245 = sbr.rel (%p243) target = $region20
        $region19: #{residual_block.1} parent=11 // pred_region
          _
        $region20: #{residual_block.1} parent=11 // pred_fallthru
          _
        // Predicated region
        $region21: #{residual_block.1} parent=11 // pred_check
          %p246 = pneg %p104
        $region22: #{residual_block.1} parent=11 // pred_check_branch
          %248 = sbr.rel (%p246) target = $region24
        $region23: #{residual_block.1} parent=11 // pred_region
          _
        $region24: #{residual_block.1} parent=11 // pred_fallthru
          _
        // Predicated region
        $region25: #{residual_block.1} parent=11 // pred_check
          %p249 = pneg %p125
        $region26: #{residual_block.1} parent=11 // pred_check_branch
          %251 = sbr.rel (%p249) target = $region28
        $region27: #{residual_block.1} parent=11 // pred_region
          _
        $region28: #{residual_block.1} parent=11 // pred_fallthru
          _
        // Predicated region
        $region29: #{residual_block.1} parent=11 // pred_check
          %p252 = pneg %p146
        $region30: #{residual_block.1} parent=11 // pred_check_branch
          %254 = sbr.rel (%p252) target = $region32
        $region31: #{residual_block.1} parent=11 // pred_region
          _
        $region32: #{residual_block.1} parent=11 // pred_fallthru
          _
        // Predicated region
        $region33: #{residual_block.1} parent=11 // pred_check
          %p255 = pneg %p167
        $region34: #{residual_block.1} parent=11 // pred_check_branch
          %257 = sbr.rel (%p255) target = $region36
        $region35: #{residual_block.1} parent=11 // pred_region
          _
        $region36: #{residual_block.1} parent=11 // pred_fallthru
          _
        // Predicated region
        $region37: #{residual_block.1} parent=11 // pred_check
          %p258 = pneg %p188
        $region38: #{residual_block.1} parent=11 // pred_check_branch
          %260 = sbr.rel (%p258) target = $region40
        $region39: #{residual_block.1} parent=11 // pred_region
          _
        $region40: #{residual_block.1} parent=11 // pred_fallthru
          _
      $region12: #{residual_block.1} parent=5 // pred_fallthru
        _
      %p261 = scmp.lt.s32.totalorder %s15, 2
      // Predicated region
      $region41: #{residual_block.1} parent=5 // pred_check
        %p262 = pneg %p261
      $region42: #{residual_block.1} parent=5 // pred_check_branch
        %264 = sbr.rel (%p262) target = $region44
      $region43: #{residual_block.1} parent=5 // pred_region
        // Predicated region
        $region45: #{residual_block.1} parent=43 // pred_check
          %p265 = pneg %p35
        $region46: #{residual_block.1} parent=43 // pred_check_branch
          %267 = sbr.rel (%p265) target = $region48
        $region47: #{residual_block.1} parent=43 // pred_region
          %p268 = scmp.lt.s32.totalorder %s15, 1
          %s269 = scalar_select %p268, %s15, 1
          %s270 = smul.addr %s269, 32
          %s271 = smul.addr %s270, 8
          %s272 = scalar_lea.vmem %s0, %s271
        $region48: #{residual_block.1} parent=43 // pred_fallthru
          _
      $region44: #{residual_block.1} parent=5 // pred_fallthru
        _
      %p273 = scmp.le.s32.totalorder 1, %s15
      %p274 = scmp.lt.s32.totalorder %s15, 3
      %p275 = pnand %p273, %p274
      %p276 = pneg %p275
      // Predicated region
      $region49: #{residual_block.1} parent=5 // pred_check
        _
      $region50: #{residual_block.1} parent=5 // pred_check_branch
        %278 = sbr.rel (%p275) target = $region52
      $region51: #{residual_block.1} parent=5 // pred_region
        %s279 = ssub.s32 %s15, 1
        // Predicated region
        $region53: #{residual_block.1} parent=51 // pred_check
          %p280 = pneg %p62
        $region54: #{residual_block.1} parent=51 // pred_check_branch
          %282 = sbr.rel (%p280) target = $region56
        $region55: #{residual_block.1} parent=51 // pred_region
          %284 = dma.done [#allocation3], 32768
        $region56: #{residual_block.1} parent=51 // pred_fallthru
          _
        %p285 = scmp.lt.s32.totalorder %s20, 1
        %s286 = scalar_select %p285, %s20, 1
        %s287 = smul.addr %s286, 32
        %s288 = smul.addr %s287, 8
        %s289 = scalar_lea.vmem %s0, %s288
        %p290 = pneg %p41
        %p291 = pneg %p38
        %p292 = pneg %p62
        %p293 = pneg %p59
        %p294 = pneg %p83
        %p295 = pneg %p80
        %p296 = pneg %p104
        %p297 = pneg %p101
        %p298 = pneg %p125
        %p299 = pneg %p122
        %p300 = pneg %p146
        %p301 = pneg %p143
        %p302 = pneg %p167
        %p303 = pneg %p164
        %p304 = pneg %p188
        %p305 = pneg %p185
        %p306 = pneg %p214
        %p307 = pneg %p211
        %p308 = scmp.lt.s32.totalorder %s20, 1
        %s309 = scalar_select %p308, %s20, 1
        %s310 = smul.addr %s309, 32
        %s311 = smul.addr %s310, 8
        %s312 = scalar_lea.vmem %s8, %s311
        %p313 = scmp.lt.s32.totalorder %s20, 1
        %s314 = scalar_select %p313, %s20, 1
        %s315 = smul.addr %s314, 32
        %s316 = smul.addr %s315, 8
        %s317 = scalar_lea.vmem %s0, %s316
        %p318 = scmp.lt.s32.totalorder %s20, 1
        %s319 = scalar_select %p318, %s20, 1
        %s320 = smul.addr %s319, 32
        %s321 = smul.addr %s320, 8
        %s322 = scalar_lea.vmem %s8, %s321
        %v323 = vld [vmem:[%s317] sm:$0xff]
        %v324 = vld [vmem:[%s317 + $0x8] sm:$0xff]
        %v325 = vld [vmem:[%s317 + $0x10] sm:$0xff]
        %v326 = vld [vmem:[%s317 + $0x18] sm:$0xff]
        %v327 = vld [vmem:[%s317 + $0x20] sm:$0xff]
        %v328 = vld [vmem:[%s317 + $0x28] sm:$0xff]
        %v329 = vld [vmem:[%s317 + $0x30] sm:$0xff]
        %v330 = vld [vmem:[%s317 + $0x38] sm:$0xff]
        %v331 = vld [vmem:[%s317 + $0x40] sm:$0xff]
        %v332 = vld [vmem:[%s317 + $0x48] sm:$0xff]
        %v333 = vld [vmem:[%s317 + $0x50] sm:$0xff]
        %v334 = vld [vmem:[%s317 + $0x58] sm:$0xff]
        %v335 = vld [vmem:[%s317 + $0x60] sm:$0xff]
        %v336 = vld [vmem:[%s317 + $0x68] sm:$0xff]
        %v337 = vld [vmem:[%s317 + $0x70] sm:$0xff]
        %v338 = vld [vmem:[%s317 + $0x78] sm:$0xff]
        %v339 = vld [vmem:[%s317 + $0x80] sm:$0xff]
        %v340 = vld [vmem:[%s317 + $0x88] sm:$0xff]
        %v341 = vld [vmem:[%s317 + $0x90] sm:$0xff]
        %v342 = vld [vmem:[%s317 + $0x98] sm:$0xff]
        %v343 = vld [vmem:[%s317 + $0xa0] sm:$0xff]
        %v344 = vld [vmem:[%s317 + $0xa8] sm:$0xff]
        %v345 = vld [vmem:[%s317 + $0xb0] sm:$0xff]
        %v346 = vld [vmem:[%s317 + $0xb8] sm:$0xff]
        %v347 = vld [vmem:[%s317 + $0xc0] sm:$0xff]
        %v348 = vld [vmem:[%s317 + $0xc8] sm:$0xff]
        %v349 = vld [vmem:[%s317 + $0xd0] sm:$0xff]
        %v350 = vld [vmem:[%s317 + $0xd8] sm:$0xff]
        %v351 = vld [vmem:[%s317 + $0xe0] sm:$0xff]
        %v352 = vld [vmem:[%s317 + $0xe8] sm:$0xff]
        %v353 = vld [vmem:[%s317 + $0xf0] sm:$0xff]
        %v354 = vld [vmem:[%s317 + $0xf8] sm:$0xff]
        %v355 = vld [vmem:[#allocation2] sm:$0xff]
        %v356 = vld [vmem:[#allocation2 + $0x8] sm:$0xff]
        %v357 = vld [vmem:[#allocation2 + $0x10] sm:$0xff]
        %v358 = vld [vmem:[#allocation2 + $0x18] sm:$0xff]
        %v359 = vld [vmem:[#allocation2 + $0x20] sm:$0xff]
        %v360 = vld [vmem:[#allocation2 + $0x28] sm:$0xff]
        %v361 = vld [vmem:[#allocation2 + $0x30] sm:$0xff]
        %v362 = vld [vmem:[#allocation2 + $0x38] sm:$0xff]
        %v363 = vld [vmem:[#allocation2 + $0x40] sm:$0xff]
        %v364 = vld [vmem:[#allocation2 + $0x48] sm:$0xff]
        %v365 = vld [vmem:[#allocation2 + $0x50] sm:$0xff]
        %v366 = vld [vmem:[#allocation2 + $0x58] sm:$0xff]
        %v367 = vld [vmem:[#allocation2 + $0x60] sm:$0xff]
        %v368 = vld [vmem:[#allocation2 + $0x68] sm:$0xff]
        %v369 = vld [vmem:[#allocation2 + $0x70] sm:$0xff]
        %v370 = vld [vmem:[#allocation2 + $0x78] sm:$0xff]
        %v371 = vld [vmem:[#allocation2 + $0x80] sm:$0xff]
        %v372 = vld [vmem:[#allocation2 + $0x88] sm:$0xff]
        %v373 = vld [vmem:[#allocation2 + $0x90] sm:$0xff]
        %v374 = vld [vmem:[#allocation2 + $0x98] sm:$0xff]
        %v375 = vld [vmem:[#allocation2 + $0xa0] sm:$0xff]
        %v376 = vld [vmem:[#allocation2 + $0xa8] sm:$0xff]
        %v377 = vld [vmem:[#allocation2 + $0xb0] sm:$0xff]
        %v378 = vld [vmem:[#allocation2 + $0xb8] sm:$0xff]
        %v379 = vld [vmem:[#allocation2 + $0xc0] sm:$0xff]
        %v380 = vld [vmem:[#allocation2 + $0xc8] sm:$0xff]
        %v381 = vld [vmem:[#allocation2 + $0xd0] sm:$0xff]
        %v382 = vld [vmem:[#allocation2 + $0xd8] sm:$0xff]
        %v383 = vld [vmem:[#allocation2 + $0xe0] sm:$0xff]
        %v384 = vld [vmem:[#allocation2 + $0xe8] sm:$0xff]
        %v385 = vld [vmem:[#allocation2 + $0xf0] sm:$0xff]
        %v386 = vld [vmem:[#allocation2 + $0xf8] sm:$0xff]
        %388 = vset.pattern.permute.xlu0 0
        %389 = vperm.xlu0 %388, %v355
        %v390 = vpop.permute.xlu0 %389
        %393 = vset.pattern.permute.xlu0 0
        %394 = vperm.xlu0 %393, %v356
        %v395 = vpop.permute.xlu0 %394
        %398 = vset.pattern.permute.xlu0 0
        %399 = vperm.xlu0 %398, %v357
        %v400 = vpop.permute.xlu0 %399
        %403 = vset.pattern.permute.xlu0 0
        %404 = vperm.xlu0 %403, %v358
        %v405 = vpop.permute.xlu0 %404
        %408 = vset.pattern.permute.xlu0 0
        %409 = vperm.xlu0 %408, %v359
        %v410 = vpop.permute.xlu0 %409
        %413 = vset.pattern.permute.xlu0 0
        %414 = vperm.xlu0 %413, %v360
        %v415 = vpop.permute.xlu0 %414
        %418 = vset.pattern.permute.xlu0 0
        %419 = vperm.xlu0 %418, %v361
        %v420 = vpop.permute.xlu0 %419
        %423 = vset.pattern.permute.xlu0 0
        %424 = vperm.xlu0 %423, %v362
        %v425 = vpop.permute.xlu0 %424
        %428 = vset.pattern.permute.xlu0 0
        %429 = vperm.xlu0 %428, %v363
        %v430 = vpop.permute.xlu0 %429
        %433 = vset.pattern.permute.xlu0 0
        %434 = vperm.xlu0 %433, %v364
        %v435 = vpop.permute.xlu0 %434
        %438 = vset.pattern.permute.xlu0 0
        %439 = vperm.xlu0 %438, %v365
        %v440 = vpop.permute.xlu0 %439
        %443 = vset.pattern.permute.xlu0 0
        %444 = vperm.xlu0 %443, %v366
        %v445 = vpop.permute.xlu0 %444
        %448 = vset.pattern.permute.xlu0 0
        %449 = vperm.xlu0 %448, %v367
        %v450 = vpop.permute.xlu0 %449
        %453 = vset.pattern.permute.xlu0 0
        %454 = vperm.xlu0 %453, %v368
        %v455 = vpop.permute.xlu0 %454
        %458 = vset.pattern.permute.xlu0 0
        %459 = vperm.xlu0 %458, %v369
        %v460 = vpop.permute.xlu0 %459
        %463 = vset.pattern.permute.xlu0 0
        %464 = vperm.xlu0 %463, %v370
        %v465 = vpop.permute.xlu0 %464
        %468 = vset.pattern.permute.xlu0 0
        %469 = vperm.xlu0 %468, %v371
        %v470 = vpop.permute.xlu0 %469
        %473 = vset.pattern.permute.xlu0 0
        %474 = vperm.xlu0 %473, %v372
        %v475 = vpop.permute.xlu0 %474
        %478 = vset.pattern.permute.xlu0 0
        %479 = vperm.xlu0 %478, %v373
        %v480 = vpop.permute.xlu0 %479
        %483 = vset.pattern.permute.xlu0 0
        %484 = vperm.xlu0 %483, %v374
        %v485 = vpop.permute.xlu0 %484
        %488 = vset.pattern.permute.xlu0 0
        %489 = vperm.xlu0 %488, %v375
        %v490 = vpop.permute.xlu0 %489
        %493 = vset.pattern.permute.xlu0 0
        %494 = vperm.xlu0 %493, %v376
        %v495 = vpop.permute.xlu0 %494
        %498 = vset.pattern.permute.xlu0 0
        %499 = vperm.xlu0 %498, %v377
        %v500 = vpop.permute.xlu0 %499
        %503 = vset.pattern.permute.xlu0 0
        %504 = vperm.xlu0 %503, %v378
        %v505 = vpop.permute.xlu0 %504
        %508 = vset.pattern.permute.xlu0 0
        %509 = vperm.xlu0 %508, %v379
        %v510 = vpop.permute.xlu0 %509
        %513 = vset.pattern.permute.xlu0 0
        %514 = vperm.xlu0 %513, %v380
        %v515 = vpop.permute.xlu0 %514
        %518 = vset.pattern.permute.xlu0 0
        %519 = vperm.xlu0 %518, %v381
        %v520 = vpop.permute.xlu0 %519
        %523 = vset.pattern.permute.xlu0 0
        %524 = vperm.xlu0 %523, %v382
        %v525 = vpop.permute.xlu0 %524
        %528 = vset.pattern.permute.xlu0 0
        %529 = vperm.xlu0 %528, %v383
        %v530 = vpop.permute.xlu0 %529
        %533 = vset.pattern.permute.xlu0 0
        %534 = vperm.xlu0 %533, %v384
        %v535 = vpop.permute.xlu0 %534
        %538 = vset.pattern.permute.xlu0 0
        %539 = vperm.xlu0 %538, %v385
        %v540 = vpop.permute.xlu0 %539
        %543 = vset.pattern.permute.xlu0 0
        %544 = vperm.xlu0 %543, %v386
        %v545 = vpop.permute.xlu0 %544
        %v547 = vmul.f32 %v323, %v390
        %v548 = vmul.f32 %v324, %v395
        %v549 = vmul.f32 %v325, %v400
        %v550 = vmul.f32 %v326, %v405
        %v551 = vmul.f32 %v327, %v410
        %v552 = vmul.f32 %v328, %v415
        %v553 = vmul.f32 %v329, %v420
        %v554 = vmul.f32 %v330, %v425
        %v555 = vmul.f32 %v331, %v430
        %v556 = vmul.f32 %v332, %v435
        %v557 = vmul.f32 %v333, %v440
        %v558 = vmul.f32 %v334, %v445
        %v559 = vmul.f32 %v335, %v450
        %v560 = vmul.f32 %v336, %v455
        %v561 = vmul.f32 %v337, %v460
        %v562 = vmul.f32 %v338, %v465
        %v563 = vmul.f32 %v339, %v470
        %v564 = vmul.f32 %v340, %v475
        %v565 = vmul.f32 %v341, %v480
        %v566 = vmul.f32 %v342, %v485
        %v567 = vmul.f32 %v343, %v490
        %v568 = vmul.f32 %v344, %v495
        %v569 = vmul.f32 %v345, %v500
        %v570 = vmul.f32 %v346, %v505
        %v571 = vmul.f32 %v347, %v510
        %v572 = vmul.f32 %v348, %v515
        %v573 = vmul.f32 %v349, %v520
        %v574 = vmul.f32 %v350, %v525
        %v575 = vmul.f32 %v351, %v530
        %v576 = vmul.f32 %v352, %v535
        %v577 = vmul.f32 %v353, %v540
        %v578 = vmul.f32 %v354, %v545
        %v579 = vrot.slane %v547, 7
        %v580 = vrot.slane %v548, 7
        %v581 = vrot.slane %v549, 7
        %v582 = vrot.slane %v550, 7
        %v583 = vrot.slane %v551, 7
        %v584 = vrot.slane %v552, 7
        %v585 = vrot.slane %v553, 7
        %v586 = vrot.slane %v554, 7
        %v587 = vrot.slane %v555, 7
        %v588 = vrot.slane %v556, 7
        %v589 = vrot.slane %v557, 7
        %v590 = vrot.slane %v558, 7
        %v591 = vrot.slane %v559, 7
        %v592 = vrot.slane %v560, 7
        %v593 = vrot.slane %v561, 7
        %v594 = vrot.slane %v562, 7
        %v595 = vrot.slane %v563, 7
        %v596 = vrot.slane %v564, 7
        %v597 = vrot.slane %v565, 7
        %v598 = vrot.slane %v566, 7
        %v599 = vrot.slane %v567, 7
        %v600 = vrot.slane %v568, 7
        %v601 = vrot.slane %v569, 7
        %v602 = vrot.slane %v570, 7
        %v603 = vrot.slane %v571, 7
        %v604 = vrot.slane %v572, 7
        %v605 = vrot.slane %v573, 7
        %v606 = vrot.slane %v574, 7
        %v607 = vrot.slane %v575, 7
        %v608 = vrot.slane %v576, 7
        %v609 = vrot.slane %v577, 7
        %v610 = vrot.slane %v578, 7
        %v611 = vlaneseq
        %v612 = vshrl.u32 %v611, 7
        %vm613 = vcmp.lt.s32.totalorder %v612, 1
        %v614 = vsel %vm613, %v609, %v610
        %v615 = vsel %vm613, %v608, %v609
        %v616 = vsel %vm613, %v607, %v608
        %v617 = vsel %vm613, %v606, %v607
        %v618 = vsel %vm613, %v605, %v606
        %v619 = vsel %vm613, %v604, %v605
        %v620 = vsel %vm613, %v603, %v604
        %v621 = vsel %vm613, %v602, %v603
        %v622 = vsel %vm613, %v601, %v602
        %v623 = vsel %vm613, %v600, %v601
        %v624 = vsel %vm613, %v599, %v600
        %v625 = vsel %vm613, %v598, %v599
        %v626 = vsel %vm613, %v597, %v598
        %v627 = vsel %vm613, %v596, %v597
        %v628 = vsel %vm613, %v595, %v596
        %v629 = vsel %vm613, %v594, %v595
        %v630 = vsel %vm613, %v593, %v594
        %v631 = vsel %vm613, %v592, %v593
        %v632 = vsel %vm613, %v591, %v592
        %v633 = vsel %vm613, %v590, %v591
        %v634 = vsel %vm613, %v589, %v590
        %v635 = vsel %vm613, %v588, %v589
        %v636 = vsel %vm613, %v587, %v588
        %v637 = vsel %vm613, %v586, %v587
        %v638 = vsel %vm613, %v585, %v586
        %v639 = vsel %vm613, %v584, %v585
        %v640 = vsel %vm613, %v583, %v584
        %v641 = vsel %vm613, %v582, %v583
        %v642 = vsel %vm613, %v581, %v582
        %v643 = vsel %vm613, %v580, %v581
        %v644 = vsel %vm613, %v579, %v580
        %v645 = vsel %vm613, %v610, %v579
        %v646 = vld [vmem:[%s2] sm:$0xff]
        %s647 = scalar_lea.vmem [#allocation2], 256
        %v648 = vld [vmem:[%s647] sm:$0xff]
        %v649 = vld [vmem:[%s647 + $0x8] sm:$0xff]
        %v650 = vld [vmem:[%s647 + $0x10] sm:$0xff]
        %v651 = vld [vmem:[%s647 + $0x18] sm:$0xff]
        %v652 = vld [vmem:[%s647 + $0x20] sm:$0xff]
        %v653 = vld [vmem:[%s647 + $0x28] sm:$0xff]
        %v654 = vld [vmem:[%s647 + $0x30] sm:$0xff]
        %v655 = vld [vmem:[%s647 + $0x38] sm:$0xff]
        %v656 = vld [vmem:[%s647 + $0x40] sm:$0xff]
        %v657 = vld [vmem:[%s647 + $0x48] sm:$0xff]
        %v658 = vld [vmem:[%s647 + $0x50] sm:$0xff]
        %v659 = vld [vmem:[%s647 + $0x58] sm:$0xff]
        %v660 = vld [vmem:[%s647 + $0x60] sm:$0xff]
        %v661 = vld [vmem:[%s647 + $0x68] sm:$0xff]
        %v662 = vld [vmem:[%s647 + $0x70] sm:$0xff]
        %v663 = vld [vmem:[%s647 + $0x78] sm:$0xff]
        %v664 = vld [vmem:[%s647 + $0x80] sm:$0xff]
        %v665 = vld [vmem:[%s647 + $0x88] sm:$0xff]
        %v666 = vld [vmem:[%s647 + $0x90] sm:$0xff]
        %v667 = vld [vmem:[%s647 + $0x98] sm:$0xff]
        %v668 = vld [vmem:[%s647 + $0xa0] sm:$0xff]
        %v669 = vld [vmem:[%s647 + $0xa8] sm:$0xff]
        %v670 = vld [vmem:[%s647 + $0xb0] sm:$0xff]
        %v671 = vld [vmem:[%s647 + $0xb8] sm:$0xff]
        %v672 = vld [vmem:[%s647 + $0xc0] sm:$0xff]
        %v673 = vld [vmem:[%s647 + $0xc8] sm:$0xff]
        %v674 = vld [vmem:[%s647 + $0xd0] sm:$0xff]
        %v675 = vld [vmem:[%s647 + $0xd8] sm:$0xff]
        %v676 = vld [vmem:[%s647 + $0xe0] sm:$0xff]
        %v677 = vld [vmem:[%s647 + $0xe8] sm:$0xff]
        %v678 = vld [vmem:[%s647 + $0xf0] sm:$0xff]
        %v679 = vld [vmem:[%s647 + $0xf8] sm:$0xff]
        %681 = vset.pattern.permute.xlu0 0
        %682 = vperm.xlu0 %681, %v648
        %v683 = vpop.permute.xlu0 %682
        %686 = vset.pattern.permute.xlu0 0
        %687 = vperm.xlu0 %686, %v649
        %v688 = vpop.permute.xlu0 %687
        %691 = vset.pattern.permute.xlu0 0
        %692 = vperm.xlu0 %691, %v650
        %v693 = vpop.permute.xlu0 %692
        %696 = vset.pattern.permute.xlu0 0
        %697 = vperm.xlu0 %696, %v651
        %v698 = vpop.permute.xlu0 %697
        %701 = vset.pattern.permute.xlu0 0
        %702 = vperm.xlu0 %701, %v652
        %v703 = vpop.permute.xlu0 %702
        %706 = vset.pattern.permute.xlu0 0
        %707 = vperm.xlu0 %706, %v653
        %v708 = vpop.permute.xlu0 %707
        %711 = vset.pattern.permute.xlu0 0
        %712 = vperm.xlu0 %711, %v654
        %v713 = vpop.permute.xlu0 %712
        %716 = vset.pattern.permute.xlu0 0
        %717 = vperm.xlu0 %716, %v655
        %v718 = vpop.permute.xlu0 %717
        %721 = vset.pattern.permute.xlu0 0
        %722 = vperm.xlu0 %721, %v656
        %v723 = vpop.permute.xlu0 %722
        %726 = vset.pattern.permute.xlu0 0
        %727 = vperm.xlu0 %726, %v657
        %v728 = vpop.permute.xlu0 %727
        %731 = vset.pattern.permute.xlu0 0
        %732 = vperm.xlu0 %731, %v658
        %v733 = vpop.permute.xlu0 %732
        %736 = vset.pattern.permute.xlu0 0
        %737 = vperm.xlu0 %736, %v659
        %v738 = vpop.permute.xlu0 %737
        %741 = vset.pattern.permute.xlu0 0
        %742 = vperm.xlu0 %741, %v660
        %v743 = vpop.permute.xlu0 %742
        %746 = vset.pattern.permute.xlu0 0
        %747 = vperm.xlu0 %746, %v661
        %v748 = vpop.permute.xlu0 %747
        %751 = vset.pattern.permute.xlu0 0
        %752 = vperm.xlu0 %751, %v662
        %v753 = vpop.permute.xlu0 %752
        %756 = vset.pattern.permute.xlu0 0
        %757 = vperm.xlu0 %756, %v663
        %v758 = vpop.permute.xlu0 %757
        %761 = vset.pattern.permute.xlu0 0
        %762 = vperm.xlu0 %761, %v664
        %v763 = vpop.permute.xlu0 %762
        %766 = vset.pattern.permute.xlu0 0
        %767 = vperm.xlu0 %766, %v665
        %v768 = vpop.permute.xlu0 %767
        %771 = vset.pattern.permute.xlu0 0
        %772 = vperm.xlu0 %771, %v666
        %v773 = vpop.permute.xlu0 %772
        %776 = vset.pattern.permute.xlu0 0
        %777 = vperm.xlu0 %776, %v667
        %v778 = vpop.permute.xlu0 %777
        %781 = vset.pattern.permute.xlu0 0
        %782 = vperm.xlu0 %781, %v668
        %v783 = vpop.permute.xlu0 %782
        %786 = vset.pattern.permute.xlu0 0
        %787 = vperm.xlu0 %786, %v669
        %v788 = vpop.permute.xlu0 %787
        %791 = vset.pattern.permute.xlu0 0
        %792 = vperm.xlu0 %791, %v670
        %v793 = vpop.permute.xlu0 %792
        %796 = vset.pattern.permute.xlu0 0
        %797 = vperm.xlu0 %796, %v671
        %v798 = vpop.permute.xlu0 %797
        %801 = vset.pattern.permute.xlu0 0
        %802 = vperm.xlu0 %801, %v672
        %v803 = vpop.permute.xlu0 %802
        %806 = vset.pattern.permute.xlu0 0
        %807 = vperm.xlu0 %806, %v673
        %v808 = vpop.permute.xlu0 %807
        %811 = vset.pattern.permute.xlu0 0
        %812 = vperm.xlu0 %811, %v674
        %v813 = vpop.permute.xlu0 %812
        %816 = vset.pattern.permute.xlu0 0
        %817 = vperm.xlu0 %816, %v675
        %v818 = vpop.permute.xlu0 %817
        %821 = vset.pattern.permute.xlu0 0
        %822 = vperm.xlu0 %821, %v676
        %v823 = vpop.permute.xlu0 %822
        %826 = vset.pattern.permute.xlu0 0
        %827 = vperm.xlu0 %826, %v677
        %v828 = vpop.permute.xlu0 %827
        %831 = vset.pattern.permute.xlu0 0
        %832 = vperm.xlu0 %831, %v678
        %v833 = vpop.permute.xlu0 %832
        %836 = vset.pattern.permute.xlu0 0
        %837 = vperm.xlu0 %836, %v679
        %v838 = vpop.permute.xlu0 %837
        %v840 = vmul.f32 %v323, %v683
        %v841 = vmul.f32 %v324, %v688
        %v842 = vmul.f32 %v325, %v693
        %v843 = vmul.f32 %v326, %v698
        %v844 = vmul.f32 %v327, %v703
        %v845 = vmul.f32 %v328, %v708
        %v846 = vmul.f32 %v329, %v713
        %v847 = vmul.f32 %v330, %v718
        %v848 = vmul.f32 %v331, %v723
        %v849 = vmul.f32 %v332, %v728
        %v850 = vmul.f32 %v333, %v733
        %v851 = vmul.f32 %v334, %v738
        %v852 = vmul.f32 %v335, %v743
        %v853 = vmul.f32 %v336, %v748
        %v854 = vmul.f32 %v337, %v753
        %v855 = vmul.f32 %v338, %v758
        %v856 = vmul.f32 %v339, %v763
        %v857 = vmul.f32 %v340, %v768
        %v858 = vmul.f32 %v341, %v773
        %v859 = vmul.f32 %v342, %v778
        %v860 = vmul.f32 %v343, %v783
        %v861 = vmul.f32 %v344, %v788
        %v862 = vmul.f32 %v345, %v793
        %v863 = vmul.f32 %v346, %v798
        %v864 = vmul.f32 %v347, %v803
        %v865 = vmul.f32 %v348, %v808
        %v866 = vmul.f32 %v349, %v813
        %v867 = vmul.f32 %v350, %v818
        %v868 = vmul.f32 %v351, %v823
        %v869 = vmul.f32 %v352, %v828
        %v870 = vmul.f32 %v353, %v833
        %v871 = vmul.f32 %v354, %v838
        %s872 = scalar_lea.vmem %s2, 8
        %v873 = vld [vmem:[%s872] sm:$0xff]
        %vm874 = vcmask 64512
        %v876 = vsel %vm874, %v870, 0
        %v879 = vsel %vm874, %v871, 0
        %v882 = vsel %vm874, %v840, 0
        %v885 = vsel %vm874, %v841, 0
        %v888 = vsel %vm874, %v842, 0
        %v891 = vsel %vm874, %v843, 0
        %v894 = vsel %vm874, %v844, 0
        %v897 = vsel %vm874, %v845, 0
        %v900 = vsel %vm874, %v846, 0
        %v903 = vsel %vm874, %v847, 0
        %v906 = vsel %vm874, %v848, 0
        %v909 = vsel %vm874, %v849, 0
        %v912 = vsel %vm874, %v850, 0
        %v915 = vsel %vm874, %v851, 0
        %v918 = vsel %vm874, %v852, 0
        %v921 = vsel %vm874, %v853, 0
        %v924 = vsel %vm874, %v854, 0
        %v927 = vsel %vm874, %v855, 0
        %v930 = vsel %vm874, %v856, 0
        %v933 = vsel %vm874, %v857, 0
        %v936 = vsel %vm874, %v858, 0
        %v939 = vsel %vm874, %v859, 0
        %v942 = vsel %vm874, %v860, 0
        %v945 = vsel %vm874, %v861, 0
        %v948 = vsel %vm874, %v862, 0
        %v951 = vsel %vm874, %v863, 0
        %v954 = vsel %vm874, %v864, 0
        %v957 = vsel %vm874, %v865, 0
        %v960 = vsel %vm874, %v866, 0
        %v963 = vsel %vm874, %v867, 0
        %v966 = vsel %vm874, %v868, 0
        %v969 = vsel %vm874, %v869, 0
        %971 = vmatpush.msra.mxu0 0.0
        %972 = vmatpush.msra.mxu0 0.0
        %973 = vmatpush.msra.mxu0 0.0
        %974 = vmatpush.msra.mxu0 0.0
        %975 = vmatpush.msra.mxu0 0.0
        %976 = vmatpush.msra.mxu0 0.0
        %977 = vmatpush.msra.mxu0 0.0
        %978 = vmatpush.msra.mxu0 0.0
        %979 = vmatpush.msra.mxu0 0.0
        %980 = vmatpush.msra.mxu0 0.0
        %981 = vmatpush.msra.mxu0 0.0
        %982 = vmatpush.msra.mxu0 0.0
        %983 = vmatpush.msra.mxu0 0.0
        %984 = vmatpush.msra.mxu0 0.0
        %985 = vmatpush.msra.mxu0 0.0
        %986 = vmatpush.msra.mxu0 %v873
        %987 = vmatmul.f32.gmra.mxu0 %v876
        %v988 = vpop.f32.mrf.mxu0
        %v989 = vadd.f32 0.0, %v988
        %990 = vmatmul.f32.gmra.mxu0 %v879
        %v991 = vpop.f32.mrf.mxu0
        %v992 = vadd.f32 0.0, %v991
        %993 = vmatmul.f32.gmra.mxu0 %v882
        %v994 = vpop.f32.mrf.mxu0
        %v995 = vadd.f32 0.0, %v994
        %996 = vmatmul.f32.gmra.mxu0 %v885
        %v997 = vpop.f32.mrf.mxu0
        %v998 = vadd.f32 0.0, %v997
        %999 = vmatmul.f32.gmra.mxu0 %v888
        %v1000 = vpop.f32.mrf.mxu0
        %v1001 = vadd.f32 0.0, %v1000
        %1002 = vmatmul.f32.gmra.mxu0 %v891
        %v1003 = vpop.f32.mrf.mxu0
        %v1004 = vadd.f32 0.0, %v1003
        %1005 = vmatmul.f32.gmra.mxu0 %v894
        %v1006 = vpop.f32.mrf.mxu0
        %v1007 = vadd.f32 0.0, %v1006
        %1008 = vmatmul.f32.gmra.mxu0 %v897
        %v1009 = vpop.f32.mrf.mxu0
        %v1010 = vadd.f32 0.0, %v1009
        %1011 = vmatmul.f32.gmra.mxu0 %v900
        %v1012 = vpop.f32.mrf.mxu0
        %v1013 = vadd.f32 0.0, %v1012
        %1014 = vmatmul.f32.gmra.mxu0 %v903
        %v1015 = vpop.f32.mrf.mxu0
        %v1016 = vadd.f32 0.0, %v1015
        %1017 = vmatmul.f32.gmra.mxu0 %v906
        %v1018 = vpop.f32.mrf.mxu0
        %v1019 = vadd.f32 0.0, %v1018
        %1020 = vmatmul.f32.gmra.mxu0 %v909
        %v1021 = vpop.f32.mrf.mxu0
        %v1022 = vadd.f32 0.0, %v1021
        %1023 = vmatmul.f32.gmra.mxu0 %v912
        %v1024 = vpop.f32.mrf.mxu0
        %v1025 = vadd.f32 0.0, %v1024
        %1026 = vmatmul.f32.gmra.mxu0 %v915
        %v1027 = vpop.f32.mrf.mxu0
        %v1028 = vadd.f32 0.0, %v1027
        %1029 = vmatmul.f32.gmra.mxu0 %v918
        %v1030 = vpop.f32.mrf.mxu0
        %v1031 = vadd.f32 0.0, %v1030
        %1032 = vmatmul.f32.gmra.mxu0 %v921
        %v1033 = vpop.f32.mrf.mxu0
        %v1034 = vadd.f32 0.0, %v1033
        %1035 = vmatmul.f32.gmra.mxu0 %v924
        %v1036 = vpop.f32.mrf.mxu0
        %v1037 = vadd.f32 0.0, %v1036
        %1038 = vmatmul.f32.gmra.mxu0 %v927
        %v1039 = vpop.f32.mrf.mxu0
        %v1040 = vadd.f32 0.0, %v1039
        %1041 = vmatmul.f32.gmra.mxu0 %v930
        %v1042 = vpop.f32.mrf.mxu0
        %v1043 = vadd.f32 0.0, %v1042
        %1044 = vmatmul.f32.gmra.mxu0 %v933
        %v1045 = vpop.f32.mrf.mxu0
        %v1046 = vadd.f32 0.0, %v1045
        %1047 = vmatmul.f32.gmra.mxu0 %v936
        %v1048 = vpop.f32.mrf.mxu0
        %v1049 = vadd.f32 0.0, %v1048
        %1050 = vmatmul.f32.gmra.mxu0 %v939
        %v1051 = vpop.f32.mrf.mxu0
        %v1052 = vadd.f32 0.0, %v1051
        %1053 = vmatmul.f32.gmra.mxu0 %v942
        %v1054 = vpop.f32.mrf.mxu0
        %v1055 = vadd.f32 0.0, %v1054
        %1056 = vmatmul.f32.gmra.mxu0 %v945
        %v1057 = vpop.f32.mrf.mxu0
        %v1058 = vadd.f32 0.0, %v1057
        %1059 = vmatmul.f32.gmra.mxu0 %v948
        %v1060 = vpop.f32.mrf.mxu0
        %v1061 = vadd.f32 0.0, %v1060
        %1062 = vmatmul.f32.gmra.mxu0 %v951
        %v1063 = vpop.f32.mrf.mxu0
        %v1064 = vadd.f32 0.0, %v1063
        %1065 = vmatmul.f32.gmra.mxu0 %v954
        %v1066 = vpop.f32.mrf.mxu0
        %v1067 = vadd.f32 0.0, %v1066
        %1068 = vmatmul.f32.gmra.mxu0 %v957
        %v1069 = vpop.f32.mrf.mxu0
        %v1070 = vadd.f32 0.0, %v1069
        %1071 = vmatmul.f32.gmra.mxu0 %v960
        %v1072 = vpop.f32.mrf.mxu0
        %v1073 = vadd.f32 0.0, %v1072
        %1074 = vmatmul.f32.gmra.mxu0 %v963
        %v1075 = vpop.f32.mrf.mxu0
        %v1076 = vadd.f32 0.0, %v1075
        %1077 = vmatmul.f32.gmra.mxu0 %v966
        %v1078 = vpop.f32.mrf.mxu0
        %v1079 = vadd.f32 0.0, %v1078
        %1080 = vmatmul.f32.gmra.mxu0 %v969
        %v1081 = vpop.f32.mrf.mxu0
        %v1082 = vadd.f32 0.0, %v1081
        %1083 = vdwg.mxu0
        %v1085 = vsel %vm874, %v615, 0
        %v1088 = vsel %vm874, %v614, 0
        %v1091 = vsel %vm874, %v645, 0
        %v1094 = vsel %vm874, %v644, 0
        %v1097 = vsel %vm874, %v643, 0
        %v1100 = vsel %vm874, %v642, 0
        %v1103 = vsel %vm874, %v641, 0
        %v1106 = vsel %vm874, %v640, 0
        %v1109 = vsel %vm874, %v639, 0
        %v1112 = vsel %vm874, %v638, 0
        %v1115 = vsel %vm874, %v637, 0
        %v1118 = vsel %vm874, %v636, 0
        %v1121 = vsel %vm874, %v635, 0
        %v1124 = vsel %vm874, %v634, 0
        %v1127 = vsel %vm874, %v633, 0
        %v1130 = vsel %vm874, %v632, 0
        %v1133 = vsel %vm874, %v631, 0
        %v1136 = vsel %vm874, %v630, 0
        %v1139 = vsel %vm874, %v629, 0
        %v1142 = vsel %vm874, %v628, 0
        %v1145 = vsel %vm874, %v627, 0
        %v1148 = vsel %vm874, %v626, 0
        %v1151 = vsel %vm874, %v625, 0
        %v1154 = vsel %vm874, %v624, 0
        %v1157 = vsel %vm874, %v623, 0
        %v1160 = vsel %vm874, %v622, 0
        %v1163 = vsel %vm874, %v621, 0
        %v1166 = vsel %vm874, %v620, 0
        %v1169 = vsel %vm874, %v619, 0
        %v1172 = vsel %vm874, %v618, 0
        %v1175 = vsel %vm874, %v617, 0
        %v1178 = vsel %vm874, %v616, 0
        %1180 = vmatpush.msra.mxu0 0.0
        %1181 = vmatpush.msra.mxu0 0.0
        %1182 = vmatpush.msra.mxu0 0.0
        %1183 = vmatpush.msra.mxu0 0.0
        %1184 = vmatpush.msra.mxu0 0.0
        %1185 = vmatpush.msra.mxu0 0.0
        %1186 = vmatpush.msra.mxu0 0.0
        %1187 = vmatpush.msra.mxu0 0.0
        %1188 = vmatpush.msra.mxu0 0.0
        %1189 = vmatpush.msra.mxu0 0.0
        %1190 = vmatpush.msra.mxu0 0.0
        %1191 = vmatpush.msra.mxu0 0.0
        %1192 = vmatpush.msra.mxu0 0.0
        %1193 = vmatpush.msra.mxu0 0.0
        %1194 = vmatpush.msra.mxu0 0.0
        %1195 = vmatpush.msra.mxu0 %v646
        %1196 = vmatmul.f32.gmra.mxu0 %v1085
        %v1197 = vpop.f32.mrf.mxu0
        %v1198 = vadd.f32 %v989, %v1197
        %1199 = vmatmul.f32.gmra.mxu0 %v1088
        %v1200 = vpop.f32.mrf.mxu0
        %v1201 = vadd.f32 %v992, %v1200
        %1202 = vmatmul.f32.gmra.mxu0 %v1091
        %v1203 = vpop.f32.mrf.mxu0
        %v1204 = vadd.f32 %v995, %v1203
        %1205 = vmatmul.f32.gmra.mxu0 %v1094
        %v1206 = vpop.f32.mrf.mxu0
        %v1207 = vadd.f32 %v998, %v1206
        %1208 = vmatmul.f32.gmra.mxu0 %v1097
        %v1209 = vpop.f32.mrf.mxu0
        %v1210 = vadd.f32 %v1001, %v1209
        %1211 = vmatmul.f32.gmra.mxu0 %v1100
        %v1212 = vpop.f32.mrf.mxu0
        %v1213 = vadd.f32 %v1004, %v1212
        %1214 = vmatmul.f32.gmra.mxu0 %v1103
        %v1215 = vpop.f32.mrf.mxu0
        %v1216 = vadd.f32 %v1007, %v1215
        %1217 = vmatmul.f32.gmra.mxu0 %v1106
        %v1218 = vpop.f32.mrf.mxu0
        %v1219 = vadd.f32 %v1010, %v1218
        %1220 = vmatmul.f32.gmra.mxu0 %v1109
        %v1221 = vpop.f32.mrf.mxu0
        %v1222 = vadd.f32 %v1013, %v1221
        %1223 = vmatmul.f32.gmra.mxu0 %v1112
        %v1224 = vpop.f32.mrf.mxu0
        %v1225 = vadd.f32 %v1016, %v1224
        %1226 = vmatmul.f32.gmra.mxu0 %v1115
        %v1227 = vpop.f32.mrf.mxu0
        %v1228 = vadd.f32 %v1019, %v1227
        %1229 = vmatmul.f32.gmra.mxu0 %v1118
        %v1230 = vpop.f32.mrf.mxu0
        %v1231 = vadd.f32 %v1022, %v1230
        %1232 = vmatmul.f32.gmra.mxu0 %v1121
        %v1233 = vpop.f32.mrf.mxu0
        %v1234 = vadd.f32 %v1025, %v1233
        %1235 = vmatmul.f32.gmra.mxu0 %v1124
        %v1236 = vpop.f32.mrf.mxu0
        %v1237 = vadd.f32 %v1028, %v1236
        %1238 = vmatmul.f32.gmra.mxu0 %v1127
        %v1239 = vpop.f32.mrf.mxu0
        %v1240 = vadd.f32 %v1031, %v1239
        %1241 = vmatmul.f32.gmra.mxu0 %v1130
        %v1242 = vpop.f32.mrf.mxu0
        %v1243 = vadd.f32 %v1034, %v1242
        %1244 = vmatmul.f32.gmra.mxu0 %v1133
        %v1245 = vpop.f32.mrf.mxu0
        %v1246 = vadd.f32 %v1037, %v1245
        %1247 = vmatmul.f32.gmra.mxu0 %v1136
        %v1248 = vpop.f32.mrf.mxu0
        %v1249 = vadd.f32 %v1040, %v1248
        %1250 = vmatmul.f32.gmra.mxu0 %v1139
        %v1251 = vpop.f32.mrf.mxu0
        %v1252 = vadd.f32 %v1043, %v1251
        %1253 = vmatmul.f32.gmra.mxu0 %v1142
        %v1254 = vpop.f32.mrf.mxu0
        %v1255 = vadd.f32 %v1046, %v1254
        %1256 = vmatmul.f32.gmra.mxu0 %v1145
        %v1257 = vpop.f32.mrf.mxu0
        %v1258 = vadd.f32 %v1049, %v1257
        %1259 = vmatmul.f32.gmra.mxu0 %v1148
        %v1260 = vpop.f32.mrf.mxu0
        %v1261 = vadd.f32 %v1052, %v1260
        %1262 = vmatmul.f32.gmra.mxu0 %v1151
        %v1263 = vpop.f32.mrf.mxu0
        %v1264 = vadd.f32 %v1055, %v1263
        %1265 = vmatmul.f32.gmra.mxu0 %v1154
        %v1266 = vpop.f32.mrf.mxu0
        %v1267 = vadd.f32 %v1058, %v1266
        %1268 = vmatmul.f32.gmra.mxu0 %v1157
        %v1269 = vpop.f32.mrf.mxu0
        %v1270 = vadd.f32 %v1061, %v1269
        %1271 = vmatmul.f32.gmra.mxu0 %v1160
        %v1272 = vpop.f32.mrf.mxu0
        %v1273 = vadd.f32 %v1064, %v1272
        %1274 = vmatmul.f32.gmra.mxu0 %v1163
        %v1275 = vpop.f32.mrf.mxu0
        %v1276 = vadd.f32 %v1067, %v1275
        %1277 = vmatmul.f32.gmra.mxu0 %v1166
        %v1278 = vpop.f32.mrf.mxu0
        %v1279 = vadd.f32 %v1070, %v1278
        %1280 = vmatmul.f32.gmra.mxu0 %v1169
        %v1281 = vpop.f32.mrf.mxu0
        %v1282 = vadd.f32 %v1073, %v1281
        %1283 = vmatmul.f32.gmra.mxu0 %v1172
        %v1284 = vpop.f32.mrf.mxu0
        %v1285 = vadd.f32 %v1076, %v1284
        %1286 = vmatmul.f32.gmra.mxu0 %v1175
        %v1287 = vpop.f32.mrf.mxu0
        %v1288 = vadd.f32 %v1079, %v1287
        %1289 = vmatmul.f32.gmra.mxu0 %v1178
        %v1290 = vpop.f32.mrf.mxu0
        %v1291 = vadd.f32 %v1082, %v1290
        %1292 = vdwg.mxu0
        %s1293 = scalar_lea.vmem [#allocation2], 512
        %v1294 = vld [vmem:[%s1293] sm:$0xff]
        %v1295 = vld [vmem:[%s1293 + $0x8] sm:$0xff]
        %v1296 = vld [vmem:[%s1293 + $0x10] sm:$0xff]
        %v1297 = vld [vmem:[%s1293 + $0x18] sm:$0xff]
        %v1298 = vld [vmem:[%s1293 + $0x20] sm:$0xff]
        %v1299 = vld [vmem:[%s1293 + $0x28] sm:$0xff]
        %v1300 = vld [vmem:[%s1293 + $0x30] sm:$0xff]
        %v1301 = vld [vmem:[%s1293 + $0x38] sm:$0xff]
        %v1302 = vld [vmem:[%s1293 + $0x40] sm:$0xff]
        %v1303 = vld [vmem:[%s1293 + $0x48] sm:$0xff]
        %v1304 = vld [vmem:[%s1293 + $0x50] sm:$0xff]
        %v1305 = vld [vmem:[%s1293 + $0x58] sm:$0xff]
        %v1306 = vld [vmem:[%s1293 + $0x60] sm:$0xff]
        %v1307 = vld [vmem:[%s1293 + $0x68] sm:$0xff]
        %v1308 = vld [vmem:[%s1293 + $0x70] sm:$0xff]
        %v1309 = vld [vmem:[%s1293 + $0x78] sm:$0xff]
        %v1310 = vld [vmem:[%s1293 + $0x80] sm:$0xff]
        %v1311 = vld [vmem:[%s1293 + $0x88] sm:$0xff]
        %v1312 = vld [vmem:[%s1293 + $0x90] sm:$0xff]
        %v1313 = vld [vmem:[%s1293 + $0x98] sm:$0xff]
        %v1314 = vld [vmem:[%s1293 + $0xa0] sm:$0xff]
        %v1315 = vld [vmem:[%s1293 + $0xa8] sm:$0xff]
        %v1316 = vld [vmem:[%s1293 + $0xb0] sm:$0xff]
        %v1317 = vld [vmem:[%s1293 + $0xb8] sm:$0xff]
        %v1318 = vld [vmem:[%s1293 + $0xc0] sm:$0xff]
        %v1319 = vld [vmem:[%s1293 + $0xc8] sm:$0xff]
        %v1320 = vld [vmem:[%s1293 + $0xd0] sm:$0xff]
        %v1321 = vld [vmem:[%s1293 + $0xd8] sm:$0xff]
        %v1322 = vld [vmem:[%s1293 + $0xe0] sm:$0xff]
        %v1323 = vld [vmem:[%s1293 + $0xe8] sm:$0xff]
        %v1324 = vld [vmem:[%s1293 + $0xf0] sm:$0xff]
        %v1325 = vld [vmem:[%s1293 + $0xf8] sm:$0xff]
        %1327 = vset.pattern.permute.xlu0 0
        %1328 = vperm.xlu0 %1327, %v1294
        %v1329 = vpop.permute.xlu0 %1328
        %1332 = vset.pattern.permute.xlu0 0
        %1333 = vperm.xlu0 %1332, %v1295
        %v1334 = vpop.permute.xlu0 %1333
        %1337 = vset.pattern.permute.xlu0 0
        %1338 = vperm.xlu0 %1337, %v1296
        %v1339 = vpop.permute.xlu0 %1338
        %1342 = vset.pattern.permute.xlu0 0
        %1343 = vperm.xlu0 %1342, %v1297
        %v1344 = vpop.permute.xlu0 %1343
        %1347 = vset.pattern.permute.xlu0 0
        %1348 = vperm.xlu0 %1347, %v1298
        %v1349 = vpop.permute.xlu0 %1348
        %1352 = vset.pattern.permute.xlu0 0
        %1353 = vperm.xlu0 %1352, %v1299
        %v1354 = vpop.permute.xlu0 %1353
        %1357 = vset.pattern.permute.xlu0 0
        %1358 = vperm.xlu0 %1357, %v1300
        %v1359 = vpop.permute.xlu0 %1358
        %1362 = vset.pattern.permute.xlu0 0
        %1363 = vperm.xlu0 %1362, %v1301
        %v1364 = vpop.permute.xlu0 %1363
        %1367 = vset.pattern.permute.xlu0 0
        %1368 = vperm.xlu0 %1367, %v1302
        %v1369 = vpop.permute.xlu0 %1368
        %1372 = vset.pattern.permute.xlu0 0
        %1373 = vperm.xlu0 %1372, %v1303
        %v1374 = vpop.permute.xlu0 %1373
        %1377 = vset.pattern.permute.xlu0 0
        %1378 = vperm.xlu0 %1377, %v1304
        %v1379 = vpop.permute.xlu0 %1378
        %1382 = vset.pattern.permute.xlu0 0
        %1383 = vperm.xlu0 %1382, %v1305
        %v1384 = vpop.permute.xlu0 %1383
        %1387 = vset.pattern.permute.xlu0 0
        %1388 = vperm.xlu0 %1387, %v1306
        %v1389 = vpop.permute.xlu0 %1388
        %1392 = vset.pattern.permute.xlu0 0
        %1393 = vperm.xlu0 %1392, %v1307
        %v1394 = vpop.permute.xlu0 %1393
        %1397 = vset.pattern.permute.xlu0 0
        %1398 = vperm.xlu0 %1397, %v1308
        %v1399 = vpop.permute.xlu0 %1398
        %1402 = vset.pattern.permute.xlu0 0
        %1403 = vperm.xlu0 %1402, %v1309
        %v1404 = vpop.permute.xlu0 %1403
        %1407 = vset.pattern.permute.xlu0 0
        %1408 = vperm.xlu0 %1407, %v1310
        %v1409 = vpop.permute.xlu0 %1408
        %1412 = vset.pattern.permute.xlu0 0
        %1413 = vperm.xlu0 %1412, %v1311
        %v1414 = vpop.permute.xlu0 %1413
        %1417 = vset.pattern.permute.xlu0 0
        %1418 = vperm.xlu0 %1417, %v1312
        %v1419 = vpop.permute.xlu0 %1418
        %1422 = vset.pattern.permute.xlu0 0
        %1423 = vperm.xlu0 %1422, %v1313
        %v1424 = vpop.permute.xlu0 %1423
        %1427 = vset.pattern.permute.xlu0 0
        %1428 = vperm.xlu0 %1427, %v1314
        %v1429 = vpop.permute.xlu0 %1428
        %1432 = vset.pattern.permute.xlu0 0
        %1433 = vperm.xlu0 %1432, %v1315
        %v1434 = vpop.permute.xlu0 %1433
        %1437 = vset.pattern.permute.xlu0 0
        %1438 = vperm.xlu0 %1437, %v1316
        %v1439 = vpop.permute.xlu0 %1438
        %1442 = vset.pattern.permute.xlu0 0
        %1443 = vperm.xlu0 %1442, %v1317
        %v1444 = vpop.permute.xlu0 %1443
        %1447 = vset.pattern.permute.xlu0 0
        %1448 = vperm.xlu0 %1447, %v1318
        %v1449 = vpop.permute.xlu0 %1448
        %1452 = vset.pattern.permute.xlu0 0
        %1453 = vperm.xlu0 %1452, %v1319
        %v1454 = vpop.permute.xlu0 %1453
        %1457 = vset.pattern.permute.xlu0 0
        %1458 = vperm.xlu0 %1457, %v1320
        %v1459 = vpop.permute.xlu0 %1458
        %1462 = vset.pattern.permute.xlu0 0
        %1463 = vperm.xlu0 %1462, %v1321
        %v1464 = vpop.permute.xlu0 %1463
        %1467 = vset.pattern.permute.xlu0 0
        %1468 = vperm.xlu0 %1467, %v1322
        %v1469 = vpop.permute.xlu0 %1468
        %1472 = vset.pattern.permute.xlu0 0
        %1473 = vperm.xlu0 %1472, %v1323
        %v1474 = vpop.permute.xlu0 %1473
        %1477 = vset.pattern.permute.xlu0 0
        %1478 = vperm.xlu0 %1477, %v1324
        %v1479 = vpop.permute.xlu0 %1478
        %1482 = vset.pattern.permute.xlu0 0
        %1483 = vperm.xlu0 %1482, %v1325
        %v1484 = vpop.permute.xlu0 %1483
        %v1486 = vmul.f32 %v323, %v1329
        %v1487 = vmul.f32 %v324, %v1334
        %v1488 = vmul.f32 %v325, %v1339
        %v1489 = vmul.f32 %v326, %v1344
        %v1490 = vmul.f32 %v327, %v1349
        %v1491 = vmul.f32 %v328, %v1354
        %v1492 = vmul.f32 %v329, %v1359
        %v1493 = vmul.f32 %v330, %v1364
        %v1494 = vmul.f32 %v331, %v1369
        %v1495 = vmul.f32 %v332, %v1374
        %v1496 = vmul.f32 %v333, %v1379
        %v1497 = vmul.f32 %v334, %v1384
        %v1498 = vmul.f32 %v335, %v1389
        %v1499 = vmul.f32 %v336, %v1394
        %v1500 = vmul.f32 %v337, %v1399
        %v1501 = vmul.f32 %v338, %v1404
        %v1502 = vmul.f32 %v339, %v1409
        %v1503 = vmul.f32 %v340, %v1414
        %v1504 = vmul.f32 %v341, %v1419
        %v1505 = vmul.f32 %v342, %v1424
        %v1506 = vmul.f32 %v343, %v1429
        %v1507 = vmul.f32 %v344, %v1434
        %v1508 = vmul.f32 %v345, %v1439
        %v1509 = vmul.f32 %v346, %v1444
        %v1510 = vmul.f32 %v347, %v1449
        %v1511 = vmul.f32 %v348, %v1454
        %v1512 = vmul.f32 %v349, %v1459
        %v1513 = vmul.f32 %v350, %v1464
        %v1514 = vmul.f32 %v351, %v1469
        %v1515 = vmul.f32 %v352, %v1474
        %v1516 = vmul.f32 %v353, %v1479
        %v1517 = vmul.f32 %v354, %v1484
        %v1518 = vrot.slane %v1486, 1
        %v1519 = vrot.slane %v1487, 1
        %v1520 = vrot.slane %v1488, 1
        %v1521 = vrot.slane %v1489, 1
        %v1522 = vrot.slane %v1490, 1
        %v1523 = vrot.slane %v1491, 1
        %v1524 = vrot.slane %v1492, 1
        %v1525 = vrot.slane %v1493, 1
        %v1526 = vrot.slane %v1494, 1
        %v1527 = vrot.slane %v1495, 1
        %v1528 = vrot.slane %v1496, 1
        %v1529 = vrot.slane %v1497, 1
        %v1530 = vrot.slane %v1498, 1
        %v1531 = vrot.slane %v1499, 1
        %v1532 = vrot.slane %v1500, 1
        %v1533 = vrot.slane %v1501, 1
        %v1534 = vrot.slane %v1502, 1
        %v1535 = vrot.slane %v1503, 1
        %v1536 = vrot.slane %v1504, 1
        %v1537 = vrot.slane %v1505, 1
        %v1538 = vrot.slane %v1506, 1
        %v1539 = vrot.slane %v1507, 1
        %v1540 = vrot.slane %v1508, 1
        %v1541 = vrot.slane %v1509, 1
        %v1542 = vrot.slane %v1510, 1
        %v1543 = vrot.slane %v1511, 1
        %v1544 = vrot.slane %v1512, 1
        %v1545 = vrot.slane %v1513, 1
        %v1546 = vrot.slane %v1514, 1
        %v1547 = vrot.slane %v1515, 1
        %v1548 = vrot.slane %v1516, 1
        %v1549 = vrot.slane %v1517, 1
        %vm1550 = vcmp.lt.s32.totalorder %v612, 7
        %v1551 = vsel %vm1550, %v1548, %v1549
        %v1552 = vsel %vm1550, %v1547, %v1548
        %v1553 = vsel %vm1550, %v1546, %v1547
        %v1554 = vsel %vm1550, %v1545, %v1546
        %v1555 = vsel %vm1550, %v1544, %v1545
        %v1556 = vsel %vm1550, %v1543, %v1544
        %v1557 = vsel %vm1550, %v1542, %v1543
        %v1558 = vsel %vm1550, %v1541, %v1542
        %v1559 = vsel %vm1550, %v1540, %v1541
        %v1560 = vsel %vm1550, %v1539, %v1540
        %v1561 = vsel %vm1550, %v1538, %v1539
        %v1562 = vsel %vm1550, %v1537, %v1538
        %v1563 = vsel %vm1550, %v1536, %v1537
        %v1564 = vsel %vm1550, %v1535, %v1536
        %v1565 = vsel %vm1550, %v1534, %v1535
        %v1566 = vsel %vm1550, %v1533, %v1534
        %v1567 = vsel %vm1550, %v1532, %v1533
        %v1568 = vsel %vm1550, %v1531, %v1532
        %v1569 = vsel %vm1550, %v1530, %v1531
        %v1570 = vsel %vm1550, %v1529, %v1530
        %v1571 = vsel %vm1550, %v1528, %v1529
        %v1572 = vsel %vm1550, %v1527, %v1528
        %v1573 = vsel %vm1550, %v1526, %v1527
        %v1574 = vsel %vm1550, %v1525, %v1526
        %v1575 = vsel %vm1550, %v1524, %v1525
        %v1576 = vsel %vm1550, %v1523, %v1524
        %v1577 = vsel %vm1550, %v1522, %v1523
        %v1578 = vsel %vm1550, %v1521, %v1522
        %v1579 = vsel %vm1550, %v1520, %v1521
        %v1580 = vsel %vm1550, %v1519, %v1520
        %v1581 = vsel %vm1550, %v1518, %v1519
        %v1582 = vsel %vm1550, %v1549, %v1518
        %s1583 = scalar_lea.vmem %s2, 16
        %v1584 = vld [vmem:[%s1583] sm:$0xff]
        %v1586 = vsel %vm874, %v1551, 0
        %v1589 = vsel %vm874, %v1582, 0
        %v1592 = vsel %vm874, %v1581, 0
        %v1595 = vsel %vm874, %v1580, 0
        %v1598 = vsel %vm874, %v1579, 0
        %v1601 = vsel %vm874, %v1578, 0
        %v1604 = vsel %vm874, %v1577, 0
        %v1607 = vsel %vm874, %v1576, 0
        %v1610 = vsel %vm874, %v1575, 0
        %v1613 = vsel %vm874, %v1574, 0
        %v1616 = vsel %vm874, %v1573, 0
        %v1619 = vsel %vm874, %v1572, 0
        %v1622 = vsel %vm874, %v1571, 0
        %v1625 = vsel %vm874, %v1570, 0
        %v1628 = vsel %vm874, %v1569, 0
        %v1631 = vsel %vm874, %v1568, 0
        %v1634 = vsel %vm874, %v1567, 0
        %v1637 = vsel %vm874, %v1566, 0
        %v1640 = vsel %vm874, %v1565, 0
        %v1643 = vsel %vm874, %v1564, 0
        %v1646 = vsel %vm874, %v1563, 0
        %v1649 = vsel %vm874, %v1562, 0
        %v1652 = vsel %vm874, %v1561, 0
        %v1655 = vsel %vm874, %v1560, 0
        %v1658 = vsel %vm874, %v1559, 0
        %v1661 = vsel %vm874, %v1558, 0
        %v1664 = vsel %vm874, %v1557, 0
        %v1667 = vsel %vm874, %v1556, 0
        %v1670 = vsel %vm874, %v1555, 0
        %v1673 = vsel %vm874, %v1554, 0
        %v1676 = vsel %vm874, %v1553, 0
        %v1679 = vsel %vm874, %v1552, 0
        %1681 = vmatpush.msra.mxu0 0.0
        %1682 = vmatpush.msra.mxu0 0.0
        %1683 = vmatpush.msra.mxu0 0.0
        %1684 = vmatpush.msra.mxu0 0.0
        %1685 = vmatpush.msra.mxu0 0.0
        %1686 = vmatpush.msra.mxu0 0.0
        %1687 = vmatpush.msra.mxu0 0.0
        %1688 = vmatpush.msra.mxu0 0.0
        %1689 = vmatpush.msra.mxu0 0.0
        %1690 = vmatpush.msra.mxu0 0.0
        %1691 = vmatpush.msra.mxu0 0.0
        %1692 = vmatpush.msra.mxu0 0.0
        %1693 = vmatpush.msra.mxu0 0.0
        %1694 = vmatpush.msra.mxu0 0.0
        %1695 = vmatpush.msra.mxu0 0.0
        %1696 = vmatpush.msra.mxu0 %v1584
        %1697 = vmatmul.f32.gmra.mxu0 %v1586
        %v1698 = vpop.f32.mrf.mxu0
        %v1699 = vadd.f32 0.0, %v1698
        %1700 = vmatmul.f32.gmra.mxu0 %v1589
        %v1701 = vpop.f32.mrf.mxu0
        %v1702 = vadd.f32 0.0, %v1701
        %1703 = vmatmul.f32.gmra.mxu0 %v1592
        %v1704 = vpop.f32.mrf.mxu0
        %v1705 = vadd.f32 0.0, %v1704
        %1706 = vmatmul.f32.gmra.mxu0 %v1595
        %v1707 = vpop.f32.mrf.mxu0
        %v1708 = vadd.f32 0.0, %v1707
        %1709 = vmatmul.f32.gmra.mxu0 %v1598
        %v1710 = vpop.f32.mrf.mxu0
        %v1711 = vadd.f32 0.0, %v1710
        %1712 = vmatmul.f32.gmra.mxu0 %v1601
        %v1713 = vpop.f32.mrf.mxu0
        %v1714 = vadd.f32 0.0, %v1713
        %1715 = vmatmul.f32.gmra.mxu0 %v1604
        %v1716 = vpop.f32.mrf.mxu0
        %v1717 = vadd.f32 0.0, %v1716
        %1718 = vmatmul.f32.gmra.mxu0 %v1607
        %v1719 = vpop.f32.mrf.mxu0
        %v1720 = vadd.f32 0.0, %v1719
        %1721 = vmatmul.f32.gmra.mxu0 %v1610
        %v1722 = vpop.f32.mrf.mxu0
        %v1723 = vadd.f32 0.0, %v1722
        %1724 = vmatmul.f32.gmra.mxu0 %v1613
        %v1725 = vpop.f32.mrf.mxu0
        %v1726 = vadd.f32 0.0, %v1725
        %1727 = vmatmul.f32.gmra.mxu0 %v1616
        %v1728 = vpop.f32.mrf.mxu0
        %v1729 = vadd.f32 0.0, %v1728
        %1730 = vmatmul.f32.gmra.mxu0 %v1619
        %v1731 = vpop.f32.mrf.mxu0
        %v1732 = vadd.f32 0.0, %v1731
        %1733 = vmatmul.f32.gmra.mxu0 %v1622
        %v1734 = vpop.f32.mrf.mxu0
        %v1735 = vadd.f32 0.0, %v1734
        %1736 = vmatmul.f32.gmra.mxu0 %v1625
        %v1737 = vpop.f32.mrf.mxu0
        %v1738 = vadd.f32 0.0, %v1737
        %1739 = vmatmul.f32.gmra.mxu0 %v1628
        %v1740 = vpop.f32.mrf.mxu0
        %v1741 = vadd.f32 0.0, %v1740
        %1742 = vmatmul.f32.gmra.mxu0 %v1631
        %v1743 = vpop.f32.mrf.mxu0
        %v1744 = vadd.f32 0.0, %v1743
        %1745 = vmatmul.f32.gmra.mxu0 %v1634
        %v1746 = vpop.f32.mrf.mxu0
        %v1747 = vadd.f32 0.0, %v1746
        %1748 = vmatmul.f32.gmra.mxu0 %v1637
        %v1749 = vpop.f32.mrf.mxu0
        %v1750 = vadd.f32 0.0, %v1749
        %1751 = vmatmul.f32.gmra.mxu0 %v1640
        %v1752 = vpop.f32.mrf.mxu0
        %v1753 = vadd.f32 0.0, %v1752
        %1754 = vmatmul.f32.gmra.mxu0 %v1643
        %v1755 = vpop.f32.mrf.mxu0
        %v1756 = vadd.f32 0.0, %v1755
        %1757 = vmatmul.f32.gmra.mxu0 %v1646
        %v1758 = vpop.f32.mrf.mxu0
        %v1759 = vadd.f32 0.0, %v1758
        %1760 = vmatmul.f32.gmra.mxu0 %v1649
        %v1761 = vpop.f32.mrf.mxu0
        %v1762 = vadd.f32 0.0, %v1761
        %1763 = vmatmul.f32.gmra.mxu0 %v1652
        %v1764 = vpop.f32.mrf.mxu0
        %v1765 = vadd.f32 0.0, %v1764
        %1766 = vmatmul.f32.gmra.mxu0 %v1655
        %v1767 = vpop.f32.mrf.mxu0
        %v1768 = vadd.f32 0.0, %v1767
        %1769 = vmatmul.f32.gmra.mxu0 %v1658
        %v1770 = vpop.f32.mrf.mxu0
        %v1771 = vadd.f32 0.0, %v1770
        %1772 = vmatmul.f32.gmra.mxu0 %v1661
        %v1773 = vpop.f32.mrf.mxu0
        %v1774 = vadd.f32 0.0, %v1773
        %1775 = vmatmul.f32.gmra.mxu0 %v1664
        %v1776 = vpop.f32.mrf.mxu0
        %v1777 = vadd.f32 0.0, %v1776
        %1778 = vmatmul.f32.gmra.mxu0 %v1667
        %v1779 = vpop.f32.mrf.mxu0
        %v1780 = vadd.f32 0.0, %v1779
        %1781 = vmatmul.f32.gmra.mxu0 %v1670
        %v1782 = vpop.f32.mrf.mxu0
        %v1783 = vadd.f32 0.0, %v1782
        %1784 = vmatmul.f32.gmra.mxu0 %v1673
        %v1785 = vpop.f32.mrf.mxu0
        %v1786 = vadd.f32 0.0, %v1785
        %1787 = vmatmul.f32.gmra.mxu0 %v1676
        %v1788 = vpop.f32.mrf.mxu0
        %v1789 = vadd.f32 0.0, %v1788
        %1790 = vmatmul.f32.gmra.mxu0 %v1679
        %v1791 = vpop.f32.mrf.mxu0
        %v1792 = vadd.f32 0.0, %v1791
        %1793 = vdwg.mxu0
        %v1794 = vadd.f32 %v1198, %v1699
        %v1795 = vadd.f32 %v1201, %v1702
        %v1796 = vadd.f32 %v1204, %v1705
        %v1797 = vadd.f32 %v1207, %v1708
        %v1798 = vadd.f32 %v1210, %v1711
        %v1799 = vadd.f32 %v1213, %v1714
        %v1800 = vadd.f32 %v1216, %v1717
        %v1801 = vadd.f32 %v1219, %v1720
        %v1802 = vadd.f32 %v1222, %v1723
        %v1803 = vadd.f32 %v1225, %v1726
        %v1804 = vadd.f32 %v1228, %v1729
        %v1805 = vadd.f32 %v1231, %v1732
        %v1806 = vadd.f32 %v1234, %v1735
        %v1807 = vadd.f32 %v1237, %v1738
        %v1808 = vadd.f32 %v1240, %v1741
        %v1809 = vadd.f32 %v1243, %v1744
        %v1810 = vadd.f32 %v1246, %v1747
        %v1811 = vadd.f32 %v1249, %v1750
        %v1812 = vadd.f32 %v1252, %v1753
        %v1813 = vadd.f32 %v1255, %v1756
        %v1814 = vadd.f32 %v1258, %v1759
        %v1815 = vadd.f32 %v1261, %v1762
        %v1816 = vadd.f32 %v1264, %v1765
        %v1817 = vadd.f32 %v1267, %v1768
        %v1818 = vadd.f32 %v1270, %v1771
        %v1819 = vadd.f32 %v1273, %v1774
        %v1820 = vadd.f32 %v1276, %v1777
        %v1821 = vadd.f32 %v1279, %v1780
        %v1822 = vadd.f32 %v1282, %v1783
        %v1823 = vadd.f32 %v1285, %v1786
        %v1824 = vadd.f32 %v1288, %v1789
        %v1825 = vadd.f32 %v1291, %v1792
        %s1826 = scalar_lea.vmem [#allocation2], 768
        %v1827 = vld [vmem:[%s1826] sm:$0xff]
        %v1828 = vld [vmem:[%s1826 + $0x8] sm:$0xff]
        %v1829 = vld [vmem:[%s1826 + $0x10] sm:$0xff]
        %v1830 = vld [vmem:[%s1826 + $0x18] sm:$0xff]
        %v1831 = vld [vmem:[%s1826 + $0x20] sm:$0xff]
        %v1832 = vld [vmem:[%s1826 + $0x28] sm:$0xff]
        %v1833 = vld [vmem:[%s1826 + $0x30] sm:$0xff]
        %v1834 = vld [vmem:[%s1826 + $0x38] sm:$0xff]
        %v1835 = vld [vmem:[%s1826 + $0x40] sm:$0xff]
        %v1836 = vld [vmem:[%s1826 + $0x48] sm:$0xff]
        %v1837 = vld [vmem:[%s1826 + $0x50] sm:$0xff]
        %v1838 = vld [vmem:[%s1826 + $0x58] sm:$0xff]
        %v1839 = vld [vmem:[%s1826 + $0x60] sm:$0xff]
        %v1840 = vld [vmem:[%s1826 + $0x68] sm:$0xff]
        %v1841 = vld [vmem:[%s1826 + $0x70] sm:$0xff]
        %v1842 = vld [vmem:[%s1826 + $0x78] sm:$0xff]
        %v1843 = vld [vmem:[%s1826 + $0x80] sm:$0xff]
        %v1844 = vld [vmem:[%s1826 + $0x88] sm:$0xff]
        %v1845 = vld [vmem:[%s1826 + $0x90] sm:$0xff]
        %v1846 = vld [vmem:[%s1826 + $0x98] sm:$0xff]
        %v1847 = vld [vmem:[%s1826 + $0xa0] sm:$0xff]
        %v1848 = vld [vmem:[%s1826 + $0xa8] sm:$0xff]
        %v1849 = vld [vmem:[%s1826 + $0xb0] sm:$0xff]
        %v1850 = vld [vmem:[%s1826 + $0xb8] sm:$0xff]
        %v1851 = vld [vmem:[%s1826 + $0xc0] sm:$0xff]
        %v1852 = vld [vmem:[%s1826 + $0xc8] sm:$0xff]
        %v1853 = vld [vmem:[%s1826 + $0xd0] sm:$0xff]
        %v1854 = vld [vmem:[%s1826 + $0xd8] sm:$0xff]
        %v1855 = vld [vmem:[%s1826 + $0xe0] sm:$0xff]
        %v1856 = vld [vmem:[%s1826 + $0xe8] sm:$0xff]
        %v1857 = vld [vmem:[%s1826 + $0xf0] sm:$0xff]
        %v1858 = vld [vmem:[%s1826 + $0xf8] sm:$0xff]
        %1860 = vset.pattern.permute.xlu0 0
        %1861 = vperm.xlu0 %1860, %v1827
        %v1862 = vpop.permute.xlu0 %1861
        %1865 = vset.pattern.permute.xlu0 0
        %1866 = vperm.xlu0 %1865, %v1828
        %v1867 = vpop.permute.xlu0 %1866
        %1870 = vset.pattern.permute.xlu0 0
        %1871 = vperm.xlu0 %1870, %v1829
        %v1872 = vpop.permute.xlu0 %1871
        %1875 = vset.pattern.permute.xlu0 0
        %1876 = vperm.xlu0 %1875, %v1830
        %v1877 = vpop.permute.xlu0 %1876
        %1880 = vset.pattern.permute.xlu0 0
        %1881 = vperm.xlu0 %1880, %v1831
        %v1882 = vpop.permute.xlu0 %1881
        %1885 = vset.pattern.permute.xlu0 0
        %1886 = vperm.xlu0 %1885, %v1832
        %v1887 = vpop.permute.xlu0 %1886
        %1890 = vset.pattern.permute.xlu0 0
        %1891 = vperm.xlu0 %1890, %v1833
        %v1892 = vpop.permute.xlu0 %1891
        %1895 = vset.pattern.permute.xlu0 0
        %1896 = vperm.xlu0 %1895, %v1834
        %v1897 = vpop.permute.xlu0 %1896
        %1900 = vset.pattern.permute.xlu0 0
        %1901 = vperm.xlu0 %1900, %v1835
        %v1902 = vpop.permute.xlu0 %1901
        %1905 = vset.pattern.permute.xlu0 0
        %1906 = vperm.xlu0 %1905, %v1836
        %v1907 = vpop.permute.xlu0 %1906
        %1910 = vset.pattern.permute.xlu0 0
        %1911 = vperm.xlu0 %1910, %v1837
        %v1912 = vpop.permute.xlu0 %1911
        %1915 = vset.pattern.permute.xlu0 0
        %1916 = vperm.xlu0 %1915, %v1838
        %v1917 = vpop.permute.xlu0 %1916
        %1920 = vset.pattern.permute.xlu0 0
        %1921 = vperm.xlu0 %1920, %v1839
        %v1922 = vpop.permute.xlu0 %1921
        %1925 = vset.pattern.permute.xlu0 0
        %1926 = vperm.xlu0 %1925, %v1840
        %v1927 = vpop.permute.xlu0 %1926
        %1930 = vset.pattern.permute.xlu0 0
        %1931 = vperm.xlu0 %1930, %v1841
        %v1932 = vpop.permute.xlu0 %1931
        %1935 = vset.pattern.permute.xlu0 0
        %1936 = vperm.xlu0 %1935, %v1842
        %v1937 = vpop.permute.xlu0 %1936
        %1940 = vset.pattern.permute.xlu0 0
        %1941 = vperm.xlu0 %1940, %v1843
        %v1942 = vpop.permute.xlu0 %1941
        %1945 = vset.pattern.permute.xlu0 0
        %1946 = vperm.xlu0 %1945, %v1844
        %v1947 = vpop.permute.xlu0 %1946
        %1950 = vset.pattern.permute.xlu0 0
        %1951 = vperm.xlu0 %1950, %v1845
        %v1952 = vpop.permute.xlu0 %1951
        %1955 = vset.pattern.permute.xlu0 0
        %1956 = vperm.xlu0 %1955, %v1846
        %v1957 = vpop.permute.xlu0 %1956
        %1960 = vset.pattern.permute.xlu0 0
        %1961 = vperm.xlu0 %1960, %v1847
        %v1962 = vpop.permute.xlu0 %1961
        %1965 = vset.pattern.permute.xlu0 0
        %1966 = vperm.xlu0 %1965, %v1848
        %v1967 = vpop.permute.xlu0 %1966
        %1970 = vset.pattern.permute.xlu0 0
        %1971 = vperm.xlu0 %1970, %v1849
        %v1972 = vpop.permute.xlu0 %1971
        %1975 = vset.pattern.permute.xlu0 0
        %1976 = vperm.xlu0 %1975, %v1850
        %v1977 = vpop.permute.xlu0 %1976
        %1980 = vset.pattern.permute.xlu0 0
        %1981 = vperm.xlu0 %1980, %v1851
        %v1982 = vpop.permute.xlu0 %1981
        %1985 = vset.pattern.permute.xlu0 0
        %1986 = vperm.xlu0 %1985, %v1852
        %v1987 = vpop.permute.xlu0 %1986
        %1990 = vset.pattern.permute.xlu0 0
        %1991 = vperm.xlu0 %1990, %v1853
        %v1992 = vpop.permute.xlu0 %1991
        %1995 = vset.pattern.permute.xlu0 0
        %1996 = vperm.xlu0 %1995, %v1854
        %v1997 = vpop.permute.xlu0 %1996
        %2000 = vset.pattern.permute.xlu0 0
        %2001 = vperm.xlu0 %2000, %v1855
        %v2002 = vpop.permute.xlu0 %2001
        %2005 = vset.pattern.permute.xlu0 0
        %2006 = vperm.xlu0 %2005, %v1856
        %v2007 = vpop.permute.xlu0 %2006
        %2010 = vset.pattern.permute.xlu0 0
        %2011 = vperm.xlu0 %2010, %v1857
        %v2012 = vpop.permute.xlu0 %2011
        %2015 = vset.pattern.permute.xlu0 0
        %2016 = vperm.xlu0 %2015, %v1858
        %v2017 = vpop.permute.xlu0 %2016
        %v2019 = vmul.f32 %v323, %v1862
        %v2020 = vmul.f32 %v324, %v1867
        %v2021 = vmul.f32 %v325, %v1872
        %v2022 = vmul.f32 %v326, %v1877
        %v2023 = vmul.f32 %v327, %v1882
        %v2024 = vmul.f32 %v328, %v1887
        %v2025 = vmul.f32 %v329, %v1892
        %v2026 = vmul.f32 %v330, %v1897
        %v2027 = vmul.f32 %v331, %v1902
        %v2028 = vmul.f32 %v332, %v1907
        %v2029 = vmul.f32 %v333, %v1912
        %v2030 = vmul.f32 %v334, %v1917
        %v2031 = vmul.f32 %v335, %v1922
        %v2032 = vmul.f32 %v336, %v1927
        %v2033 = vmul.f32 %v337, %v1932
        %v2034 = vmul.f32 %v338, %v1937
        %v2035 = vmul.f32 %v339, %v1942
        %v2036 = vmul.f32 %v340, %v1947
        %v2037 = vmul.f32 %v341, %v1952
        %v2038 = vmul.f32 %v342, %v1957
        %v2039 = vmul.f32 %v343, %v1962
        %v2040 = vmul.f32 %v344, %v1967
        %v2041 = vmul.f32 %v345, %v1972
        %v2042 = vmul.f32 %v346, %v1977
        %v2043 = vmul.f32 %v347, %v1982
        %v2044 = vmul.f32 %v348, %v1987
        %v2045 = vmul.f32 %v349, %v1992
        %v2046 = vmul.f32 %v350, %v1997
        %v2047 = vmul.f32 %v351, %v2002
        %v2048 = vmul.f32 %v352, %v2007
        %v2049 = vmul.f32 %v353, %v2012
        %v2050 = vmul.f32 %v354, %v2017
        %v2051 = vrot.slane %v2019, 7
        %v2052 = vrot.slane %v2020, 7
        %v2053 = vrot.slane %v2021, 7
        %v2054 = vrot.slane %v2022, 7
        %v2055 = vrot.slane %v2023, 7
        %v2056 = vrot.slane %v2024, 7
        %v2057 = vrot.slane %v2025, 7
        %v2058 = vrot.slane %v2026, 7
        %v2059 = vrot.slane %v2027, 7
        %v2060 = vrot.slane %v2028, 7
        %v2061 = vrot.slane %v2029, 7
        %v2062 = vrot.slane %v2030, 7
        %v2063 = vrot.slane %v2031, 7
        %v2064 = vrot.slane %v2032, 7
        %v2065 = vrot.slane %v2033, 7
        %v2066 = vrot.slane %v2034, 7
        %v2067 = vrot.slane %v2035, 7
        %v2068 = vrot.slane %v2036, 7
        %v2069 = vrot.slane %v2037, 7
        %v2070 = vrot.slane %v2038, 7
        %v2071 = vrot.slane %v2039, 7
        %v2072 = vrot.slane %v2040, 7
        %v2073 = vrot.slane %v2041, 7
        %v2074 = vrot.slane %v2042, 7
        %v2075 = vrot.slane %v2043, 7
        %v2076 = vrot.slane %v2044, 7
        %v2077 = vrot.slane %v2045, 7
        %v2078 = vrot.slane %v2046, 7
        %v2079 = vrot.slane %v2047, 7
        %v2080 = vrot.slane %v2048, 7
        %v2081 = vrot.slane %v2049, 7
        %v2082 = vrot.slane %v2050, 7
        %v2083 = vsel %vm613, %v2081, %v2082
        %v2084 = vsel %vm613, %v2080, %v2081
        %v2085 = vsel %vm613, %v2079, %v2080
        %v2086 = vsel %vm613, %v2078, %v2079
        %v2087 = vsel %vm613, %v2077, %v2078
        %v2088 = vsel %vm613, %v2076, %v2077
        %v2089 = vsel %vm613, %v2075, %v2076
        %v2090 = vsel %vm613, %v2074, %v2075
        %v2091 = vsel %vm613, %v2073, %v2074
        %v2092 = vsel %vm613, %v2072, %v2073
        %v2093 = vsel %vm613, %v2071, %v2072
        %v2094 = vsel %vm613, %v2070, %v2071
        %v2095 = vsel %vm613, %v2069, %v2070
        %v2096 = vsel %vm613, %v2068, %v2069
        %v2097 = vsel %vm613, %v2067, %v2068
        %v2098 = vsel %vm613, %v2066, %v2067
        %v2099 = vsel %vm613, %v2065, %v2066
        %v2100 = vsel %vm613, %v2064, %v2065
        %v2101 = vsel %vm613, %v2063, %v2064
        %v2102 = vsel %vm613, %v2062, %v2063
        %v2103 = vsel %vm613, %v2061, %v2062
        %v2104 = vsel %vm613, %v2060, %v2061
        %v2105 = vsel %vm613, %v2059, %v2060
        %v2106 = vsel %vm613, %v2058, %v2059
        %v2107 = vsel %vm613, %v2057, %v2058
        %v2108 = vsel %vm613, %v2056, %v2057
        %v2109 = vsel %vm613, %v2055, %v2056
        %v2110 = vsel %vm613, %v2054, %v2055
        %v2111 = vsel %vm613, %v2053, %v2054
        %v2112 = vsel %vm613, %v2052, %v2053
        %v2113 = vsel %vm613, %v2051, %v2052
        %v2114 = vsel %vm613, %v2082, %v2051
        %s2115 = scalar_lea.vmem %s2, 24
        %v2116 = vld [vmem:[%s2115] sm:$0xff]
        %v2118 = vsel %vm874, %v2114, 0
        %v2121 = vsel %vm874, %v2113, 0
        %v2124 = vsel %vm874, %v2112, 0
        %v2127 = vsel %vm874, %v2111, 0
        %v2130 = vsel %vm874, %v2110, 0
        %v2133 = vsel %vm874, %v2109, 0
        %v2136 = vsel %vm874, %v2108, 0
        %v2139 = vsel %vm874, %v2107, 0
        %v2142 = vsel %vm874, %v2106, 0
        %v2145 = vsel %vm874, %v2105, 0
        %v2148 = vsel %vm874, %v2104, 0
        %v2151 = vsel %vm874, %v2103, 0
        %v2154 = vsel %vm874, %v2102, 0
        %v2157 = vsel %vm874, %v2101, 0
        %v2160 = vsel %vm874, %v2100, 0
        %v2163 = vsel %vm874, %v2099, 0
        %v2166 = vsel %vm874, %v2098, 0
        %v2169 = vsel %vm874, %v2097, 0
        %v2172 = vsel %vm874, %v2096, 0
        %v2175 = vsel %vm874, %v2095, 0
        %v2178 = vsel %vm874, %v2094, 0
        %v2181 = vsel %vm874, %v2093, 0
        %v2184 = vsel %vm874, %v2092, 0
        %v2187 = vsel %vm874, %v2091, 0
        %v2190 = vsel %vm874, %v2090, 0
        %v2193 = vsel %vm874, %v2089, 0
        %v2196 = vsel %vm874, %v2088, 0
        %v2199 = vsel %vm874, %v2087, 0
        %v2202 = vsel %vm874, %v2086, 0
        %v2205 = vsel %vm874, %v2085, 0
        %v2208 = vsel %vm874, %v2084, 0
        %v2211 = vsel %vm874, %v2083, 0
        %2213 = vmatpush.msra.mxu0 0.0
        %2214 = vmatpush.msra.mxu0 0.0
        %2215 = vmatpush.msra.mxu0 0.0
        %2216 = vmatpush.msra.mxu0 0.0
        %2217 = vmatpush.msra.mxu0 0.0
        %2218 = vmatpush.msra.mxu0 0.0
        %2219 = vmatpush.msra.mxu0 0.0
        %2220 = vmatpush.msra.mxu0 0.0
        %2221 = vmatpush.msra.mxu0 0.0
        %2222 = vmatpush.msra.mxu0 0.0
        %2223 = vmatpush.msra.mxu0 0.0
        %2224 = vmatpush.msra.mxu0 0.0
        %2225 = vmatpush.msra.mxu0 0.0
        %2226 = vmatpush.msra.mxu0 0.0
        %2227 = vmatpush.msra.mxu0 0.0
        %2228 = vmatpush.msra.mxu0 %v2116
        %2229 = vmatmul.f32.gmra.mxu0 %v2118
        %v2230 = vpop.f32.mrf.mxu0
        %v2231 = vadd.f32 0.0, %v2230
        %2232 = vmatmul.f32.gmra.mxu0 %v2121
        %v2233 = vpop.f32.mrf.mxu0
        %v2234 = vadd.f32 0.0, %v2233
        %2235 = vmatmul.f32.gmra.mxu0 %v2124
        %v2236 = vpop.f32.mrf.mxu0
        %v2237 = vadd.f32 0.0, %v2236
        %2238 = vmatmul.f32.gmra.mxu0 %v2127
        %v2239 = vpop.f32.mrf.mxu0
        %v2240 = vadd.f32 0.0, %v2239
        %2241 = vmatmul.f32.gmra.mxu0 %v2130
        %v2242 = vpop.f32.mrf.mxu0
        %v2243 = vadd.f32 0.0, %v2242
        %2244 = vmatmul.f32.gmra.mxu0 %v2133
        %v2245 = vpop.f32.mrf.mxu0
        %v2246 = vadd.f32 0.0, %v2245
        %2247 = vmatmul.f32.gmra.mxu0 %v2136
        %v2248 = vpop.f32.mrf.mxu0
        %v2249 = vadd.f32 0.0, %v2248
        %2250 = vmatmul.f32.gmra.mxu0 %v2139
        %v2251 = vpop.f32.mrf.mxu0
        %v2252 = vadd.f32 0.0, %v2251
        %2253 = vmatmul.f32.gmra.mxu0 %v2142
        %v2254 = vpop.f32.mrf.mxu0
        %v2255 = vadd.f32 0.0, %v2254
        %2256 = vmatmul.f32.gmra.mxu0 %v2145
        %v2257 = vpop.f32.mrf.mxu0
        %v2258 = vadd.f32 0.0, %v2257
        %2259 = vmatmul.f32.gmra.mxu0 %v2148
        %v2260 = vpop.f32.mrf.mxu0
        %v2261 = vadd.f32 0.0, %v2260
        %2262 = vmatmul.f32.gmra.mxu0 %v2151
        %v2263 = vpop.f32.mrf.mxu0
        %v2264 = vadd.f32 0.0, %v2263
        %2265 = vmatmul.f32.gmra.mxu0 %v2154
        %v2266 = vpop.f32.mrf.mxu0
        %v2267 = vadd.f32 0.0, %v2266
        %2268 = vmatmul.f32.gmra.mxu0 %v2157
        %v2269 = vpop.f32.mrf.mxu0
        %v2270 = vadd.f32 0.0, %v2269
        %2271 = vmatmul.f32.gmra.mxu0 %v2160
        %v2272 = vpop.f32.mrf.mxu0
        %v2273 = vadd.f32 0.0, %v2272
        %2274 = vmatmul.f32.gmra.mxu0 %v2163
        %v2275 = vpop.f32.mrf.mxu0
        %v2276 = vadd.f32 0.0, %v2275
        %2277 = vmatmul.f32.gmra.mxu0 %v2166
        %v2278 = vpop.f32.mrf.mxu0
        %v2279 = vadd.f32 0.0, %v2278
        %2280 = vmatmul.f32.gmra.mxu0 %v2169
        %v2281 = vpop.f32.mrf.mxu0
        %v2282 = vadd.f32 0.0, %v2281
        %2283 = vmatmul.f32.gmra.mxu0 %v2172
        %v2284 = vpop.f32.mrf.mxu0
        %v2285 = vadd.f32 0.0, %v2284
        %2286 = vmatmul.f32.gmra.mxu0 %v2175
        %v2287 = vpop.f32.mrf.mxu0
        %v2288 = vadd.f32 0.0, %v2287
        %2289 = vmatmul.f32.gmra.mxu0 %v2178
        %v2290 = vpop.f32.mrf.mxu0
        %v2291 = vadd.f32 0.0, %v2290
        %2292 = vmatmul.f32.gmra.mxu0 %v2181
        %v2293 = vpop.f32.mrf.mxu0
        %v2294 = vadd.f32 0.0, %v2293
        %2295 = vmatmul.f32.gmra.mxu0 %v2184
        %v2296 = vpop.f32.mrf.mxu0
        %v2297 = vadd.f32 0.0, %v2296
        %2298 = vmatmul.f32.gmra.mxu0 %v2187
        %v2299 = vpop.f32.mrf.mxu0
        %v2300 = vadd.f32 0.0, %v2299
        %2301 = vmatmul.f32.gmra.mxu0 %v2190
        %v2302 = vpop.f32.mrf.mxu0
        %v2303 = vadd.f32 0.0, %v2302
        %2304 = vmatmul.f32.gmra.mxu0 %v2193
        %v2305 = vpop.f32.mrf.mxu0
        %v2306 = vadd.f32 0.0, %v2305
        %2307 = vmatmul.f32.gmra.mxu0 %v2196
        %v2308 = vpop.f32.mrf.mxu0
        %v2309 = vadd.f32 0.0, %v2308
        %2310 = vmatmul.f32.gmra.mxu0 %v2199
        %v2311 = vpop.f32.mrf.mxu0
        %v2312 = vadd.f32 0.0, %v2311
        %2313 = vmatmul.f32.gmra.mxu0 %v2202
        %v2314 = vpop.f32.mrf.mxu0
        %v2315 = vadd.f32 0.0, %v2314
        %2316 = vmatmul.f32.gmra.mxu0 %v2205
        %v2317 = vpop.f32.mrf.mxu0
        %v2318 = vadd.f32 0.0, %v2317
        %2319 = vmatmul.f32.gmra.mxu0 %v2208
        %v2320 = vpop.f32.mrf.mxu0
        %v2321 = vadd.f32 0.0, %v2320
        %2322 = vmatmul.f32.gmra.mxu0 %v2211
        %v2323 = vpop.f32.mrf.mxu0
        %v2324 = vadd.f32 0.0, %v2323
        %2325 = vdwg.mxu0
        %v2326 = vadd.f32 %v1794, %v2231
        %v2327 = vadd.f32 %v1795, %v2234
        %v2328 = vadd.f32 %v1796, %v2237
        %v2329 = vadd.f32 %v1797, %v2240
        %v2330 = vadd.f32 %v1798, %v2243
        %v2331 = vadd.f32 %v1799, %v2246
        %v2332 = vadd.f32 %v1800, %v2249
        %v2333 = vadd.f32 %v1801, %v2252
        %v2334 = vadd.f32 %v1802, %v2255
        %v2335 = vadd.f32 %v1803, %v2258
        %v2336 = vadd.f32 %v1804, %v2261
        %v2337 = vadd.f32 %v1805, %v2264
        %v2338 = vadd.f32 %v1806, %v2267
        %v2339 = vadd.f32 %v1807, %v2270
        %v2340 = vadd.f32 %v1808, %v2273
        %v2341 = vadd.f32 %v1809, %v2276
        %v2342 = vadd.f32 %v1810, %v2279
        %v2343 = vadd.f32 %v1811, %v2282
        %v2344 = vadd.f32 %v1812, %v2285
        %v2345 = vadd.f32 %v1813, %v2288
        %v2346 = vadd.f32 %v1814, %v2291
        %v2347 = vadd.f32 %v1815, %v2294
        %v2348 = vadd.f32 %v1816, %v2297
        %v2349 = vadd.f32 %v1817, %v2300
        %v2350 = vadd.f32 %v1818, %v2303
        %v2351 = vadd.f32 %v1819, %v2306
        %v2352 = vadd.f32 %v1820, %v2309
        %v2353 = vadd.f32 %v1821, %v2312
        %v2354 = vadd.f32 %v1822, %v2315
        %v2355 = vadd.f32 %v1823, %v2318
        %v2356 = vadd.f32 %v1824, %v2321
        %v2357 = vadd.f32 %v1825, %v2324
        %s2358 = scalar_lea.vmem %s2, 32
        %v2359 = vld [vmem:[%s2358] sm:$0xff]
        %v2361 = vsel %vm874, %v323, 0
        %v2364 = vsel %vm874, %v324, 0
        %v2367 = vsel %vm874, %v325, 0
        %v2370 = vsel %vm874, %v326, 0
        %v2373 = vsel %vm874, %v327, 0
        %v2376 = vsel %vm874, %v328, 0
        %v2379 = vsel %vm874, %v329, 0
        %v2382 = vsel %vm874, %v330, 0
        %v2385 = vsel %vm874, %v331, 0
        %v2388 = vsel %vm874, %v332, 0
        %v2391 = vsel %vm874, %v333, 0
        %v2394 = vsel %vm874, %v334, 0
        %v2397 = vsel %vm874, %v335, 0
        %v2400 = vsel %vm874, %v336, 0
        %v2403 = vsel %vm874, %v337, 0
        %v2406 = vsel %vm874, %v338, 0
        %v2409 = vsel %vm874, %v339, 0
        %v2412 = vsel %vm874, %v340, 0
        %v2415 = vsel %vm874, %v341, 0
        %v2418 = vsel %vm874, %v342, 0
        %v2421 = vsel %vm874, %v343, 0
        %v2424 = vsel %vm874, %v344, 0
        %v2427 = vsel %vm874, %v345, 0
        %v2430 = vsel %vm874, %v346, 0
        %v2433 = vsel %vm874, %v347, 0
        %v2436 = vsel %vm874, %v348, 0
        %v2439 = vsel %vm874, %v349, 0
        %v2442 = vsel %vm874, %v350, 0
        %v2445 = vsel %vm874, %v351, 0
        %v2448 = vsel %vm874, %v352, 0
        %v2451 = vsel %vm874, %v353, 0
        %v2454 = vsel %vm874, %v354, 0
        %2456 = vmatpush.msra.mxu0 0.0
        %2457 = vmatpush.msra.mxu0 0.0
        %2458 = vmatpush.msra.mxu0 0.0
        %2459 = vmatpush.msra.mxu0 0.0
        %2460 = vmatpush.msra.mxu0 0.0
        %2461 = vmatpush.msra.mxu0 0.0
        %2462 = vmatpush.msra.mxu0 0.0
        %2463 = vmatpush.msra.mxu0 0.0
        %2464 = vmatpush.msra.mxu0 0.0
        %2465 = vmatpush.msra.mxu0 0.0
        %2466 = vmatpush.msra.mxu0 0.0
        %2467 = vmatpush.msra.mxu0 0.0
        %2468 = vmatpush.msra.mxu0 0.0
        %2469 = vmatpush.msra.mxu0 0.0
        %2470 = vmatpush.msra.mxu0 0.0
        %2471 = vmatpush.msra.mxu0 %v2359
        %2472 = vmatmul.f32.gmra.mxu0 %v2361
        %v2473 = vpop.f32.mrf.mxu0
        %v2474 = vadd.f32 0.0, %v2473
        %2475 = vmatmul.f32.gmra.mxu0 %v2364
        %v2476 = vpop.f32.mrf.mxu0
        %v2477 = vadd.f32 0.0, %v2476
        %2478 = vmatmul.f32.gmra.mxu0 %v2367
        %v2479 = vpop.f32.mrf.mxu0
        %v2480 = vadd.f32 0.0, %v2479
        %2481 = vmatmul.f32.gmra.mxu0 %v2370
        %v2482 = vpop.f32.mrf.mxu0
        %v2483 = vadd.f32 0.0, %v2482
        %2484 = vmatmul.f32.gmra.mxu0 %v2373
        %v2485 = vpop.f32.mrf.mxu0
        %v2486 = vadd.f32 0.0, %v2485
        %2487 = vmatmul.f32.gmra.mxu0 %v2376
        %v2488 = vpop.f32.mrf.mxu0
        %v2489 = vadd.f32 0.0, %v2488
        %2490 = vmatmul.f32.gmra.mxu0 %v2379
        %v2491 = vpop.f32.mrf.mxu0
        %v2492 = vadd.f32 0.0, %v2491
        %2493 = vmatmul.f32.gmra.mxu0 %v2382
        %v2494 = vpop.f32.mrf.mxu0
        %v2495 = vadd.f32 0.0, %v2494
        %2496 = vmatmul.f32.gmra.mxu0 %v2385
        %v2497 = vpop.f32.mrf.mxu0
        %v2498 = vadd.f32 0.0, %v2497
        %2499 = vmatmul.f32.gmra.mxu0 %v2388
        %v2500 = vpop.f32.mrf.mxu0
        %v2501 = vadd.f32 0.0, %v2500
        %2502 = vmatmul.f32.gmra.mxu0 %v2391
        %v2503 = vpop.f32.mrf.mxu0
        %v2504 = vadd.f32 0.0, %v2503
        %2505 = vmatmul.f32.gmra.mxu0 %v2394
        %v2506 = vpop.f32.mrf.mxu0
        %v2507 = vadd.f32 0.0, %v2506
        %2508 = vmatmul.f32.gmra.mxu0 %v2397
        %v2509 = vpop.f32.mrf.mxu0
        %v2510 = vadd.f32 0.0, %v2509
        %2511 = vmatmul.f32.gmra.mxu0 %v2400
        %v2512 = vpop.f32.mrf.mxu0
        %v2513 = vadd.f32 0.0, %v2512
        %2514 = vmatmul.f32.gmra.mxu0 %v2403
        %v2515 = vpop.f32.mrf.mxu0
        %v2516 = vadd.f32 0.0, %v2515
        %2517 = vmatmul.f32.gmra.mxu0 %v2406
        %v2518 = vpop.f32.mrf.mxu0
        %v2519 = vadd.f32 0.0, %v2518
        %2520 = vmatmul.f32.gmra.mxu0 %v2409
        %v2521 = vpop.f32.mrf.mxu0
        %v2522 = vadd.f32 0.0, %v2521
        %2523 = vmatmul.f32.gmra.mxu0 %v2412
        %v2524 = vpop.f32.mrf.mxu0
        %v2525 = vadd.f32 0.0, %v2524
        %2526 = vmatmul.f32.gmra.mxu0 %v2415
        %v2527 = vpop.f32.mrf.mxu0
        %v2528 = vadd.f32 0.0, %v2527
        %2529 = vmatmul.f32.gmra.mxu0 %v2418
        %v2530 = vpop.f32.mrf.mxu0
        %v2531 = vadd.f32 0.0, %v2530
        %2532 = vmatmul.f32.gmra.mxu0 %v2421
        %v2533 = vpop.f32.mrf.mxu0
        %v2534 = vadd.f32 0.0, %v2533
        %2535 = vmatmul.f32.gmra.mxu0 %v2424
        %v2536 = vpop.f32.mrf.mxu0
        %v2537 = vadd.f32 0.0, %v2536
        %2538 = vmatmul.f32.gmra.mxu0 %v2427
        %v2539 = vpop.f32.mrf.mxu0
        %v2540 = vadd.f32 0.0, %v2539
        %2541 = vmatmul.f32.gmra.mxu0 %v2430
        %v2542 = vpop.f32.mrf.mxu0
        %v2543 = vadd.f32 0.0, %v2542
        %2544 = vmatmul.f32.gmra.mxu0 %v2433
        %v2545 = vpop.f32.mrf.mxu0
        %v2546 = vadd.f32 0.0, %v2545
        %2547 = vmatmul.f32.gmra.mxu0 %v2436
        %v2548 = vpop.f32.mrf.mxu0
        %v2549 = vadd.f32 0.0, %v2548
        %2550 = vmatmul.f32.gmra.mxu0 %v2439
        %v2551 = vpop.f32.mrf.mxu0
        %v2552 = vadd.f32 0.0, %v2551
        %2553 = vmatmul.f32.gmra.mxu0 %v2442
        %v2554 = vpop.f32.mrf.mxu0
        %v2555 = vadd.f32 0.0, %v2554
        %2556 = vmatmul.f32.gmra.mxu0 %v2445
        %v2557 = vpop.f32.mrf.mxu0
        %v2558 = vadd.f32 0.0, %v2557
        %2559 = vmatmul.f32.gmra.mxu0 %v2448
        %v2560 = vpop.f32.mrf.mxu0
        %v2561 = vadd.f32 0.0, %v2560
        %2562 = vmatmul.f32.gmra.mxu0 %v2451
        %v2563 = vpop.f32.mrf.mxu0
        %v2564 = vadd.f32 0.0, %v2563
        %2565 = vmatmul.f32.gmra.mxu0 %v2454
        %v2566 = vpop.f32.mrf.mxu0
        %v2567 = vadd.f32 0.0, %v2566
        %2568 = vdwg.mxu0
        %v2569 = vadd.f32 %v2326, %v2474
        %v2570 = vadd.f32 %v2327, %v2477
        %v2571 = vadd.f32 %v2328, %v2480
        %v2572 = vadd.f32 %v2329, %v2483
        %v2573 = vadd.f32 %v2330, %v2486
        %v2574 = vadd.f32 %v2331, %v2489
        %v2575 = vadd.f32 %v2332, %v2492
        %v2576 = vadd.f32 %v2333, %v2495
        %v2577 = vadd.f32 %v2334, %v2498
        %v2578 = vadd.f32 %v2335, %v2501
        %v2579 = vadd.f32 %v2336, %v2504
        %v2580 = vadd.f32 %v2337, %v2507
        %v2581 = vadd.f32 %v2338, %v2510
        %v2582 = vadd.f32 %v2339, %v2513
        %v2583 = vadd.f32 %v2340, %v2516
        %v2584 = vadd.f32 %v2341, %v2519
        %v2585 = vadd.f32 %v2342, %v2522
        %v2586 = vadd.f32 %v2343, %v2525
        %v2587 = vadd.f32 %v2344, %v2528
        %v2588 = vadd.f32 %v2345, %v2531
        %v2589 = vadd.f32 %v2346, %v2534
        %v2590 = vadd.f32 %v2347, %v2537
        %v2591 = vadd.f32 %v2348, %v2540
        %v2592 = vadd.f32 %v2349, %v2543
        %v2593 = vadd.f32 %v2350, %v2546
        %v2594 = vadd.f32 %v2351, %v2549
        %v2595 = vadd.f32 %v2352, %v2552
        %v2596 = vadd.f32 %v2353, %v2555
        %v2597 = vadd.f32 %v2354, %v2558
        %v2598 = vadd.f32 %v2355, %v2561
        %v2599 = vadd.f32 %v2356, %v2564
        %v2600 = vadd.f32 %v2357, %v2567
        %s2601 = scalar_lea.vmem [#allocation2], 1024
        %v2602 = vld [vmem:[%s2601] sm:$0xff]
        %v2603 = vld [vmem:[%s2601 + $0x8] sm:$0xff]
        %v2604 = vld [vmem:[%s2601 + $0x10] sm:$0xff]
        %v2605 = vld [vmem:[%s2601 + $0x18] sm:$0xff]
        %v2606 = vld [vmem:[%s2601 + $0x20] sm:$0xff]
        %v2607 = vld [vmem:[%s2601 + $0x28] sm:$0xff]
        %v2608 = vld [vmem:[%s2601 + $0x30] sm:$0xff]
        %v2609 = vld [vmem:[%s2601 + $0x38] sm:$0xff]
        %v2610 = vld [vmem:[%s2601 + $0x40] sm:$0xff]
        %v2611 = vld [vmem:[%s2601 + $0x48] sm:$0xff]
        %v2612 = vld [vmem:[%s2601 + $0x50] sm:$0xff]
        %v2613 = vld [vmem:[%s2601 + $0x58] sm:$0xff]
        %v2614 = vld [vmem:[%s2601 + $0x60] sm:$0xff]
        %v2615 = vld [vmem:[%s2601 + $0x68] sm:$0xff]
        %v2616 = vld [vmem:[%s2601 + $0x70] sm:$0xff]
        %v2617 = vld [vmem:[%s2601 + $0x78] sm:$0xff]
        %v2618 = vld [vmem:[%s2601 + $0x80] sm:$0xff]
        %v2619 = vld [vmem:[%s2601 + $0x88] sm:$0xff]
        %v2620 = vld [vmem:[%s2601 + $0x90] sm:$0xff]
        %v2621 = vld [vmem:[%s2601 + $0x98] sm:$0xff]
        %v2622 = vld [vmem:[%s2601 + $0xa0] sm:$0xff]
        %v2623 = vld [vmem:[%s2601 + $0xa8] sm:$0xff]
        %v2624 = vld [vmem:[%s2601 + $0xb0] sm:$0xff]
        %v2625 = vld [vmem:[%s2601 + $0xb8] sm:$0xff]
        %v2626 = vld [vmem:[%s2601 + $0xc0] sm:$0xff]
        %v2627 = vld [vmem:[%s2601 + $0xc8] sm:$0xff]
        %v2628 = vld [vmem:[%s2601 + $0xd0] sm:$0xff]
        %v2629 = vld [vmem:[%s2601 + $0xd8] sm:$0xff]
        %v2630 = vld [vmem:[%s2601 + $0xe0] sm:$0xff]
        %v2631 = vld [vmem:[%s2601 + $0xe8] sm:$0xff]
        %v2632 = vld [vmem:[%s2601 + $0xf0] sm:$0xff]
        %v2633 = vld [vmem:[%s2601 + $0xf8] sm:$0xff]
        %2635 = vset.pattern.permute.xlu0 0
        %2636 = vperm.xlu0 %2635, %v2602
        %v2637 = vpop.permute.xlu0 %2636
        %2640 = vset.pattern.permute.xlu0 0
        %2641 = vperm.xlu0 %2640, %v2603
        %v2642 = vpop.permute.xlu0 %2641
        %2645 = vset.pattern.permute.xlu0 0
        %2646 = vperm.xlu0 %2645, %v2604
        %v2647 = vpop.permute.xlu0 %2646
        %2650 = vset.pattern.permute.xlu0 0
        %2651 = vperm.xlu0 %2650, %v2605
        %v2652 = vpop.permute.xlu0 %2651
        %2655 = vset.pattern.permute.xlu0 0
        %2656 = vperm.xlu0 %2655, %v2606
        %v2657 = vpop.permute.xlu0 %2656
        %2660 = vset.pattern.permute.xlu0 0
        %2661 = vperm.xlu0 %2660, %v2607
        %v2662 = vpop.permute.xlu0 %2661
        %2665 = vset.pattern.permute.xlu0 0
        %2666 = vperm.xlu0 %2665, %v2608
        %v2667 = vpop.permute.xlu0 %2666
        %2670 = vset.pattern.permute.xlu0 0
        %2671 = vperm.xlu0 %2670, %v2609
        %v2672 = vpop.permute.xlu0 %2671
        %2675 = vset.pattern.permute.xlu0 0
        %2676 = vperm.xlu0 %2675, %v2610
        %v2677 = vpop.permute.xlu0 %2676
        %2680 = vset.pattern.permute.xlu0 0
        %2681 = vperm.xlu0 %2680, %v2611
        %v2682 = vpop.permute.xlu0 %2681
        %2685 = vset.pattern.permute.xlu0 0
        %2686 = vperm.xlu0 %2685, %v2612
        %v2687 = vpop.permute.xlu0 %2686
        %2690 = vset.pattern.permute.xlu0 0
        %2691 = vperm.xlu0 %2690, %v2613
        %v2692 = vpop.permute.xlu0 %2691
        %2695 = vset.pattern.permute.xlu0 0
        %2696 = vperm.xlu0 %2695, %v2614
        %v2697 = vpop.permute.xlu0 %2696
        %2700 = vset.pattern.permute.xlu0 0
        %2701 = vperm.xlu0 %2700, %v2615
        %v2702 = vpop.permute.xlu0 %2701
        %2705 = vset.pattern.permute.xlu0 0
        %2706 = vperm.xlu0 %2705, %v2616
        %v2707 = vpop.permute.xlu0 %2706
        %2710 = vset.pattern.permute.xlu0 0
        %2711 = vperm.xlu0 %2710, %v2617
        %v2712 = vpop.permute.xlu0 %2711
        %2715 = vset.pattern.permute.xlu0 0
        %2716 = vperm.xlu0 %2715, %v2618
        %v2717 = vpop.permute.xlu0 %2716
        %2720 = vset.pattern.permute.xlu0 0
        %2721 = vperm.xlu0 %2720, %v2619
        %v2722 = vpop.permute.xlu0 %2721
        %2725 = vset.pattern.permute.xlu0 0
        %2726 = vperm.xlu0 %2725, %v2620
        %v2727 = vpop.permute.xlu0 %2726
        %2730 = vset.pattern.permute.xlu0 0
        %2731 = vperm.xlu0 %2730, %v2621
        %v2732 = vpop.permute.xlu0 %2731
        %2735 = vset.pattern.permute.xlu0 0
        %2736 = vperm.xlu0 %2735, %v2622
        %v2737 = vpop.permute.xlu0 %2736
        %2740 = vset.pattern.permute.xlu0 0
        %2741 = vperm.xlu0 %2740, %v2623
        %v2742 = vpop.permute.xlu0 %2741
        %2745 = vset.pattern.permute.xlu0 0
        %2746 = vperm.xlu0 %2745, %v2624
        %v2747 = vpop.permute.xlu0 %2746
        %2750 = vset.pattern.permute.xlu0 0
        %2751 = vperm.xlu0 %2750, %v2625
        %v2752 = vpop.permute.xlu0 %2751
        %2755 = vset.pattern.permute.xlu0 0
        %2756 = vperm.xlu0 %2755, %v2626
        %v2757 = vpop.permute.xlu0 %2756
        %2760 = vset.pattern.permute.xlu0 0
        %2761 = vperm.xlu0 %2760, %v2627
        %v2762 = vpop.permute.xlu0 %2761
        %2765 = vset.pattern.permute.xlu0 0
        %2766 = vperm.xlu0 %2765, %v2628
        %v2767 = vpop.permute.xlu0 %2766
        %2770 = vset.pattern.permute.xlu0 0
        %2771 = vperm.xlu0 %2770, %v2629
        %v2772 = vpop.permute.xlu0 %2771
        %2775 = vset.pattern.permute.xlu0 0
        %2776 = vperm.xlu0 %2775, %v2630
        %v2777 = vpop.permute.xlu0 %2776
        %2780 = vset.pattern.permute.xlu0 0
        %2781 = vperm.xlu0 %2780, %v2631
        %v2782 = vpop.permute.xlu0 %2781
        %2785 = vset.pattern.permute.xlu0 0
        %2786 = vperm.xlu0 %2785, %v2632
        %v2787 = vpop.permute.xlu0 %2786
        %2790 = vset.pattern.permute.xlu0 0
        %2791 = vperm.xlu0 %2790, %v2633
        %v2792 = vpop.permute.xlu0 %2791
        %v2794 = vmul.f32 %v323, %v2637
        %v2795 = vmul.f32 %v324, %v2642
        %v2796 = vmul.f32 %v325, %v2647
        %v2797 = vmul.f32 %v326, %v2652
        %v2798 = vmul.f32 %v327, %v2657
        %v2799 = vmul.f32 %v328, %v2662
        %v2800 = vmul.f32 %v329, %v2667
        %v2801 = vmul.f32 %v330, %v2672
        %v2802 = vmul.f32 %v331, %v2677
        %v2803 = vmul.f32 %v332, %v2682
        %v2804 = vmul.f32 %v333, %v2687
        %v2805 = vmul.f32 %v334, %v2692
        %v2806 = vmul.f32 %v335, %v2697
        %v2807 = vmul.f32 %v336, %v2702
        %v2808 = vmul.f32 %v337, %v2707
        %v2809 = vmul.f32 %v338, %v2712
        %v2810 = vmul.f32 %v339, %v2717
        %v2811 = vmul.f32 %v340, %v2722
        %v2812 = vmul.f32 %v341, %v2727
        %v2813 = vmul.f32 %v342, %v2732
        %v2814 = vmul.f32 %v343, %v2737
        %v2815 = vmul.f32 %v344, %v2742
        %v2816 = vmul.f32 %v345, %v2747
        %v2817 = vmul.f32 %v346, %v2752
        %v2818 = vmul.f32 %v347, %v2757
        %v2819 = vmul.f32 %v348, %v2762
        %v2820 = vmul.f32 %v349, %v2767
        %v2821 = vmul.f32 %v350, %v2772
        %v2822 = vmul.f32 %v351, %v2777
        %v2823 = vmul.f32 %v352, %v2782
        %v2824 = vmul.f32 %v353, %v2787
        %v2825 = vmul.f32 %v354, %v2792
        %v2826 = vrot.slane %v2794, 1
        %v2827 = vrot.slane %v2795, 1
        %v2828 = vrot.slane %v2796, 1
        %v2829 = vrot.slane %v2797, 1
        %v2830 = vrot.slane %v2798, 1
        %v2831 = vrot.slane %v2799, 1
        %v2832 = vrot.slane %v2800, 1
        %v2833 = vrot.slane %v2801, 1
        %v2834 = vrot.slane %v2802, 1
        %v2835 = vrot.slane %v2803, 1
        %v2836 = vrot.slane %v2804, 1
        %v2837 = vrot.slane %v2805, 1
        %v2838 = vrot.slane %v2806, 1
        %v2839 = vrot.slane %v2807, 1
        %v2840 = vrot.slane %v2808, 1
        %v2841 = vrot.slane %v2809, 1
        %v2842 = vrot.slane %v2810, 1
        %v2843 = vrot.slane %v2811, 1
        %v2844 = vrot.slane %v2812, 1
        %v2845 = vrot.slane %v2813, 1
        %v2846 = vrot.slane %v2814, 1
        %v2847 = vrot.slane %v2815, 1
        %v2848 = vrot.slane %v2816, 1
        %v2849 = vrot.slane %v2817, 1
        %v2850 = vrot.slane %v2818, 1
        %v2851 = vrot.slane %v2819, 1
        %v2852 = vrot.slane %v2820, 1
        %v2853 = vrot.slane %v2821, 1
        %v2854 = vrot.slane %v2822, 1
        %v2855 = vrot.slane %v2823, 1
        %v2856 = vrot.slane %v2824, 1
        %v2857 = vrot.slane %v2825, 1
        %v2858 = vsel %vm1550, %v2856, %v2857
        %v2859 = vsel %vm1550, %v2855, %v2856
        %v2860 = vsel %vm1550, %v2854, %v2855
        %v2861 = vsel %vm1550, %v2853, %v2854
        %v2862 = vsel %vm1550, %v2852, %v2853
        %v2863 = vsel %vm1550, %v2851, %v2852
        %v2864 = vsel %vm1550, %v2850, %v2851
        %v2865 = vsel %vm1550, %v2849, %v2850
        %v2866 = vsel %vm1550, %v2848, %v2849
        %v2867 = vsel %vm1550, %v2847, %v2848
        %v2868 = vsel %vm1550, %v2846, %v2847
        %v2869 = vsel %vm1550, %v2845, %v2846
        %v2870 = vsel %vm1550, %v2844, %v2845
        %v2871 = vsel %vm1550, %v2843, %v2844
        %v2872 = vsel %vm1550, %v2842, %v2843
        %v2873 = vsel %vm1550, %v2841, %v2842
        %v2874 = vsel %vm1550, %v2840, %v2841
        %v2875 = vsel %vm1550, %v2839, %v2840
        %v2876 = vsel %vm1550, %v2838, %v2839
        %v2877 = vsel %vm1550, %v2837, %v2838
        %v2878 = vsel %vm1550, %v2836, %v2837
        %v2879 = vsel %vm1550, %v2835, %v2836
        %v2880 = vsel %vm1550, %v2834, %v2835
        %v2881 = vsel %vm1550, %v2833, %v2834
        %v2882 = vsel %vm1550, %v2832, %v2833
        %v2883 = vsel %vm1550, %v2831, %v2832
        %v2884 = vsel %vm1550, %v2830, %v2831
        %v2885 = vsel %vm1550, %v2829, %v2830
        %v2886 = vsel %vm1550, %v2828, %v2829
        %v2887 = vsel %vm1550, %v2827, %v2828
        %v2888 = vsel %vm1550, %v2826, %v2827
        %v2889 = vsel %vm1550, %v2857, %v2826
        %s2890 = scalar_lea.vmem %s2, 40
        %v2891 = vld [vmem:[%s2890] sm:$0xff]
        %v2893 = vsel %vm874, %v2888, 0
        %v2896 = vsel %vm874, %v2887, 0
        %v2899 = vsel %vm874, %v2886, 0
        %v2902 = vsel %vm874, %v2885, 0
        %v2905 = vsel %vm874, %v2884, 0
        %v2908 = vsel %vm874, %v2883, 0
        %v2911 = vsel %vm874, %v2882, 0
        %v2914 = vsel %vm874, %v2881, 0
        %v2917 = vsel %vm874, %v2880, 0
        %v2920 = vsel %vm874, %v2879, 0
        %v2923 = vsel %vm874, %v2878, 0
        %v2926 = vsel %vm874, %v2877, 0
        %v2929 = vsel %vm874, %v2876, 0
        %v2932 = vsel %vm874, %v2875, 0
        %v2935 = vsel %vm874, %v2874, 0
        %v2938 = vsel %vm874, %v2873, 0
        %v2941 = vsel %vm874, %v2872, 0
        %v2944 = vsel %vm874, %v2871, 0
        %v2947 = vsel %vm874, %v2870, 0
        %v2950 = vsel %vm874, %v2869, 0
        %v2953 = vsel %vm874, %v2868, 0
        %v2956 = vsel %vm874, %v2867, 0
        %v2959 = vsel %vm874, %v2866, 0
        %v2962 = vsel %vm874, %v2865, 0
        %v2965 = vsel %vm874, %v2864, 0
        %v2968 = vsel %vm874, %v2863, 0
        %v2971 = vsel %vm874, %v2862, 0
        %v2974 = vsel %vm874, %v2861, 0
        %v2977 = vsel %vm874, %v2860, 0
        %v2980 = vsel %vm874, %v2859, 0
        %v2983 = vsel %vm874, %v2858, 0
        %v2986 = vsel %vm874, %v2889, 0
        %2988 = vmatpush.msra.mxu0 0.0
        %2989 = vmatpush.msra.mxu0 0.0
        %2990 = vmatpush.msra.mxu0 0.0
        %2991 = vmatpush.msra.mxu0 0.0
        %2992 = vmatpush.msra.mxu0 0.0
        %2993 = vmatpush.msra.mxu0 0.0
        %2994 = vmatpush.msra.mxu0 0.0
        %2995 = vmatpush.msra.mxu0 0.0
        %2996 = vmatpush.msra.mxu0 0.0
        %2997 = vmatpush.msra.mxu0 0.0
        %2998 = vmatpush.msra.mxu0 0.0
        %2999 = vmatpush.msra.mxu0 0.0
        %3000 = vmatpush.msra.mxu0 0.0
        %3001 = vmatpush.msra.mxu0 0.0
        %3002 = vmatpush.msra.mxu0 0.0
        %3003 = vmatpush.msra.mxu0 %v2891
        %3004 = vmatmul.f32.gmra.mxu0 %v2893
        %v3005 = vpop.f32.mrf.mxu0
        %v3006 = vadd.f32 0.0, %v3005
        %3007 = vmatmul.f32.gmra.mxu0 %v2896
        %v3008 = vpop.f32.mrf.mxu0
        %v3009 = vadd.f32 0.0, %v3008
        %3010 = vmatmul.f32.gmra.mxu0 %v2899
        %v3011 = vpop.f32.mrf.mxu0
        %v3012 = vadd.f32 0.0, %v3011
        %3013 = vmatmul.f32.gmra.mxu0 %v2902
        %v3014 = vpop.f32.mrf.mxu0
        %v3015 = vadd.f32 0.0, %v3014
        %3016 = vmatmul.f32.gmra.mxu0 %v2905
        %v3017 = vpop.f32.mrf.mxu0
        %v3018 = vadd.f32 0.0, %v3017
        %3019 = vmatmul.f32.gmra.mxu0 %v2908
        %v3020 = vpop.f32.mrf.mxu0
        %v3021 = vadd.f32 0.0, %v3020
        %3022 = vmatmul.f32.gmra.mxu0 %v2911
        %v3023 = vpop.f32.mrf.mxu0
        %v3024 = vadd.f32 0.0, %v3023
        %3025 = vmatmul.f32.gmra.mxu0 %v2914
        %v3026 = vpop.f32.mrf.mxu0
        %v3027 = vadd.f32 0.0, %v3026
        %3028 = vmatmul.f32.gmra.mxu0 %v2917
        %v3029 = vpop.f32.mrf.mxu0
        %v3030 = vadd.f32 0.0, %v3029
        %3031 = vmatmul.f32.gmra.mxu0 %v2920
        %v3032 = vpop.f32.mrf.mxu0
        %v3033 = vadd.f32 0.0, %v3032
        %3034 = vmatmul.f32.gmra.mxu0 %v2923
        %v3035 = vpop.f32.mrf.mxu0
        %v3036 = vadd.f32 0.0, %v3035
        %3037 = vmatmul.f32.gmra.mxu0 %v2926
        %v3038 = vpop.f32.mrf.mxu0
        %v3039 = vadd.f32 0.0, %v3038
        %3040 = vmatmul.f32.gmra.mxu0 %v2929
        %v3041 = vpop.f32.mrf.mxu0
        %v3042 = vadd.f32 0.0, %v3041
        %3043 = vmatmul.f32.gmra.mxu0 %v2932
        %v3044 = vpop.f32.mrf.mxu0
        %v3045 = vadd.f32 0.0, %v3044
        %3046 = vmatmul.f32.gmra.mxu0 %v2935
        %v3047 = vpop.f32.mrf.mxu0
        %v3048 = vadd.f32 0.0, %v3047
        %3049 = vmatmul.f32.gmra.mxu0 %v2938
        %v3050 = vpop.f32.mrf.mxu0
        %v3051 = vadd.f32 0.0, %v3050
        %3052 = vmatmul.f32.gmra.mxu0 %v2941
        %v3053 = vpop.f32.mrf.mxu0
        %v3054 = vadd.f32 0.0, %v3053
        %3055 = vmatmul.f32.gmra.mxu0 %v2944
        %v3056 = vpop.f32.mrf.mxu0
        %v3057 = vadd.f32 0.0, %v3056
        %3058 = vmatmul.f32.gmra.mxu0 %v2947
        %v3059 = vpop.f32.mrf.mxu0
        %v3060 = vadd.f32 0.0, %v3059
        %3061 = vmatmul.f32.gmra.mxu0 %v2950
        %v3062 = vpop.f32.mrf.mxu0
        %v3063 = vadd.f32 0.0, %v3062
        %3064 = vmatmul.f32.gmra.mxu0 %v2953
        %v3065 = vpop.f32.mrf.mxu0
        %v3066 = vadd.f32 0.0, %v3065
        %3067 = vmatmul.f32.gmra.mxu0 %v2956
        %v3068 = vpop.f32.mrf.mxu0
        %v3069 = vadd.f32 0.0, %v3068
        %3070 = vmatmul.f32.gmra.mxu0 %v2959
        %v3071 = vpop.f32.mrf.mxu0
        %v3072 = vadd.f32 0.0, %v3071
        %3073 = vmatmul.f32.gmra.mxu0 %v2962
        %v3074 = vpop.f32.mrf.mxu0
        %v3075 = vadd.f32 0.0, %v3074
        %3076 = vmatmul.f32.gmra.mxu0 %v2965
        %v3077 = vpop.f32.mrf.mxu0
        %v3078 = vadd.f32 0.0, %v3077
        %3079 = vmatmul.f32.gmra.mxu0 %v2968
        %v3080 = vpop.f32.mrf.mxu0
        %v3081 = vadd.f32 0.0, %v3080
        %3082 = vmatmul.f32.gmra.mxu0 %v2971
        %v3083 = vpop.f32.mrf.mxu0
        %v3084 = vadd.f32 0.0, %v3083
        %3085 = vmatmul.f32.gmra.mxu0 %v2974
        %v3086 = vpop.f32.mrf.mxu0
        %v3087 = vadd.f32 0.0, %v3086
        %3088 = vmatmul.f32.gmra.mxu0 %v2977
        %v3089 = vpop.f32.mrf.mxu0
        %v3090 = vadd.f32 0.0, %v3089
        %3091 = vmatmul.f32.gmra.mxu0 %v2980
        %v3092 = vpop.f32.mrf.mxu0
        %v3093 = vadd.f32 0.0, %v3092
        %3094 = vmatmul.f32.gmra.mxu0 %v2983
        %v3095 = vpop.f32.mrf.mxu0
        %v3096 = vadd.f32 0.0, %v3095
        %3097 = vmatmul.f32.gmra.mxu0 %v2986
        %v3098 = vpop.f32.mrf.mxu0
        %v3099 = vadd.f32 0.0, %v3098
        %3100 = vdwg.mxu0
        %v3101 = vadd.f32 %v2569, %v3006
        %v3102 = vadd.f32 %v2570, %v3009
        %v3103 = vadd.f32 %v2571, %v3012
        %v3104 = vadd.f32 %v2572, %v3015
        %v3105 = vadd.f32 %v2573, %v3018
        %v3106 = vadd.f32 %v2574, %v3021
        %v3107 = vadd.f32 %v2575, %v3024
        %v3108 = vadd.f32 %v2576, %v3027
        %v3109 = vadd.f32 %v2577, %v3030
        %v3110 = vadd.f32 %v2578, %v3033
        %v3111 = vadd.f32 %v2579, %v3036
        %v3112 = vadd.f32 %v2580, %v3039
        %v3113 = vadd.f32 %v2581, %v3042
        %v3114 = vadd.f32 %v2582, %v3045
        %v3115 = vadd.f32 %v2583, %v3048
        %v3116 = vadd.f32 %v2584, %v3051
        %v3117 = vadd.f32 %v2585, %v3054
        %v3118 = vadd.f32 %v2586, %v3057
        %v3119 = vadd.f32 %v2587, %v3060
        %v3120 = vadd.f32 %v2588, %v3063
        %v3121 = vadd.f32 %v2589, %v3066
        %v3122 = vadd.f32 %v2590, %v3069
        %v3123 = vadd.f32 %v2591, %v3072
        %v3124 = vadd.f32 %v2592, %v3075
        %v3125 = vadd.f32 %v2593, %v3078
        %v3126 = vadd.f32 %v2594, %v3081
        %v3127 = vadd.f32 %v2595, %v3084
        %v3128 = vadd.f32 %v2596, %v3087
        %v3129 = vadd.f32 %v2597, %v3090
        %v3130 = vadd.f32 %v2598, %v3093
        %v3131 = vadd.f32 %v2599, %v3096
        %v3132 = vadd.f32 %v2600, %v3099
        %s3133 = scalar_lea.vmem [#allocation2], 1280
        %v3134 = vld [vmem:[%s3133] sm:$0xff]
        %v3135 = vld [vmem:[%s3133 + $0x8] sm:$0xff]
        %v3136 = vld [vmem:[%s3133 + $0x10] sm:$0xff]
        %v3137 = vld [vmem:[%s3133 + $0x18] sm:$0xff]
        %v3138 = vld [vmem:[%s3133 + $0x20] sm:$0xff]
        %v3139 = vld [vmem:[%s3133 + $0x28] sm:$0xff]
        %v3140 = vld [vmem:[%s3133 + $0x30] sm:$0xff]
        %v3141 = vld [vmem:[%s3133 + $0x38] sm:$0xff]
        %v3142 = vld [vmem:[%s3133 + $0x40] sm:$0xff]
        %v3143 = vld [vmem:[%s3133 + $0x48] sm:$0xff]
        %v3144 = vld [vmem:[%s3133 + $0x50] sm:$0xff]
        %v3145 = vld [vmem:[%s3133 + $0x58] sm:$0xff]
        %v3146 = vld [vmem:[%s3133 + $0x60] sm:$0xff]
        %v3147 = vld [vmem:[%s3133 + $0x68] sm:$0xff]
        %v3148 = vld [vmem:[%s3133 + $0x70] sm:$0xff]
        %v3149 = vld [vmem:[%s3133 + $0x78] sm:$0xff]
        %v3150 = vld [vmem:[%s3133 + $0x80] sm:$0xff]
        %v3151 = vld [vmem:[%s3133 + $0x88] sm:$0xff]
        %v3152 = vld [vmem:[%s3133 + $0x90] sm:$0xff]
        %v3153 = vld [vmem:[%s3133 + $0x98] sm:$0xff]
        %v3154 = vld [vmem:[%s3133 + $0xa0] sm:$0xff]
        %v3155 = vld [vmem:[%s3133 + $0xa8] sm:$0xff]
        %v3156 = vld [vmem:[%s3133 + $0xb0] sm:$0xff]
        %v3157 = vld [vmem:[%s3133 + $0xb8] sm:$0xff]
        %v3158 = vld [vmem:[%s3133 + $0xc0] sm:$0xff]
        %v3159 = vld [vmem:[%s3133 + $0xc8] sm:$0xff]
        %v3160 = vld [vmem:[%s3133 + $0xd0] sm:$0xff]
        %v3161 = vld [vmem:[%s3133 + $0xd8] sm:$0xff]
        %v3162 = vld [vmem:[%s3133 + $0xe0] sm:$0xff]
        %v3163 = vld [vmem:[%s3133 + $0xe8] sm:$0xff]
        %v3164 = vld [vmem:[%s3133 + $0xf0] sm:$0xff]
        %v3165 = vld [vmem:[%s3133 + $0xf8] sm:$0xff]
        %3167 = vset.pattern.permute.xlu0 0
        %3168 = vperm.xlu0 %3167, %v3134
        %v3169 = vpop.permute.xlu0 %3168
        %3172 = vset.pattern.permute.xlu0 0
        %3173 = vperm.xlu0 %3172, %v3135
        %v3174 = vpop.permute.xlu0 %3173
        %3177 = vset.pattern.permute.xlu0 0
        %3178 = vperm.xlu0 %3177, %v3136
        %v3179 = vpop.permute.xlu0 %3178
        %3182 = vset.pattern.permute.xlu0 0
        %3183 = vperm.xlu0 %3182, %v3137
        %v3184 = vpop.permute.xlu0 %3183
        %3187 = vset.pattern.permute.xlu0 0
        %3188 = vperm.xlu0 %3187, %v3138
        %v3189 = vpop.permute.xlu0 %3188
        %3192 = vset.pattern.permute.xlu0 0
        %3193 = vperm.xlu0 %3192, %v3139
        %v3194 = vpop.permute.xlu0 %3193
        %3197 = vset.pattern.permute.xlu0 0
        %3198 = vperm.xlu0 %3197, %v3140
        %v3199 = vpop.permute.xlu0 %3198
        %3202 = vset.pattern.permute.xlu0 0
        %3203 = vperm.xlu0 %3202, %v3141
        %v3204 = vpop.permute.xlu0 %3203
        %3207 = vset.pattern.permute.xlu0 0
        %3208 = vperm.xlu0 %3207, %v3142
        %v3209 = vpop.permute.xlu0 %3208
        %3212 = vset.pattern.permute.xlu0 0
        %3213 = vperm.xlu0 %3212, %v3143
        %v3214 = vpop.permute.xlu0 %3213
        %3217 = vset.pattern.permute.xlu0 0
        %3218 = vperm.xlu0 %3217, %v3144
        %v3219 = vpop.permute.xlu0 %3218
        %3222 = vset.pattern.permute.xlu0 0
        %3223 = vperm.xlu0 %3222, %v3145
        %v3224 = vpop.permute.xlu0 %3223
        %3227 = vset.pattern.permute.xlu0 0
        %3228 = vperm.xlu0 %3227, %v3146
        %v3229 = vpop.permute.xlu0 %3228
        %3232 = vset.pattern.permute.xlu0 0
        %3233 = vperm.xlu0 %3232, %v3147
        %v3234 = vpop.permute.xlu0 %3233
        %3237 = vset.pattern.permute.xlu0 0
        %3238 = vperm.xlu0 %3237, %v3148
        %v3239 = vpop.permute.xlu0 %3238
        %3242 = vset.pattern.permute.xlu0 0
        %3243 = vperm.xlu0 %3242, %v3149
        %v3244 = vpop.permute.xlu0 %3243
        %3247 = vset.pattern.permute.xlu0 0
        %3248 = vperm.xlu0 %3247, %v3150
        %v3249 = vpop.permute.xlu0 %3248
        %3252 = vset.pattern.permute.xlu0 0
        %3253 = vperm.xlu0 %3252, %v3151
        %v3254 = vpop.permute.xlu0 %3253
        %3257 = vset.pattern.permute.xlu0 0
        %3258 = vperm.xlu0 %3257, %v3152
        %v3259 = vpop.permute.xlu0 %3258
        %3262 = vset.pattern.permute.xlu0 0
        %3263 = vperm.xlu0 %3262, %v3153
        %v3264 = vpop.permute.xlu0 %3263
        %3267 = vset.pattern.permute.xlu0 0
        %3268 = vperm.xlu0 %3267, %v3154
        %v3269 = vpop.permute.xlu0 %3268
        %3272 = vset.pattern.permute.xlu0 0
        %3273 = vperm.xlu0 %3272, %v3155
        %v3274 = vpop.permute.xlu0 %3273
        %3277 = vset.pattern.permute.xlu0 0
        %3278 = vperm.xlu0 %3277, %v3156
        %v3279 = vpop.permute.xlu0 %3278
        %3282 = vset.pattern.permute.xlu0 0
        %3283 = vperm.xlu0 %3282, %v3157
        %v3284 = vpop.permute.xlu0 %3283
        %3287 = vset.pattern.permute.xlu0 0
        %3288 = vperm.xlu0 %3287, %v3158
        %v3289 = vpop.permute.xlu0 %3288
        %3292 = vset.pattern.permute.xlu0 0
        %3293 = vperm.xlu0 %3292, %v3159
        %v3294 = vpop.permute.xlu0 %3293
        %3297 = vset.pattern.permute.xlu0 0
        %3298 = vperm.xlu0 %3297, %v3160
        %v3299 = vpop.permute.xlu0 %3298
        %3302 = vset.pattern.permute.xlu0 0
        %3303 = vperm.xlu0 %3302, %v3161
        %v3304 = vpop.permute.xlu0 %3303
        %3307 = vset.pattern.permute.xlu0 0
        %3308 = vperm.xlu0 %3307, %v3162
        %v3309 = vpop.permute.xlu0 %3308
        %3312 = vset.pattern.permute.xlu0 0
        %3313 = vperm.xlu0 %3312, %v3163
        %v3314 = vpop.permute.xlu0 %3313
        %3317 = vset.pattern.permute.xlu0 0
        %3318 = vperm.xlu0 %3317, %v3164
        %v3319 = vpop.permute.xlu0 %3318
        %3322 = vset.pattern.permute.xlu0 0
        %3323 = vperm.xlu0 %3322, %v3165
        %v3324 = vpop.permute.xlu0 %3323
        %v3326 = vmul.f32 %v323, %v3169
        %v3327 = vmul.f32 %v324, %v3174
        %v3328 = vmul.f32 %v325, %v3179
        %v3329 = vmul.f32 %v326, %v3184
        %v3330 = vmul.f32 %v327, %v3189
        %v3331 = vmul.f32 %v328, %v3194
        %v3332 = vmul.f32 %v329, %v3199
        %v3333 = vmul.f32 %v330, %v3204
        %v3334 = vmul.f32 %v331, %v3209
        %v3335 = vmul.f32 %v332, %v3214
        %v3336 = vmul.f32 %v333, %v3219
        %v3337 = vmul.f32 %v334, %v3224
        %v3338 = vmul.f32 %v335, %v3229
        %v3339 = vmul.f32 %v336, %v3234
        %v3340 = vmul.f32 %v337, %v3239
        %v3341 = vmul.f32 %v338, %v3244
        %v3342 = vmul.f32 %v339, %v3249
        %v3343 = vmul.f32 %v340, %v3254
        %v3344 = vmul.f32 %v341, %v3259
        %v3345 = vmul.f32 %v342, %v3264
        %v3346 = vmul.f32 %v343, %v3269
        %v3347 = vmul.f32 %v344, %v3274
        %v3348 = vmul.f32 %v345, %v3279
        %v3349 = vmul.f32 %v346, %v3284
        %v3350 = vmul.f32 %v347, %v3289
        %v3351 = vmul.f32 %v348, %v3294
        %v3352 = vmul.f32 %v349, %v3299
        %v3353 = vmul.f32 %v350, %v3304
        %v3354 = vmul.f32 %v351, %v3309
        %v3355 = vmul.f32 %v352, %v3314
        %v3356 = vmul.f32 %v353, %v3319
        %v3357 = vmul.f32 %v354, %v3324
        %v3358 = vrot.slane %v3326, 7
        %v3359 = vrot.slane %v3327, 7
        %v3360 = vrot.slane %v3328, 7
        %v3361 = vrot.slane %v3329, 7
        %v3362 = vrot.slane %v3330, 7
        %v3363 = vrot.slane %v3331, 7
        %v3364 = vrot.slane %v3332, 7
        %v3365 = vrot.slane %v3333, 7
        %v3366 = vrot.slane %v3334, 7
        %v3367 = vrot.slane %v3335, 7
        %v3368 = vrot.slane %v3336, 7
        %v3369 = vrot.slane %v3337, 7
        %v3370 = vrot.slane %v3338, 7
        %v3371 = vrot.slane %v3339, 7
        %v3372 = vrot.slane %v3340, 7
        %v3373 = vrot.slane %v3341, 7
        %v3374 = vrot.slane %v3342, 7
        %v3375 = vrot.slane %v3343, 7
        %v3376 = vrot.slane %v3344, 7
        %v3377 = vrot.slane %v3345, 7
        %v3378 = vrot.slane %v3346, 7
        %v3379 = vrot.slane %v3347, 7
        %v3380 = vrot.slane %v3348, 7
        %v3381 = vrot.slane %v3349, 7
        %v3382 = vrot.slane %v3350, 7
        %v3383 = vrot.slane %v3351, 7
        %v3384 = vrot.slane %v3352, 7
        %v3385 = vrot.slane %v3353, 7
        %v3386 = vrot.slane %v3354, 7
        %v3387 = vrot.slane %v3355, 7
        %v3388 = vrot.slane %v3356, 7
        %v3389 = vrot.slane %v3357, 7
        %v3390 = vsel %vm613, %v3388, %v3389
        %v3391 = vsel %vm613, %v3387, %v3388
        %v3392 = vsel %vm613, %v3386, %v3387
        %v3393 = vsel %vm613, %v3385, %v3386
        %v3394 = vsel %vm613, %v3384, %v3385
        %v3395 = vsel %vm613, %v3383, %v3384
        %v3396 = vsel %vm613, %v3382, %v3383
        %v3397 = vsel %vm613, %v3381, %v3382
        %v3398 = vsel %vm613, %v3380, %v3381
        %v3399 = vsel %vm613, %v3379, %v3380
        %v3400 = vsel %vm613, %v3378, %v3379
        %v3401 = vsel %vm613, %v3377, %v3378
        %v3402 = vsel %vm613, %v3376, %v3377
        %v3403 = vsel %vm613, %v3375, %v3376
        %v3404 = vsel %vm613, %v3374, %v3375
        %v3405 = vsel %vm613, %v3373, %v3374
        %v3406 = vsel %vm613, %v3372, %v3373
        %v3407 = vsel %vm613, %v3371, %v3372
        %v3408 = vsel %vm613, %v3370, %v3371
        %v3409 = vsel %vm613, %v3369, %v3370
        %v3410 = vsel %vm613, %v3368, %v3369
        %v3411 = vsel %vm613, %v3367, %v3368
        %v3412 = vsel %vm613, %v3366, %v3367
        %v3413 = vsel %vm613, %v3365, %v3366
        %v3414 = vsel %vm613, %v3364, %v3365
        %v3415 = vsel %vm613, %v3363, %v3364
        %v3416 = vsel %vm613, %v3362, %v3363
        %v3417 = vsel %vm613, %v3361, %v3362
        %v3418 = vsel %vm613, %v3360, %v3361
        %v3419 = vsel %vm613, %v3359, %v3360
        %v3420 = vsel %vm613, %v3358, %v3359
        %v3421 = vsel %vm613, %v3389, %v3358
        %s3422 = scalar_lea.vmem %s2, 48
        %v3423 = vld [vmem:[%s3422] sm:$0xff]
        %v3425 = vsel %vm874, %v3419, 0
        %v3428 = vsel %vm874, %v3418, 0
        %v3431 = vsel %vm874, %v3417, 0
        %v3434 = vsel %vm874, %v3416, 0
        %v3437 = vsel %vm874, %v3415, 0
        %v3440 = vsel %vm874, %v3414, 0
        %v3443 = vsel %vm874, %v3413, 0
        %v3446 = vsel %vm874, %v3412, 0
        %v3449 = vsel %vm874, %v3411, 0
        %v3452 = vsel %vm874, %v3410, 0
        %v3455 = vsel %vm874, %v3409, 0
        %v3458 = vsel %vm874, %v3408, 0
        %v3461 = vsel %vm874, %v3407, 0
        %v3464 = vsel %vm874, %v3406, 0
        %v3467 = vsel %vm874, %v3405, 0
        %v3470 = vsel %vm874, %v3404, 0
        %v3473 = vsel %vm874, %v3403, 0
        %v3476 = vsel %vm874, %v3402, 0
        %v3479 = vsel %vm874, %v3401, 0
        %v3482 = vsel %vm874, %v3400, 0
        %v3485 = vsel %vm874, %v3399, 0
        %v3488 = vsel %vm874, %v3398, 0
        %v3491 = vsel %vm874, %v3397, 0
        %v3494 = vsel %vm874, %v3396, 0
        %v3497 = vsel %vm874, %v3395, 0
        %v3500 = vsel %vm874, %v3394, 0
        %v3503 = vsel %vm874, %v3393, 0
        %v3506 = vsel %vm874, %v3392, 0
        %v3509 = vsel %vm874, %v3391, 0
        %v3512 = vsel %vm874, %v3390, 0
        %v3515 = vsel %vm874, %v3421, 0
        %v3518 = vsel %vm874, %v3420, 0
        %3520 = vmatpush.msra.mxu0 0.0
        %3521 = vmatpush.msra.mxu0 0.0
        %3522 = vmatpush.msra.mxu0 0.0
        %3523 = vmatpush.msra.mxu0 0.0
        %3524 = vmatpush.msra.mxu0 0.0
        %3525 = vmatpush.msra.mxu0 0.0
        %3526 = vmatpush.msra.mxu0 0.0
        %3527 = vmatpush.msra.mxu0 0.0
        %3528 = vmatpush.msra.mxu0 0.0
        %3529 = vmatpush.msra.mxu0 0.0
        %3530 = vmatpush.msra.mxu0 0.0
        %3531 = vmatpush.msra.mxu0 0.0
        %3532 = vmatpush.msra.mxu0 0.0
        %3533 = vmatpush.msra.mxu0 0.0
        %3534 = vmatpush.msra.mxu0 0.0
        %3535 = vmatpush.msra.mxu0 %v3423
        %3536 = vmatmul.f32.gmra.mxu0 %v3425
        %v3537 = vpop.f32.mrf.mxu0
        %v3538 = vadd.f32 0.0, %v3537
        %3539 = vmatmul.f32.gmra.mxu0 %v3428
        %v3540 = vpop.f32.mrf.mxu0
        %v3541 = vadd.f32 0.0, %v3540
        %3542 = vmatmul.f32.gmra.mxu0 %v3431
        %v3543 = vpop.f32.mrf.mxu0
        %v3544 = vadd.f32 0.0, %v3543
        %3545 = vmatmul.f32.gmra.mxu0 %v3434
        %v3546 = vpop.f32.mrf.mxu0
        %v3547 = vadd.f32 0.0, %v3546
        %3548 = vmatmul.f32.gmra.mxu0 %v3437
        %v3549 = vpop.f32.mrf.mxu0
        %v3550 = vadd.f32 0.0, %v3549
        %3551 = vmatmul.f32.gmra.mxu0 %v3440
        %v3552 = vpop.f32.mrf.mxu0
        %v3553 = vadd.f32 0.0, %v3552
        %3554 = vmatmul.f32.gmra.mxu0 %v3443
        %v3555 = vpop.f32.mrf.mxu0
        %v3556 = vadd.f32 0.0, %v3555
        %3557 = vmatmul.f32.gmra.mxu0 %v3446
        %v3558 = vpop.f32.mrf.mxu0
        %v3559 = vadd.f32 0.0, %v3558
        %3560 = vmatmul.f32.gmra.mxu0 %v3449
        %v3561 = vpop.f32.mrf.mxu0
        %v3562 = vadd.f32 0.0, %v3561
        %3563 = vmatmul.f32.gmra.mxu0 %v3452
        %v3564 = vpop.f32.mrf.mxu0
        %v3565 = vadd.f32 0.0, %v3564
        %3566 = vmatmul.f32.gmra.mxu0 %v3455
        %v3567 = vpop.f32.mrf.mxu0
        %v3568 = vadd.f32 0.0, %v3567
        %3569 = vmatmul.f32.gmra.mxu0 %v3458
        %v3570 = vpop.f32.mrf.mxu0
        %v3571 = vadd.f32 0.0, %v3570
        %3572 = vmatmul.f32.gmra.mxu0 %v3461
        %v3573 = vpop.f32.mrf.mxu0
        %v3574 = vadd.f32 0.0, %v3573
        %3575 = vmatmul.f32.gmra.mxu0 %v3464
        %v3576 = vpop.f32.mrf.mxu0
        %v3577 = vadd.f32 0.0, %v3576
        %3578 = vmatmul.f32.gmra.mxu0 %v3467
        %v3579 = vpop.f32.mrf.mxu0
        %v3580 = vadd.f32 0.0, %v3579
        %3581 = vmatmul.f32.gmra.mxu0 %v3470
        %v3582 = vpop.f32.mrf.mxu0
        %v3583 = vadd.f32 0.0, %v3582
        %3584 = vmatmul.f32.gmra.mxu0 %v3473
        %v3585 = vpop.f32.mrf.mxu0
        %v3586 = vadd.f32 0.0, %v3585
        %3587 = vmatmul.f32.gmra.mxu0 %v3476
        %v3588 = vpop.f32.mrf.mxu0
        %v3589 = vadd.f32 0.0, %v3588
        %3590 = vmatmul.f32.gmra.mxu0 %v3479
        %v3591 = vpop.f32.mrf.mxu0
        %v3592 = vadd.f32 0.0, %v3591
        %3593 = vmatmul.f32.gmra.mxu0 %v3482
        %v3594 = vpop.f32.mrf.mxu0
        %v3595 = vadd.f32 0.0, %v3594
        %3596 = vmatmul.f32.gmra.mxu0 %v3485
        %v3597 = vpop.f32.mrf.mxu0
        %v3598 = vadd.f32 0.0, %v3597
        %3599 = vmatmul.f32.gmra.mxu0 %v3488
        %v3600 = vpop.f32.mrf.mxu0
        %v3601 = vadd.f32 0.0, %v3600
        %3602 = vmatmul.f32.gmra.mxu0 %v3491
        %v3603 = vpop.f32.mrf.mxu0
        %v3604 = vadd.f32 0.0, %v3603
        %3605 = vmatmul.f32.gmra.mxu0 %v3494
        %v3606 = vpop.f32.mrf.mxu0
        %v3607 = vadd.f32 0.0, %v3606
        %3608 = vmatmul.f32.gmra.mxu0 %v3497
        %v3609 = vpop.f32.mrf.mxu0
        %v3610 = vadd.f32 0.0, %v3609
        %3611 = vmatmul.f32.gmra.mxu0 %v3500
        %v3612 = vpop.f32.mrf.mxu0
        %v3613 = vadd.f32 0.0, %v3612
        %3614 = vmatmul.f32.gmra.mxu0 %v3503
        %v3615 = vpop.f32.mrf.mxu0
        %v3616 = vadd.f32 0.0, %v3615
        %3617 = vmatmul.f32.gmra.mxu0 %v3506
        %v3618 = vpop.f32.mrf.mxu0
        %v3619 = vadd.f32 0.0, %v3618
        %3620 = vmatmul.f32.gmra.mxu0 %v3509
        %v3621 = vpop.f32.mrf.mxu0
        %v3622 = vadd.f32 0.0, %v3621
        %3623 = vmatmul.f32.gmra.mxu0 %v3512
        %v3624 = vpop.f32.mrf.mxu0
        %v3625 = vadd.f32 0.0, %v3624
        %3626 = vmatmul.f32.gmra.mxu0 %v3515
        %v3627 = vpop.f32.mrf.mxu0
        %v3628 = vadd.f32 0.0, %v3627
        %3629 = vmatmul.f32.gmra.mxu0 %v3518
        %v3630 = vpop.f32.mrf.mxu0
        %v3631 = vadd.f32 0.0, %v3630
        %3632 = vdwg.mxu0
        %v3633 = vadd.f32 %v3101, %v3538
        %v3634 = vadd.f32 %v3102, %v3541
        %v3635 = vadd.f32 %v3103, %v3544
        %v3636 = vadd.f32 %v3104, %v3547
        %v3637 = vadd.f32 %v3105, %v3550
        %v3638 = vadd.f32 %v3106, %v3553
        %v3639 = vadd.f32 %v3107, %v3556
        %v3640 = vadd.f32 %v3108, %v3559
        %v3641 = vadd.f32 %v3109, %v3562
        %v3642 = vadd.f32 %v3110, %v3565
        %v3643 = vadd.f32 %v3111, %v3568
        %v3644 = vadd.f32 %v3112, %v3571
        %v3645 = vadd.f32 %v3113, %v3574
        %v3646 = vadd.f32 %v3114, %v3577
        %v3647 = vadd.f32 %v3115, %v3580
        %v3648 = vadd.f32 %v3116, %v3583
        %v3649 = vadd.f32 %v3117, %v3586
        %v3650 = vadd.f32 %v3118, %v3589
        %v3651 = vadd.f32 %v3119, %v3592
        %v3652 = vadd.f32 %v3120, %v3595
        %v3653 = vadd.f32 %v3121, %v3598
        %v3654 = vadd.f32 %v3122, %v3601
        %v3655 = vadd.f32 %v3123, %v3604
        %v3656 = vadd.f32 %v3124, %v3607
        %v3657 = vadd.f32 %v3125, %v3610
        %v3658 = vadd.f32 %v3126, %v3613
        %v3659 = vadd.f32 %v3127, %v3616
        %v3660 = vadd.f32 %v3128, %v3619
        %v3661 = vadd.f32 %v3129, %v3622
        %v3662 = vadd.f32 %v3130, %v3625
        %v3663 = vadd.f32 %v3131, %v3628
        %v3664 = vadd.f32 %v3132, %v3631
        %s3665 = scalar_lea.vmem [#allocation2], 1536
        %v3666 = vld [vmem:[%s3665] sm:$0xff]
        %v3667 = vld [vmem:[%s3665 + $0x8] sm:$0xff]
        %v3668 = vld [vmem:[%s3665 + $0x10] sm:$0xff]
        %v3669 = vld [vmem:[%s3665 + $0x18] sm:$0xff]
        %v3670 = vld [vmem:[%s3665 + $0x20] sm:$0xff]
        %v3671 = vld [vmem:[%s3665 + $0x28] sm:$0xff]
        %v3672 = vld [vmem:[%s3665 + $0x30] sm:$0xff]
        %v3673 = vld [vmem:[%s3665 + $0x38] sm:$0xff]
        %v3674 = vld [vmem:[%s3665 + $0x40] sm:$0xff]
        %v3675 = vld [vmem:[%s3665 + $0x48] sm:$0xff]
        %v3676 = vld [vmem:[%s3665 + $0x50] sm:$0xff]
        %v3677 = vld [vmem:[%s3665 + $0x58] sm:$0xff]
        %v3678 = vld [vmem:[%s3665 + $0x60] sm:$0xff]
        %v3679 = vld [vmem:[%s3665 + $0x68] sm:$0xff]
        %v3680 = vld [vmem:[%s3665 + $0x70] sm:$0xff]
        %v3681 = vld [vmem:[%s3665 + $0x78] sm:$0xff]
        %v3682 = vld [vmem:[%s3665 + $0x80] sm:$0xff]
        %v3683 = vld [vmem:[%s3665 + $0x88] sm:$0xff]
        %v3684 = vld [vmem:[%s3665 + $0x90] sm:$0xff]
        %v3685 = vld [vmem:[%s3665 + $0x98] sm:$0xff]
        %v3686 = vld [vmem:[%s3665 + $0xa0] sm:$0xff]
        %v3687 = vld [vmem:[%s3665 + $0xa8] sm:$0xff]
        %v3688 = vld [vmem:[%s3665 + $0xb0] sm:$0xff]
        %v3689 = vld [vmem:[%s3665 + $0xb8] sm:$0xff]
        %v3690 = vld [vmem:[%s3665 + $0xc0] sm:$0xff]
        %v3691 = vld [vmem:[%s3665 + $0xc8] sm:$0xff]
        %v3692 = vld [vmem:[%s3665 + $0xd0] sm:$0xff]
        %v3693 = vld [vmem:[%s3665 + $0xd8] sm:$0xff]
        %v3694 = vld [vmem:[%s3665 + $0xe0] sm:$0xff]
        %v3695 = vld [vmem:[%s3665 + $0xe8] sm:$0xff]
        %v3696 = vld [vmem:[%s3665 + $0xf0] sm:$0xff]
        %v3697 = vld [vmem:[%s3665 + $0xf8] sm:$0xff]
        %3699 = vset.pattern.permute.xlu0 0
        %3700 = vperm.xlu0 %3699, %v3666
        %v3701 = vpop.permute.xlu0 %3700
        %3704 = vset.pattern.permute.xlu0 0
        %3705 = vperm.xlu0 %3704, %v3667
        %v3706 = vpop.permute.xlu0 %3705
        %3709 = vset.pattern.permute.xlu0 0
        %3710 = vperm.xlu0 %3709, %v3668
        %v3711 = vpop.permute.xlu0 %3710
        %3714 = vset.pattern.permute.xlu0 0
        %3715 = vperm.xlu0 %3714, %v3669
        %v3716 = vpop.permute.xlu0 %3715
        %3719 = vset.pattern.permute.xlu0 0
        %3720 = vperm.xlu0 %3719, %v3670
        %v3721 = vpop.permute.xlu0 %3720
        %3724 = vset.pattern.permute.xlu0 0
        %3725 = vperm.xlu0 %3724, %v3671
        %v3726 = vpop.permute.xlu0 %3725
        %3729 = vset.pattern.permute.xlu0 0
        %3730 = vperm.xlu0 %3729, %v3672
        %v3731 = vpop.permute.xlu0 %3730
        %3734 = vset.pattern.permute.xlu0 0
        %3735 = vperm.xlu0 %3734, %v3673
        %v3736 = vpop.permute.xlu0 %3735
        %3739 = vset.pattern.permute.xlu0 0
        %3740 = vperm.xlu0 %3739, %v3674
        %v3741 = vpop.permute.xlu0 %3740
        %3744 = vset.pattern.permute.xlu0 0
        %3745 = vperm.xlu0 %3744, %v3675
        %v3746 = vpop.permute.xlu0 %3745
        %3749 = vset.pattern.permute.xlu0 0
        %3750 = vperm.xlu0 %3749, %v3676
        %v3751 = vpop.permute.xlu0 %3750
        %3754 = vset.pattern.permute.xlu0 0
        %3755 = vperm.xlu0 %3754, %v3677
        %v3756 = vpop.permute.xlu0 %3755
        %3759 = vset.pattern.permute.xlu0 0
        %3760 = vperm.xlu0 %3759, %v3678
        %v3761 = vpop.permute.xlu0 %3760
        %3764 = vset.pattern.permute.xlu0 0
        %3765 = vperm.xlu0 %3764, %v3679
        %v3766 = vpop.permute.xlu0 %3765
        %3769 = vset.pattern.permute.xlu0 0
        %3770 = vperm.xlu0 %3769, %v3680
        %v3771 = vpop.permute.xlu0 %3770
        %3774 = vset.pattern.permute.xlu0 0
        %3775 = vperm.xlu0 %3774, %v3681
        %v3776 = vpop.permute.xlu0 %3775
        %3779 = vset.pattern.permute.xlu0 0
        %3780 = vperm.xlu0 %3779, %v3682
        %v3781 = vpop.permute.xlu0 %3780
        %3784 = vset.pattern.permute.xlu0 0
        %3785 = vperm.xlu0 %3784, %v3683
        %v3786 = vpop.permute.xlu0 %3785
        %3789 = vset.pattern.permute.xlu0 0
        %3790 = vperm.xlu0 %3789, %v3684
        %v3791 = vpop.permute.xlu0 %3790
        %3794 = vset.pattern.permute.xlu0 0
        %3795 = vperm.xlu0 %3794, %v3685
        %v3796 = vpop.permute.xlu0 %3795
        %3799 = vset.pattern.permute.xlu0 0
        %3800 = vperm.xlu0 %3799, %v3686
        %v3801 = vpop.permute.xlu0 %3800
        %3804 = vset.pattern.permute.xlu0 0
        %3805 = vperm.xlu0 %3804, %v3687
        %v3806 = vpop.permute.xlu0 %3805
        %3809 = vset.pattern.permute.xlu0 0
        %3810 = vperm.xlu0 %3809, %v3688
        %v3811 = vpop.permute.xlu0 %3810
        %3814 = vset.pattern.permute.xlu0 0
        %3815 = vperm.xlu0 %3814, %v3689
        %v3816 = vpop.permute.xlu0 %3815
        %3819 = vset.pattern.permute.xlu0 0
        %3820 = vperm.xlu0 %3819, %v3690
        %v3821 = vpop.permute.xlu0 %3820
        %3824 = vset.pattern.permute.xlu0 0
        %3825 = vperm.xlu0 %3824, %v3691
        %v3826 = vpop.permute.xlu0 %3825
        %3829 = vset.pattern.permute.xlu0 0
        %3830 = vperm.xlu0 %3829, %v3692
        %v3831 = vpop.permute.xlu0 %3830
        %3834 = vset.pattern.permute.xlu0 0
        %3835 = vperm.xlu0 %3834, %v3693
        %v3836 = vpop.permute.xlu0 %3835
        %3839 = vset.pattern.permute.xlu0 0
        %3840 = vperm.xlu0 %3839, %v3694
        %v3841 = vpop.permute.xlu0 %3840
        %3844 = vset.pattern.permute.xlu0 0
        %3845 = vperm.xlu0 %3844, %v3695
        %v3846 = vpop.permute.xlu0 %3845
        %3849 = vset.pattern.permute.xlu0 0
        %3850 = vperm.xlu0 %3849, %v3696
        %v3851 = vpop.permute.xlu0 %3850
        %3854 = vset.pattern.permute.xlu0 0
        %3855 = vperm.xlu0 %3854, %v3697
        %v3856 = vpop.permute.xlu0 %3855
        %v3858 = vmul.f32 %v323, %v3701
        %v3859 = vmul.f32 %v324, %v3706
        %v3860 = vmul.f32 %v325, %v3711
        %v3861 = vmul.f32 %v326, %v3716
        %v3862 = vmul.f32 %v327, %v3721
        %v3863 = vmul.f32 %v328, %v3726
        %v3864 = vmul.f32 %v329, %v3731
        %v3865 = vmul.f32 %v330, %v3736
        %v3866 = vmul.f32 %v331, %v3741
        %v3867 = vmul.f32 %v332, %v3746
        %v3868 = vmul.f32 %v333, %v3751
        %v3869 = vmul.f32 %v334, %v3756
        %v3870 = vmul.f32 %v335, %v3761
        %v3871 = vmul.f32 %v336, %v3766
        %v3872 = vmul.f32 %v337, %v3771
        %v3873 = vmul.f32 %v338, %v3776
        %v3874 = vmul.f32 %v339, %v3781
        %v3875 = vmul.f32 %v340, %v3786
        %v3876 = vmul.f32 %v341, %v3791
        %v3877 = vmul.f32 %v342, %v3796
        %v3878 = vmul.f32 %v343, %v3801
        %v3879 = vmul.f32 %v344, %v3806
        %v3880 = vmul.f32 %v345, %v3811
        %v3881 = vmul.f32 %v346, %v3816
        %v3882 = vmul.f32 %v347, %v3821
        %v3883 = vmul.f32 %v348, %v3826
        %v3884 = vmul.f32 %v349, %v3831
        %v3885 = vmul.f32 %v350, %v3836
        %v3886 = vmul.f32 %v351, %v3841
        %v3887 = vmul.f32 %v352, %v3846
        %v3888 = vmul.f32 %v353, %v3851
        %v3889 = vmul.f32 %v354, %v3856
        %s3890 = scalar_lea.vmem %s2, 56
        %v3891 = vld [vmem:[%s3890] sm:$0xff]
        %v3893 = vsel %vm874, %v3860, 0
        %v3896 = vsel %vm874, %v3861, 0
        %v3899 = vsel %vm874, %v3862, 0
        %v3902 = vsel %vm874, %v3863, 0
        %v3905 = vsel %vm874, %v3864, 0
        %v3908 = vsel %vm874, %v3865, 0
        %v3911 = vsel %vm874, %v3866, 0
        %v3914 = vsel %vm874, %v3867, 0
        %v3917 = vsel %vm874, %v3868, 0
        %v3920 = vsel %vm874, %v3869, 0
        %v3923 = vsel %vm874, %v3870, 0
        %v3926 = vsel %vm874, %v3871, 0
        %v3929 = vsel %vm874, %v3872, 0
        %v3932 = vsel %vm874, %v3873, 0
        %v3935 = vsel %vm874, %v3874, 0
        %v3938 = vsel %vm874, %v3875, 0
        %v3941 = vsel %vm874, %v3876, 0
        %v3944 = vsel %vm874, %v3877, 0
        %v3947 = vsel %vm874, %v3878, 0
        %v3950 = vsel %vm874, %v3879, 0
        %v3953 = vsel %vm874, %v3880, 0
        %v3956 = vsel %vm874, %v3881, 0
        %v3959 = vsel %vm874, %v3882, 0
        %v3962 = vsel %vm874, %v3883, 0
        %v3965 = vsel %vm874, %v3884, 0
        %v3968 = vsel %vm874, %v3885, 0
        %v3971 = vsel %vm874, %v3886, 0
        %v3974 = vsel %vm874, %v3887, 0
        %v3977 = vsel %vm874, %v3888, 0
        %v3980 = vsel %vm874, %v3889, 0
        %v3983 = vsel %vm874, %v3858, 0
        %v3986 = vsel %vm874, %v3859, 0
        %3988 = vmatpush.msra.mxu0 0.0
        %3989 = vmatpush.msra.mxu0 0.0
        %3990 = vmatpush.msra.mxu0 0.0
        %3991 = vmatpush.msra.mxu0 0.0
        %3992 = vmatpush.msra.mxu0 0.0
        %3993 = vmatpush.msra.mxu0 0.0
        %3994 = vmatpush.msra.mxu0 0.0
        %3995 = vmatpush.msra.mxu0 0.0
        %3996 = vmatpush.msra.mxu0 0.0
        %3997 = vmatpush.msra.mxu0 0.0
        %3998 = vmatpush.msra.mxu0 0.0
        %3999 = vmatpush.msra.mxu0 0.0
        %4000 = vmatpush.msra.mxu0 0.0
        %4001 = vmatpush.msra.mxu0 0.0
        %4002 = vmatpush.msra.mxu0 0.0
        %4003 = vmatpush.msra.mxu0 %v3891
        %4004 = vmatmul.f32.gmra.mxu0 %v3893
        %v4005 = vpop.f32.mrf.mxu0
        %v4006 = vadd.f32 0.0, %v4005
        %4007 = vmatmul.f32.gmra.mxu0 %v3896
        %v4008 = vpop.f32.mrf.mxu0
        %v4009 = vadd.f32 0.0, %v4008
        %4010 = vmatmul.f32.gmra.mxu0 %v3899
        %v4011 = vpop.f32.mrf.mxu0
        %v4012 = vadd.f32 0.0, %v4011
        %4013 = vmatmul.f32.gmra.mxu0 %v3902
        %v4014 = vpop.f32.mrf.mxu0
        %v4015 = vadd.f32 0.0, %v4014
        %4016 = vmatmul.f32.gmra.mxu0 %v3905
        %v4017 = vpop.f32.mrf.mxu0
        %v4018 = vadd.f32 0.0, %v4017
        %4019 = vmatmul.f32.gmra.mxu0 %v3908
        %v4020 = vpop.f32.mrf.mxu0
        %v4021 = vadd.f32 0.0, %v4020
        %4022 = vmatmul.f32.gmra.mxu0 %v3911
        %v4023 = vpop.f32.mrf.mxu0
        %v4024 = vadd.f32 0.0, %v4023
        %4025 = vmatmul.f32.gmra.mxu0 %v3914
        %v4026 = vpop.f32.mrf.mxu0
        %v4027 = vadd.f32 0.0, %v4026
        %4028 = vmatmul.f32.gmra.mxu0 %v3917
        %v4029 = vpop.f32.mrf.mxu0
        %v4030 = vadd.f32 0.0, %v4029
        %4031 = vmatmul.f32.gmra.mxu0 %v3920
        %v4032 = vpop.f32.mrf.mxu0
        %v4033 = vadd.f32 0.0, %v4032
        %4034 = vmatmul.f32.gmra.mxu0 %v3923
        %v4035 = vpop.f32.mrf.mxu0
        %v4036 = vadd.f32 0.0, %v4035
        %4037 = vmatmul.f32.gmra.mxu0 %v3926
        %v4038 = vpop.f32.mrf.mxu0
        %v4039 = vadd.f32 0.0, %v4038
        %4040 = vmatmul.f32.gmra.mxu0 %v3929
        %v4041 = vpop.f32.mrf.mxu0
        %v4042 = vadd.f32 0.0, %v4041
        %4043 = vmatmul.f32.gmra.mxu0 %v3932
        %v4044 = vpop.f32.mrf.mxu0
        %v4045 = vadd.f32 0.0, %v4044
        %4046 = vmatmul.f32.gmra.mxu0 %v3935
        %v4047 = vpop.f32.mrf.mxu0
        %v4048 = vadd.f32 0.0, %v4047
        %4049 = vmatmul.f32.gmra.mxu0 %v3938
        %v4050 = vpop.f32.mrf.mxu0
        %v4051 = vadd.f32 0.0, %v4050
        %4052 = vmatmul.f32.gmra.mxu0 %v3941
        %v4053 = vpop.f32.mrf.mxu0
        %v4054 = vadd.f32 0.0, %v4053
        %4055 = vmatmul.f32.gmra.mxu0 %v3944
        %v4056 = vpop.f32.mrf.mxu0
        %v4057 = vadd.f32 0.0, %v4056
        %4058 = vmatmul.f32.gmra.mxu0 %v3947
        %v4059 = vpop.f32.mrf.mxu0
        %v4060 = vadd.f32 0.0, %v4059
        %4061 = vmatmul.f32.gmra.mxu0 %v3950
        %v4062 = vpop.f32.mrf.mxu0
        %v4063 = vadd.f32 0.0, %v4062
        %4064 = vmatmul.f32.gmra.mxu0 %v3953
        %v4065 = vpop.f32.mrf.mxu0
        %v4066 = vadd.f32 0.0, %v4065
        %4067 = vmatmul.f32.gmra.mxu0 %v3956
        %v4068 = vpop.f32.mrf.mxu0
        %v4069 = vadd.f32 0.0, %v4068
        %4070 = vmatmul.f32.gmra.mxu0 %v3959
        %v4071 = vpop.f32.mrf.mxu0
        %v4072 = vadd.f32 0.0, %v4071
        %4073 = vmatmul.f32.gmra.mxu0 %v3962
        %v4074 = vpop.f32.mrf.mxu0
        %v4075 = vadd.f32 0.0, %v4074
        %4076 = vmatmul.f32.gmra.mxu0 %v3965
        %v4077 = vpop.f32.mrf.mxu0
        %v4078 = vadd.f32 0.0, %v4077
        %4079 = vmatmul.f32.gmra.mxu0 %v3968
        %v4080 = vpop.f32.mrf.mxu0
        %v4081 = vadd.f32 0.0, %v4080
        %4082 = vmatmul.f32.gmra.mxu0 %v3971
        %v4083 = vpop.f32.mrf.mxu0
        %v4084 = vadd.f32 0.0, %v4083
        %4085 = vmatmul.f32.gmra.mxu0 %v3974
        %v4086 = vpop.f32.mrf.mxu0
        %v4087 = vadd.f32 0.0, %v4086
        %4088 = vmatmul.f32.gmra.mxu0 %v3977
        %v4089 = vpop.f32.mrf.mxu0
        %v4090 = vadd.f32 0.0, %v4089
        %4091 = vmatmul.f32.gmra.mxu0 %v3980
        %v4092 = vpop.f32.mrf.mxu0
        %v4093 = vadd.f32 0.0, %v4092
        %4094 = vmatmul.f32.gmra.mxu0 %v3983
        %v4095 = vpop.f32.mrf.mxu0
        %v4096 = vadd.f32 0.0, %v4095
        %4097 = vmatmul.f32.gmra.mxu0 %v3986
        %v4098 = vpop.f32.mrf.mxu0
        %v4099 = vadd.f32 0.0, %v4098
        %4100 = vdwg.mxu0
        %v4101 = vadd.f32 %v3633, %v4006
        %v4102 = vadd.f32 %v3634, %v4009
        %v4103 = vadd.f32 %v3635, %v4012
        %v4104 = vadd.f32 %v3636, %v4015
        %v4105 = vadd.f32 %v3637, %v4018
        %v4106 = vadd.f32 %v3638, %v4021
        %v4107 = vadd.f32 %v3639, %v4024
        %v4108 = vadd.f32 %v3640, %v4027
        %v4109 = vadd.f32 %v3641, %v4030
        %v4110 = vadd.f32 %v3642, %v4033
        %v4111 = vadd.f32 %v3643, %v4036
        %v4112 = vadd.f32 %v3644, %v4039
        %v4113 = vadd.f32 %v3645, %v4042
        %v4114 = vadd.f32 %v3646, %v4045
        %v4115 = vadd.f32 %v3647, %v4048
        %v4116 = vadd.f32 %v3648, %v4051
        %v4117 = vadd.f32 %v3649, %v4054
        %v4118 = vadd.f32 %v3650, %v4057
        %v4119 = vadd.f32 %v3651, %v4060
        %v4120 = vadd.f32 %v3652, %v4063
        %v4121 = vadd.f32 %v3653, %v4066
        %v4122 = vadd.f32 %v3654, %v4069
        %v4123 = vadd.f32 %v3655, %v4072
        %v4124 = vadd.f32 %v3656, %v4075
        %v4125 = vadd.f32 %v3657, %v4078
        %v4126 = vadd.f32 %v3658, %v4081
        %v4127 = vadd.f32 %v3659, %v4084
        %v4128 = vadd.f32 %v3660, %v4087
        %v4129 = vadd.f32 %v3661, %v4090
        %v4130 = vadd.f32 %v3662, %v4093
        %v4131 = vadd.f32 %v3663, %v4096
        %v4132 = vadd.f32 %v3664, %v4099
        %s4133 = scalar_lea.vmem [#allocation2], 1792
        %v4134 = vld [vmem:[%s4133] sm:$0xff]
        %v4135 = vld [vmem:[%s4133 + $0x8] sm:$0xff]
        %v4136 = vld [vmem:[%s4133 + $0x10] sm:$0xff]
        %v4137 = vld [vmem:[%s4133 + $0x18] sm:$0xff]
        %v4138 = vld [vmem:[%s4133 + $0x20] sm:$0xff]
        %v4139 = vld [vmem:[%s4133 + $0x28] sm:$0xff]
        %v4140 = vld [vmem:[%s4133 + $0x30] sm:$0xff]
        %v4141 = vld [vmem:[%s4133 + $0x38] sm:$0xff]
        %v4142 = vld [vmem:[%s4133 + $0x40] sm:$0xff]
        %v4143 = vld [vmem:[%s4133 + $0x48] sm:$0xff]
        %v4144 = vld [vmem:[%s4133 + $0x50] sm:$0xff]
        %v4145 = vld [vmem:[%s4133 + $0x58] sm:$0xff]
        %v4146 = vld [vmem:[%s4133 + $0x60] sm:$0xff]
        %v4147 = vld [vmem:[%s4133 + $0x68] sm:$0xff]
        %v4148 = vld [vmem:[%s4133 + $0x70] sm:$0xff]
        %v4149 = vld [vmem:[%s4133 + $0x78] sm:$0xff]
        %v4150 = vld [vmem:[%s4133 + $0x80] sm:$0xff]
        %v4151 = vld [vmem:[%s4133 + $0x88] sm:$0xff]
        %v4152 = vld [vmem:[%s4133 + $0x90] sm:$0xff]
        %v4153 = vld [vmem:[%s4133 + $0x98] sm:$0xff]
        %v4154 = vld [vmem:[%s4133 + $0xa0] sm:$0xff]
        %v4155 = vld [vmem:[%s4133 + $0xa8] sm:$0xff]
        %v4156 = vld [vmem:[%s4133 + $0xb0] sm:$0xff]
        %v4157 = vld [vmem:[%s4133 + $0xb8] sm:$0xff]
        %v4158 = vld [vmem:[%s4133 + $0xc0] sm:$0xff]
        %v4159 = vld [vmem:[%s4133 + $0xc8] sm:$0xff]
        %v4160 = vld [vmem:[%s4133 + $0xd0] sm:$0xff]
        %v4161 = vld [vmem:[%s4133 + $0xd8] sm:$0xff]
        %v4162 = vld [vmem:[%s4133 + $0xe0] sm:$0xff]
        %v4163 = vld [vmem:[%s4133 + $0xe8] sm:$0xff]
        %v4164 = vld [vmem:[%s4133 + $0xf0] sm:$0xff]
        %v4165 = vld [vmem:[%s4133 + $0xf8] sm:$0xff]
        %4167 = vset.pattern.permute.xlu0 0
        %4168 = vperm.xlu0 %4167, %v4134
        %v4169 = vpop.permute.xlu0 %4168
        %4172 = vset.pattern.permute.xlu0 0
        %4173 = vperm.xlu0 %4172, %v4135
        %v4174 = vpop.permute.xlu0 %4173
        %4177 = vset.pattern.permute.xlu0 0
        %4178 = vperm.xlu0 %4177, %v4136
        %v4179 = vpop.permute.xlu0 %4178
        %4182 = vset.pattern.permute.xlu0 0
        %4183 = vperm.xlu0 %4182, %v4137
        %v4184 = vpop.permute.xlu0 %4183
        %4187 = vset.pattern.permute.xlu0 0
        %4188 = vperm.xlu0 %4187, %v4138
        %v4189 = vpop.permute.xlu0 %4188
        %4192 = vset.pattern.permute.xlu0 0
        %4193 = vperm.xlu0 %4192, %v4139
        %v4194 = vpop.permute.xlu0 %4193
        %4197 = vset.pattern.permute.xlu0 0
        %4198 = vperm.xlu0 %4197, %v4140
        %v4199 = vpop.permute.xlu0 %4198
        %4202 = vset.pattern.permute.xlu0 0
        %4203 = vperm.xlu0 %4202, %v4141
        %v4204 = vpop.permute.xlu0 %4203
        %4207 = vset.pattern.permute.xlu0 0
        %4208 = vperm.xlu0 %4207, %v4142
        %v4209 = vpop.permute.xlu0 %4208
        %4212 = vset.pattern.permute.xlu0 0
        %4213 = vperm.xlu0 %4212, %v4143
        %v4214 = vpop.permute.xlu0 %4213
        %4217 = vset.pattern.permute.xlu0 0
        %4218 = vperm.xlu0 %4217, %v4144
        %v4219 = vpop.permute.xlu0 %4218
        %4222 = vset.pattern.permute.xlu0 0
        %4223 = vperm.xlu0 %4222, %v4145
        %v4224 = vpop.permute.xlu0 %4223
        %4227 = vset.pattern.permute.xlu0 0
        %4228 = vperm.xlu0 %4227, %v4146
        %v4229 = vpop.permute.xlu0 %4228
        %4232 = vset.pattern.permute.xlu0 0
        %4233 = vperm.xlu0 %4232, %v4147
        %v4234 = vpop.permute.xlu0 %4233
        %4237 = vset.pattern.permute.xlu0 0
        %4238 = vperm.xlu0 %4237, %v4148
        %v4239 = vpop.permute.xlu0 %4238
        %4242 = vset.pattern.permute.xlu0 0
        %4243 = vperm.xlu0 %4242, %v4149
        %v4244 = vpop.permute.xlu0 %4243
        %4247 = vset.pattern.permute.xlu0 0
        %4248 = vperm.xlu0 %4247, %v4150
        %v4249 = vpop.permute.xlu0 %4248
        %4252 = vset.pattern.permute.xlu0 0
        %4253 = vperm.xlu0 %4252, %v4151
        %v4254 = vpop.permute.xlu0 %4253
        %4257 = vset.pattern.permute.xlu0 0
        %4258 = vperm.xlu0 %4257, %v4152
        %v4259 = vpop.permute.xlu0 %4258
        %4262 = vset.pattern.permute.xlu0 0
        %4263 = vperm.xlu0 %4262, %v4153
        %v4264 = vpop.permute.xlu0 %4263
        %4267 = vset.pattern.permute.xlu0 0
        %4268 = vperm.xlu0 %4267, %v4154
        %v4269 = vpop.permute.xlu0 %4268
        %4272 = vset.pattern.permute.xlu0 0
        %4273 = vperm.xlu0 %4272, %v4155
        %v4274 = vpop.permute.xlu0 %4273
        %4277 = vset.pattern.permute.xlu0 0
        %4278 = vperm.xlu0 %4277, %v4156
        %v4279 = vpop.permute.xlu0 %4278
        %4282 = vset.pattern.permute.xlu0 0
        %4283 = vperm.xlu0 %4282, %v4157
        %v4284 = vpop.permute.xlu0 %4283
        %4287 = vset.pattern.permute.xlu0 0
        %4288 = vperm.xlu0 %4287, %v4158
        %v4289 = vpop.permute.xlu0 %4288
        %4292 = vset.pattern.permute.xlu0 0
        %4293 = vperm.xlu0 %4292, %v4159
        %v4294 = vpop.permute.xlu0 %4293
        %4297 = vset.pattern.permute.xlu0 0
        %4298 = vperm.xlu0 %4297, %v4160
        %v4299 = vpop.permute.xlu0 %4298
        %4302 = vset.pattern.permute.xlu0 0
        %4303 = vperm.xlu0 %4302, %v4161
        %v4304 = vpop.permute.xlu0 %4303
        %4307 = vset.pattern.permute.xlu0 0
        %4308 = vperm.xlu0 %4307, %v4162
        %v4309 = vpop.permute.xlu0 %4308
        %4312 = vset.pattern.permute.xlu0 0
        %4313 = vperm.xlu0 %4312, %v4163
        %v4314 = vpop.permute.xlu0 %4313
        %4317 = vset.pattern.permute.xlu0 0
        %4318 = vperm.xlu0 %4317, %v4164
        %v4319 = vpop.permute.xlu0 %4318
        %4322 = vset.pattern.permute.xlu0 0
        %4323 = vperm.xlu0 %4322, %v4165
        %v4324 = vpop.permute.xlu0 %4323
        %v4326 = vmul.f32 %v323, %v4169
        %v4327 = vmul.f32 %v324, %v4174
        %v4328 = vmul.f32 %v325, %v4179
        %v4329 = vmul.f32 %v326, %v4184
        %v4330 = vmul.f32 %v327, %v4189
        %v4331 = vmul.f32 %v328, %v4194
        %v4332 = vmul.f32 %v329, %v4199
        %v4333 = vmul.f32 %v330, %v4204
        %v4334 = vmul.f32 %v331, %v4209
        %v4335 = vmul.f32 %v332, %v4214
        %v4336 = vmul.f32 %v333, %v4219
        %v4337 = vmul.f32 %v334, %v4224
        %v4338 = vmul.f32 %v335, %v4229
        %v4339 = vmul.f32 %v336, %v4234
        %v4340 = vmul.f32 %v337, %v4239
        %v4341 = vmul.f32 %v338, %v4244
        %v4342 = vmul.f32 %v339, %v4249
        %v4343 = vmul.f32 %v340, %v4254
        %v4344 = vmul.f32 %v341, %v4259
        %v4345 = vmul.f32 %v342, %v4264
        %v4346 = vmul.f32 %v343, %v4269
        %v4347 = vmul.f32 %v344, %v4274
        %v4348 = vmul.f32 %v345, %v4279
        %v4349 = vmul.f32 %v346, %v4284
        %v4350 = vmul.f32 %v347, %v4289
        %v4351 = vmul.f32 %v348, %v4294
        %v4352 = vmul.f32 %v349, %v4299
        %v4353 = vmul.f32 %v350, %v4304
        %v4354 = vmul.f32 %v351, %v4309
        %v4355 = vmul.f32 %v352, %v4314
        %v4356 = vmul.f32 %v353, %v4319
        %v4357 = vmul.f32 %v354, %v4324
        %v4358 = vrot.slane %v4326, 1
        %v4359 = vrot.slane %v4327, 1
        %v4360 = vrot.slane %v4328, 1
        %v4361 = vrot.slane %v4329, 1
        %v4362 = vrot.slane %v4330, 1
        %v4363 = vrot.slane %v4331, 1
        %v4364 = vrot.slane %v4332, 1
        %v4365 = vrot.slane %v4333, 1
        %v4366 = vrot.slane %v4334, 1
        %v4367 = vrot.slane %v4335, 1
        %v4368 = vrot.slane %v4336, 1
        %v4369 = vrot.slane %v4337, 1
        %v4370 = vrot.slane %v4338, 1
        %v4371 = vrot.slane %v4339, 1
        %v4372 = vrot.slane %v4340, 1
        %v4373 = vrot.slane %v4341, 1
        %v4374 = vrot.slane %v4342, 1
        %v4375 = vrot.slane %v4343, 1
        %v4376 = vrot.slane %v4344, 1
        %v4377 = vrot.slane %v4345, 1
        %v4378 = vrot.slane %v4346, 1
        %v4379 = vrot.slane %v4347, 1
        %v4380 = vrot.slane %v4348, 1
        %v4381 = vrot.slane %v4349, 1
        %v4382 = vrot.slane %v4350, 1
        %v4383 = vrot.slane %v4351, 1
        %v4384 = vrot.slane %v4352, 1
        %v4385 = vrot.slane %v4353, 1
        %v4386 = vrot.slane %v4354, 1
        %v4387 = vrot.slane %v4355, 1
        %v4388 = vrot.slane %v4356, 1
        %v4389 = vrot.slane %v4357, 1
        %v4390 = vsel %vm1550, %v4388, %v4389
        %v4391 = vsel %vm1550, %v4387, %v4388
        %v4392 = vsel %vm1550, %v4386, %v4387
        %v4393 = vsel %vm1550, %v4385, %v4386
        %v4394 = vsel %vm1550, %v4384, %v4385
        %v4395 = vsel %vm1550, %v4383, %v4384
        %v4396 = vsel %vm1550, %v4382, %v4383
        %v4397 = vsel %vm1550, %v4381, %v4382
        %v4398 = vsel %vm1550, %v4380, %v4381
        %v4399 = vsel %vm1550, %v4379, %v4380
        %v4400 = vsel %vm1550, %v4378, %v4379
        %v4401 = vsel %vm1550, %v4377, %v4378
        %v4402 = vsel %vm1550, %v4376, %v4377
        %v4403 = vsel %vm1550, %v4375, %v4376
        %v4404 = vsel %vm1550, %v4374, %v4375
        %v4405 = vsel %vm1550, %v4373, %v4374
        %v4406 = vsel %vm1550, %v4372, %v4373
        %v4407 = vsel %vm1550, %v4371, %v4372
        %v4408 = vsel %vm1550, %v4370, %v4371
        %v4409 = vsel %vm1550, %v4369, %v4370
        %v4410 = vsel %vm1550, %v4368, %v4369
        %v4411 = vsel %vm1550, %v4367, %v4368
        %v4412 = vsel %vm1550, %v4366, %v4367
        %v4413 = vsel %vm1550, %v4365, %v4366
        %v4414 = vsel %vm1550, %v4364, %v4365
        %v4415 = vsel %vm1550, %v4363, %v4364
        %v4416 = vsel %vm1550, %v4362, %v4363
        %v4417 = vsel %vm1550, %v4361, %v4362
        %v4418 = vsel %vm1550, %v4360, %v4361
        %v4419 = vsel %vm1550, %v4359, %v4360
        %v4420 = vsel %vm1550, %v4358, %v4359
        %v4421 = vsel %vm1550, %v4389, %v4358
        %s4422 = scalar_lea.vmem %s2, 64
        %v4423 = vld [vmem:[%s4422] sm:$0xff]
        %v4425 = vsel %vm874, %v4418, 0
        %v4428 = vsel %vm874, %v4417, 0
        %v4431 = vsel %vm874, %v4416, 0
        %v4434 = vsel %vm874, %v4415, 0
        %v4437 = vsel %vm874, %v4414, 0
        %v4440 = vsel %vm874, %v4413, 0
        %v4443 = vsel %vm874, %v4412, 0
        %v4446 = vsel %vm874, %v4411, 0
        %v4449 = vsel %vm874, %v4410, 0
        %v4452 = vsel %vm874, %v4409, 0
        %v4455 = vsel %vm874, %v4408, 0
        %v4458 = vsel %vm874, %v4407, 0
        %v4461 = vsel %vm874, %v4406, 0
        %v4464 = vsel %vm874, %v4405, 0
        %v4467 = vsel %vm874, %v4404, 0
        %v4470 = vsel %vm874, %v4403, 0
        %v4473 = vsel %vm874, %v4402, 0
        %v4476 = vsel %vm874, %v4401, 0
        %v4479 = vsel %vm874, %v4400, 0
        %v4482 = vsel %vm874, %v4399, 0
        %v4485 = vsel %vm874, %v4398, 0
        %v4488 = vsel %vm874, %v4397, 0
        %v4491 = vsel %vm874, %v4396, 0
        %v4494 = vsel %vm874, %v4395, 0
        %v4497 = vsel %vm874, %v4394, 0
        %v4500 = vsel %vm874, %v4393, 0
        %v4503 = vsel %vm874, %v4392, 0
        %v4506 = vsel %vm874, %v4391, 0
        %v4509 = vsel %vm874, %v4390, 0
        %v4512 = vsel %vm874, %v4421, 0
        %v4515 = vsel %vm874, %v4420, 0
        %v4518 = vsel %vm874, %v4419, 0
        %4520 = vmatpush.msra.mxu0 0.0
        %4521 = vmatpush.msra.mxu0 0.0
        %4522 = vmatpush.msra.mxu0 0.0
        %4523 = vmatpush.msra.mxu0 0.0
        %4524 = vmatpush.msra.mxu0 0.0
        %4525 = vmatpush.msra.mxu0 0.0
        %4526 = vmatpush.msra.mxu0 0.0
        %4527 = vmatpush.msra.mxu0 0.0
        %4528 = vmatpush.msra.mxu0 0.0
        %4529 = vmatpush.msra.mxu0 0.0
        %4530 = vmatpush.msra.mxu0 0.0
        %4531 = vmatpush.msra.mxu0 0.0
        %4532 = vmatpush.msra.mxu0 0.0
        %4533 = vmatpush.msra.mxu0 0.0
        %4534 = vmatpush.msra.mxu0 0.0
        %4535 = vmatpush.msra.mxu0 %v4423
        %4536 = vmatmul.f32.gmra.mxu0 %v4425
        %v4537 = vpop.f32.mrf.mxu0
        %v4538 = vadd.f32 0.0, %v4537
        %4539 = vmatmul.f32.gmra.mxu0 %v4428
        %v4540 = vpop.f32.mrf.mxu0
        %v4541 = vadd.f32 0.0, %v4540
        %4542 = vmatmul.f32.gmra.mxu0 %v4431
        %v4543 = vpop.f32.mrf.mxu0
        %v4544 = vadd.f32 0.0, %v4543
        %4545 = vmatmul.f32.gmra.mxu0 %v4434
        %v4546 = vpop.f32.mrf.mxu0
        %v4547 = vadd.f32 0.0, %v4546
        %4548 = vmatmul.f32.gmra.mxu0 %v4437
        %v4549 = vpop.f32.mrf.mxu0
        %v4550 = vadd.f32 0.0, %v4549
        %4551 = vmatmul.f32.gmra.mxu0 %v4440
        %v4552 = vpop.f32.mrf.mxu0
        %v4553 = vadd.f32 0.0, %v4552
        %4554 = vmatmul.f32.gmra.mxu0 %v4443
        %v4555 = vpop.f32.mrf.mxu0
        %v4556 = vadd.f32 0.0, %v4555
        %4557 = vmatmul.f32.gmra.mxu0 %v4446
        %v4558 = vpop.f32.mrf.mxu0
        %v4559 = vadd.f32 0.0, %v4558
        %4560 = vmatmul.f32.gmra.mxu0 %v4449
        %v4561 = vpop.f32.mrf.mxu0
        %v4562 = vadd.f32 0.0, %v4561
        %4563 = vmatmul.f32.gmra.mxu0 %v4452
        %v4564 = vpop.f32.mrf.mxu0
        %v4565 = vadd.f32 0.0, %v4564
        %4566 = vmatmul.f32.gmra.mxu0 %v4455
        %v4567 = vpop.f32.mrf.mxu0
        %v4568 = vadd.f32 0.0, %v4567
        %4569 = vmatmul.f32.gmra.mxu0 %v4458
        %v4570 = vpop.f32.mrf.mxu0
        %v4571 = vadd.f32 0.0, %v4570
        %4572 = vmatmul.f32.gmra.mxu0 %v4461
        %v4573 = vpop.f32.mrf.mxu0
        %v4574 = vadd.f32 0.0, %v4573
        %4575 = vmatmul.f32.gmra.mxu0 %v4464
        %v4576 = vpop.f32.mrf.mxu0
        %v4577 = vadd.f32 0.0, %v4576
        %4578 = vmatmul.f32.gmra.mxu0 %v4467
        %v4579 = vpop.f32.mrf.mxu0
        %v4580 = vadd.f32 0.0, %v4579
        %4581 = vmatmul.f32.gmra.mxu0 %v4470
        %v4582 = vpop.f32.mrf.mxu0
        %v4583 = vadd.f32 0.0, %v4582
        %4584 = vmatmul.f32.gmra.mxu0 %v4473
        %v4585 = vpop.f32.mrf.mxu0
        %v4586 = vadd.f32 0.0, %v4585
        %4587 = vmatmul.f32.gmra.mxu0 %v4476
        %v4588 = vpop.f32.mrf.mxu0
        %v4589 = vadd.f32 0.0, %v4588
        %4590 = vmatmul.f32.gmra.mxu0 %v4479
        %v4591 = vpop.f32.mrf.mxu0
        %v4592 = vadd.f32 0.0, %v4591
        %4593 = vmatmul.f32.gmra.mxu0 %v4482
        %v4594 = vpop.f32.mrf.mxu0
        %v4595 = vadd.f32 0.0, %v4594
        %4596 = vmatmul.f32.gmra.mxu0 %v4485
        %v4597 = vpop.f32.mrf.mxu0
        %v4598 = vadd.f32 0.0, %v4597
        %4599 = vmatmul.f32.gmra.mxu0 %v4488
        %v4600 = vpop.f32.mrf.mxu0
        %v4601 = vadd.f32 0.0, %v4600
        %4602 = vmatmul.f32.gmra.mxu0 %v4491
        %v4603 = vpop.f32.mrf.mxu0
        %v4604 = vadd.f32 0.0, %v4603
        %4605 = vmatmul.f32.gmra.mxu0 %v4494
        %v4606 = vpop.f32.mrf.mxu0
        %v4607 = vadd.f32 0.0, %v4606
        %4608 = vmatmul.f32.gmra.mxu0 %v4497
        %v4609 = vpop.f32.mrf.mxu0
        %v4610 = vadd.f32 0.0, %v4609
        %4611 = vmatmul.f32.gmra.mxu0 %v4500
        %v4612 = vpop.f32.mrf.mxu0
        %v4613 = vadd.f32 0.0, %v4612
        %4614 = vmatmul.f32.gmra.mxu0 %v4503
        %v4615 = vpop.f32.mrf.mxu0
        %v4616 = vadd.f32 0.0, %v4615
        %4617 = vmatmul.f32.gmra.mxu0 %v4506
        %v4618 = vpop.f32.mrf.mxu0
        %v4619 = vadd.f32 0.0, %v4618
        %4620 = vmatmul.f32.gmra.mxu0 %v4509
        %v4621 = vpop.f32.mrf.mxu0
        %v4622 = vadd.f32 0.0, %v4621
        %4623 = vmatmul.f32.gmra.mxu0 %v4512
        %v4624 = vpop.f32.mrf.mxu0
        %v4625 = vadd.f32 0.0, %v4624
        %4626 = vmatmul.f32.gmra.mxu0 %v4515
        %v4627 = vpop.f32.mrf.mxu0
        %v4628 = vadd.f32 0.0, %v4627
        %4629 = vmatmul.f32.gmra.mxu0 %v4518
        %v4630 = vpop.f32.mrf.mxu0
        %v4631 = vadd.f32 0.0, %v4630
        %4632 = vdwg.mxu0
        %v4633 = vadd.f32 %v4101, %v4538
        %v4634 = vadd.f32 %v4102, %v4541
        %v4635 = vadd.f32 %v4103, %v4544
        %v4636 = vadd.f32 %v4104, %v4547
        %v4637 = vadd.f32 %v4105, %v4550
        %v4638 = vadd.f32 %v4106, %v4553
        %v4639 = vadd.f32 %v4107, %v4556
        %v4640 = vadd.f32 %v4108, %v4559
        %v4641 = vadd.f32 %v4109, %v4562
        %v4642 = vadd.f32 %v4110, %v4565
        %v4643 = vadd.f32 %v4111, %v4568
        %v4644 = vadd.f32 %v4112, %v4571
        %v4645 = vadd.f32 %v4113, %v4574
        %v4646 = vadd.f32 %v4114, %v4577
        %v4647 = vadd.f32 %v4115, %v4580
        %v4648 = vadd.f32 %v4116, %v4583
        %v4649 = vadd.f32 %v4117, %v4586
        %v4650 = vadd.f32 %v4118, %v4589
        %v4651 = vadd.f32 %v4119, %v4592
        %v4652 = vadd.f32 %v4120, %v4595
        %v4653 = vadd.f32 %v4121, %v4598
        %v4654 = vadd.f32 %v4122, %v4601
        %v4655 = vadd.f32 %v4123, %v4604
        %v4656 = vadd.f32 %v4124, %v4607
        %v4657 = vadd.f32 %v4125, %v4610
        %v4658 = vadd.f32 %v4126, %v4613
        %v4659 = vadd.f32 %v4127, %v4616
        %v4660 = vadd.f32 %v4128, %v4619
        %v4661 = vadd.f32 %v4129, %v4622
        %v4662 = vadd.f32 %v4130, %v4625
        %v4663 = vadd.f32 %v4131, %v4628
        %v4664 = vadd.f32 %v4132, %v4631
        %v4665 = vld [vmem:[%s4] sm:$0x1]
        %v4667 = vperm.slane %v4665, 0
        %v4669 = vmul.f32 %v4633, %v4667
        %v4670 = vmul.f32 %v4634, %v4667
        %v4671 = vmul.f32 %v4635, %v4667
        %v4672 = vmul.f32 %v4636, %v4667
        %v4673 = vmul.f32 %v4637, %v4667
        %v4674 = vmul.f32 %v4638, %v4667
        %v4675 = vmul.f32 %v4639, %v4667
        %v4676 = vmul.f32 %v4640, %v4667
        %v4677 = vmul.f32 %v4641, %v4667
        %v4678 = vmul.f32 %v4642, %v4667
        %v4679 = vmul.f32 %v4643, %v4667
        %v4680 = vmul.f32 %v4644, %v4667
        %v4681 = vmul.f32 %v4645, %v4667
        %v4682 = vmul.f32 %v4646, %v4667
        %v4683 = vmul.f32 %v4647, %v4667
        %v4684 = vmul.f32 %v4648, %v4667
        %v4685 = vmul.f32 %v4649, %v4667
        %v4686 = vmul.f32 %v4650, %v4667
        %v4687 = vmul.f32 %v4651, %v4667
        %v4688 = vmul.f32 %v4652, %v4667
        %v4689 = vmul.f32 %v4653, %v4667
        %v4690 = vmul.f32 %v4654, %v4667
        %v4691 = vmul.f32 %v4655, %v4667
        %v4692 = vmul.f32 %v4656, %v4667
        %v4693 = vmul.f32 %v4657, %v4667
        %v4694 = vmul.f32 %v4658, %v4667
        %v4695 = vmul.f32 %v4659, %v4667
        %v4696 = vmul.f32 %v4660, %v4667
        %v4697 = vmul.f32 %v4661, %v4667
        %v4698 = vmul.f32 %v4662, %v4667
        %v4699 = vmul.f32 %v4663, %v4667
        %v4700 = vmul.f32 %v4664, %v4667
        %v4701 = vld [vmem:[%s5] sm:$0x1]
        %v4703 = vperm.slane %v4701, 0
        %v4705 = vadd.f32 %v4669, %v4703
        %v4706 = vadd.f32 %v4670, %v4703
        %v4707 = vadd.f32 %v4671, %v4703
        %v4708 = vadd.f32 %v4672, %v4703
        %v4709 = vadd.f32 %v4673, %v4703
        %v4710 = vadd.f32 %v4674, %v4703
        %v4711 = vadd.f32 %v4675, %v4703
        %v4712 = vadd.f32 %v4676, %v4703
        %v4713 = vadd.f32 %v4677, %v4703
        %v4714 = vadd.f32 %v4678, %v4703
        %v4715 = vadd.f32 %v4679, %v4703
        %v4716 = vadd.f32 %v4680, %v4703
        %v4717 = vadd.f32 %v4681, %v4703
        %v4718 = vadd.f32 %v4682, %v4703
        %v4719 = vadd.f32 %v4683, %v4703
        %v4720 = vadd.f32 %v4684, %v4703
        %v4721 = vadd.f32 %v4685, %v4703
        %v4722 = vadd.f32 %v4686, %v4703
        %v4723 = vadd.f32 %v4687, %v4703
        %v4724 = vadd.f32 %v4688, %v4703
        %v4725 = vadd.f32 %v4689, %v4703
        %v4726 = vadd.f32 %v4690, %v4703
        %v4727 = vadd.f32 %v4691, %v4703
        %v4728 = vadd.f32 %v4692, %v4703
        %v4729 = vadd.f32 %v4693, %v4703
        %v4730 = vadd.f32 %v4694, %v4703
        %v4731 = vadd.f32 %v4695, %v4703
        %v4732 = vadd.f32 %v4696, %v4703
        %v4733 = vadd.f32 %v4697, %v4703
        %v4734 = vadd.f32 %v4698, %v4703
        %v4735 = vadd.f32 %v4699, %v4703
        %v4736 = vadd.f32 %v4700, %v4703
        %v4737 = vmax.f32 %v4705, 0.0
        %v4738 = vmax.f32 %v4706, 0.0
        %v4739 = vmax.f32 %v4707, 0.0
        %v4740 = vmax.f32 %v4708, 0.0
        %v4741 = vmax.f32 %v4709, 0.0
        %v4742 = vmax.f32 %v4710, 0.0
        %v4743 = vmax.f32 %v4711, 0.0
        %v4744 = vmax.f32 %v4712, 0.0
        %v4745 = vmax.f32 %v4713, 0.0
        %v4746 = vmax.f32 %v4714, 0.0
        %v4747 = vmax.f32 %v4715, 0.0
        %v4748 = vmax.f32 %v4716, 0.0
        %v4749 = vmax.f32 %v4717, 0.0
        %v4750 = vmax.f32 %v4718, 0.0
        %v4751 = vmax.f32 %v4719, 0.0
        %v4752 = vmax.f32 %v4720, 0.0
        %v4753 = vmax.f32 %v4721, 0.0
        %v4754 = vmax.f32 %v4722, 0.0
        %v4755 = vmax.f32 %v4723, 0.0
        %v4756 = vmax.f32 %v4724, 0.0
        %v4757 = vmax.f32 %v4725, 0.0
        %v4758 = vmax.f32 %v4726, 0.0
        %v4759 = vmax.f32 %v4727, 0.0
        %v4760 = vmax.f32 %v4728, 0.0
        %v4761 = vmax.f32 %v4729, 0.0
        %v4762 = vmax.f32 %v4730, 0.0
        %v4763 = vmax.f32 %v4731, 0.0
        %v4764 = vmax.f32 %v4732, 0.0
        %v4765 = vmax.f32 %v4733, 0.0
        %v4766 = vmax.f32 %v4734, 0.0
        %v4767 = vmax.f32 %v4735, 0.0
        %v4768 = vmax.f32 %v4736, 0.0
        %v4769 = vmul.f32 %v4737, %v390
        %v4770 = vmul.f32 %v4738, %v395
        %v4771 = vmul.f32 %v4739, %v400
        %v4772 = vmul.f32 %v4740, %v405
        %v4773 = vmul.f32 %v4741, %v410
        %v4774 = vmul.f32 %v4742, %v415
        %v4775 = vmul.f32 %v4743, %v420
        %v4776 = vmul.f32 %v4744, %v425
        %v4777 = vmul.f32 %v4745, %v430
        %v4778 = vmul.f32 %v4746, %v435
        %v4779 = vmul.f32 %v4747, %v440
        %v4780 = vmul.f32 %v4748, %v445
        %v4781 = vmul.f32 %v4749, %v450
        %v4782 = vmul.f32 %v4750, %v455
        %v4783 = vmul.f32 %v4751, %v460
        %v4784 = vmul.f32 %v4752, %v465
        %v4785 = vmul.f32 %v4753, %v470
        %v4786 = vmul.f32 %v4754, %v475
        %v4787 = vmul.f32 %v4755, %v480
        %v4788 = vmul.f32 %v4756, %v485
        %v4789 = vmul.f32 %v4757, %v490
        %v4790 = vmul.f32 %v4758, %v495
        %v4791 = vmul.f32 %v4759, %v500
        %v4792 = vmul.f32 %v4760, %v505
        %v4793 = vmul.f32 %v4761, %v510
        %v4794 = vmul.f32 %v4762, %v515
        %v4795 = vmul.f32 %v4763, %v520
        %v4796 = vmul.f32 %v4764, %v525
        %v4797 = vmul.f32 %v4765, %v530
        %v4798 = vmul.f32 %v4766, %v535
        %v4799 = vmul.f32 %v4767, %v540
        %v4800 = vmul.f32 %v4768, %v545
        %v4801 = vrot.slane %v4769, 7
        %v4802 = vrot.slane %v4770, 7
        %v4803 = vrot.slane %v4771, 7
        %v4804 = vrot.slane %v4772, 7
        %v4805 = vrot.slane %v4773, 7
        %v4806 = vrot.slane %v4774, 7
        %v4807 = vrot.slane %v4775, 7
        %v4808 = vrot.slane %v4776, 7
        %v4809 = vrot.slane %v4777, 7
        %v4810 = vrot.slane %v4778, 7
        %v4811 = vrot.slane %v4779, 7
        %v4812 = vrot.slane %v4780, 7
        %v4813 = vrot.slane %v4781, 7
        %v4814 = vrot.slane %v4782, 7
        %v4815 = vrot.slane %v4783, 7
        %v4816 = vrot.slane %v4784, 7
        %v4817 = vrot.slane %v4785, 7
        %v4818 = vrot.slane %v4786, 7
        %v4819 = vrot.slane %v4787, 7
        %v4820 = vrot.slane %v4788, 7
        %v4821 = vrot.slane %v4789, 7
        %v4822 = vrot.slane %v4790, 7
        %v4823 = vrot.slane %v4791, 7
        %v4824 = vrot.slane %v4792, 7
        %v4825 = vrot.slane %v4793, 7
        %v4826 = vrot.slane %v4794, 7
        %v4827 = vrot.slane %v4795, 7
        %v4828 = vrot.slane %v4796, 7
        %v4829 = vrot.slane %v4797, 7
        %v4830 = vrot.slane %v4798, 7
        %v4831 = vrot.slane %v4799, 7
        %v4832 = vrot.slane %v4800, 7
        %v4833 = vsel %vm613, %v4831, %v4832
        %v4834 = vsel %vm613, %v4830, %v4831
        %v4835 = vsel %vm613, %v4829, %v4830
        %v4836 = vsel %vm613, %v4828, %v4829
        %v4837 = vsel %vm613, %v4827, %v4828
        %v4838 = vsel %vm613, %v4826, %v4827
        %v4839 = vsel %vm613, %v4825, %v4826
        %v4840 = vsel %vm613, %v4824, %v4825
        %v4841 = vsel %vm613, %v4823, %v4824
        %v4842 = vsel %vm613, %v4822, %v4823
        %v4843 = vsel %vm613, %v4821, %v4822
        %v4844 = vsel %vm613, %v4820, %v4821
        %v4845 = vsel %vm613, %v4819, %v4820
        %v4846 = vsel %vm613, %v4818, %v4819
        %v4847 = vsel %vm613, %v4817, %v4818
        %v4848 = vsel %vm613, %v4816, %v4817
        %v4849 = vsel %vm613, %v4815, %v4816
        %v4850 = vsel %vm613, %v4814, %v4815
        %v4851 = vsel %vm613, %v4813, %v4814
        %v4852 = vsel %vm613, %v4812, %v4813
        %v4853 = vsel %vm613, %v4811, %v4812
        %v4854 = vsel %vm613, %v4810, %v4811
        %v4855 = vsel %vm613, %v4809, %v4810
        %v4856 = vsel %vm613, %v4808, %v4809
        %v4857 = vsel %vm613, %v4807, %v4808
        %v4858 = vsel %vm613, %v4806, %v4807
        %v4859 = vsel %vm613, %v4805, %v4806
        %v4860 = vsel %vm613, %v4804, %v4805
        %v4861 = vsel %vm613, %v4803, %v4804
        %v4862 = vsel %vm613, %v4802, %v4803
        %v4863 = vsel %vm613, %v4801, %v4802
        %v4864 = vsel %vm613, %v4832, %v4801
        %v4865 = vld [vmem:[%s3] sm:$0xff]
        %v4866 = vmul.f32 %v4737, %v683
        %v4867 = vmul.f32 %v4738, %v688
        %v4868 = vmul.f32 %v4739, %v693
        %v4869 = vmul.f32 %v4740, %v698
        %v4870 = vmul.f32 %v4741, %v703
        %v4871 = vmul.f32 %v4742, %v708
        %v4872 = vmul.f32 %v4743, %v713
        %v4873 = vmul.f32 %v4744, %v718
        %v4874 = vmul.f32 %v4745, %v723
        %v4875 = vmul.f32 %v4746, %v728
        %v4876 = vmul.f32 %v4747, %v733
        %v4877 = vmul.f32 %v4748, %v738
        %v4878 = vmul.f32 %v4749, %v743
        %v4879 = vmul.f32 %v4750, %v748
        %v4880 = vmul.f32 %v4751, %v753
        %v4881 = vmul.f32 %v4752, %v758
        %v4882 = vmul.f32 %v4753, %v763
        %v4883 = vmul.f32 %v4754, %v768
        %v4884 = vmul.f32 %v4755, %v773
        %v4885 = vmul.f32 %v4756, %v778
        %v4886 = vmul.f32 %v4757, %v783
        %v4887 = vmul.f32 %v4758, %v788
        %v4888 = vmul.f32 %v4759, %v793
        %v4889 = vmul.f32 %v4760, %v798
        %v4890 = vmul.f32 %v4761, %v803
        %v4891 = vmul.f32 %v4762, %v808
        %v4892 = vmul.f32 %v4763, %v813
        %v4893 = vmul.f32 %v4764, %v818
        %v4894 = vmul.f32 %v4765, %v823
        %v4895 = vmul.f32 %v4766, %v828
        %v4896 = vmul.f32 %v4767, %v833
        %v4897 = vmul.f32 %v4768, %v838
        %s4898 = scalar_lea.vmem %s3, 8
        %v4899 = vld [vmem:[%s4898] sm:$0xff]
        %v4901 = vsel %vm874, %v4896, 0
        %v4904 = vsel %vm874, %v4897, 0
        %v4907 = vsel %vm874, %v4866, 0
        %v4910 = vsel %vm874, %v4867, 0
        %v4913 = vsel %vm874, %v4868, 0
        %v4916 = vsel %vm874, %v4869, 0
        %v4919 = vsel %vm874, %v4870, 0
        %v4922 = vsel %vm874, %v4871, 0
        %v4925 = vsel %vm874, %v4872, 0
        %v4928 = vsel %vm874, %v4873, 0
        %v4931 = vsel %vm874, %v4874, 0
        %v4934 = vsel %vm874, %v4875, 0
        %v4937 = vsel %vm874, %v4876, 0
        %v4940 = vsel %vm874, %v4877, 0
        %v4943 = vsel %vm874, %v4878, 0
        %v4946 = vsel %vm874, %v4879, 0
        %v4949 = vsel %vm874, %v4880, 0
        %v4952 = vsel %vm874, %v4881, 0
        %v4955 = vsel %vm874, %v4882, 0
        %v4958 = vsel %vm874, %v4883, 0
        %v4961 = vsel %vm874, %v4884, 0
        %v4964 = vsel %vm874, %v4885, 0
        %v4967 = vsel %vm874, %v4886, 0
        %v4970 = vsel %vm874, %v4887, 0
        %v4973 = vsel %vm874, %v4888, 0
        %v4976 = vsel %vm874, %v4889, 0
        %v4979 = vsel %vm874, %v4890, 0
        %v4982 = vsel %vm874, %v4891, 0
        %v4985 = vsel %vm874, %v4892, 0
        %v4988 = vsel %vm874, %v4893, 0
        %v4991 = vsel %vm874, %v4894, 0
        %v4994 = vsel %vm874, %v4895, 0
        %4996 = vmatpush.msra.mxu0 0.0
        %4997 = vmatpush.msra.mxu0 0.0
        %4998 = vmatpush.msra.mxu0 0.0
        %4999 = vmatpush.msra.mxu0 0.0
        %5000 = vmatpush.msra.mxu0 0.0
        %5001 = vmatpush.msra.mxu0 0.0
        %5002 = vmatpush.msra.mxu0 0.0
        %5003 = vmatpush.msra.mxu0 0.0
        %5004 = vmatpush.msra.mxu0 0.0
        %5005 = vmatpush.msra.mxu0 0.0
        %5006 = vmatpush.msra.mxu0 0.0
        %5007 = vmatpush.msra.mxu0 0.0
        %5008 = vmatpush.msra.mxu0 0.0
        %5009 = vmatpush.msra.mxu0 0.0
        %5010 = vmatpush.msra.mxu0 0.0
        %5011 = vmatpush.msra.mxu0 %v4899
        %5012 = vmatmul.f32.gmra.mxu0 %v4901
        %v5013 = vpop.f32.mrf.mxu0
        %v5014 = vadd.f32 0.0, %v5013
        %5015 = vmatmul.f32.gmra.mxu0 %v4904
        %v5016 = vpop.f32.mrf.mxu0
        %v5017 = vadd.f32 0.0, %v5016
        %5018 = vmatmul.f32.gmra.mxu0 %v4907
        %v5019 = vpop.f32.mrf.mxu0
        %v5020 = vadd.f32 0.0, %v5019
        %5021 = vmatmul.f32.gmra.mxu0 %v4910
        %v5022 = vpop.f32.mrf.mxu0
        %v5023 = vadd.f32 0.0, %v5022
        %5024 = vmatmul.f32.gmra.mxu0 %v4913
        %v5025 = vpop.f32.mrf.mxu0
        %v5026 = vadd.f32 0.0, %v5025
        %5027 = vmatmul.f32.gmra.mxu0 %v4916
        %v5028 = vpop.f32.mrf.mxu0
        %v5029 = vadd.f32 0.0, %v5028
        %5030 = vmatmul.f32.gmra.mxu0 %v4919
        %v5031 = vpop.f32.mrf.mxu0
        %v5032 = vadd.f32 0.0, %v5031
        %5033 = vmatmul.f32.gmra.mxu0 %v4922
        %v5034 = vpop.f32.mrf.mxu0
        %v5035 = vadd.f32 0.0, %v5034
        %5036 = vmatmul.f32.gmra.mxu0 %v4925
        %v5037 = vpop.f32.mrf.mxu0
        %v5038 = vadd.f32 0.0, %v5037
        %5039 = vmatmul.f32.gmra.mxu0 %v4928
        %v5040 = vpop.f32.mrf.mxu0
        %v5041 = vadd.f32 0.0, %v5040
        %5042 = vmatmul.f32.gmra.mxu0 %v4931
        %v5043 = vpop.f32.mrf.mxu0
        %v5044 = vadd.f32 0.0, %v5043
        %5045 = vmatmul.f32.gmra.mxu0 %v4934
        %v5046 = vpop.f32.mrf.mxu0
        %v5047 = vadd.f32 0.0, %v5046
        %5048 = vmatmul.f32.gmra.mxu0 %v4937
        %v5049 = vpop.f32.mrf.mxu0
        %v5050 = vadd.f32 0.0, %v5049
        %5051 = vmatmul.f32.gmra.mxu0 %v4940
        %v5052 = vpop.f32.mrf.mxu0
        %v5053 = vadd.f32 0.0, %v5052
        %5054 = vmatmul.f32.gmra.mxu0 %v4943
        %v5055 = vpop.f32.mrf.mxu0
        %v5056 = vadd.f32 0.0, %v5055
        %5057 = vmatmul.f32.gmra.mxu0 %v4946
        %v5058 = vpop.f32.mrf.mxu0
        %v5059 = vadd.f32 0.0, %v5058
        %5060 = vmatmul.f32.gmra.mxu0 %v4949
        %v5061 = vpop.f32.mrf.mxu0
        %v5062 = vadd.f32 0.0, %v5061
        %5063 = vmatmul.f32.gmra.mxu0 %v4952
        %v5064 = vpop.f32.mrf.mxu0
        %v5065 = vadd.f32 0.0, %v5064
        %5066 = vmatmul.f32.gmra.mxu0 %v4955
        %v5067 = vpop.f32.mrf.mxu0
        %v5068 = vadd.f32 0.0, %v5067
        %5069 = vmatmul.f32.gmra.mxu0 %v4958
        %v5070 = vpop.f32.mrf.mxu0
        %v5071 = vadd.f32 0.0, %v5070
        %5072 = vmatmul.f32.gmra.mxu0 %v4961
        %v5073 = vpop.f32.mrf.mxu0
        %v5074 = vadd.f32 0.0, %v5073
        %5075 = vmatmul.f32.gmra.mxu0 %v4964
        %v5076 = vpop.f32.mrf.mxu0
        %v5077 = vadd.f32 0.0, %v5076
        %5078 = vmatmul.f32.gmra.mxu0 %v4967
        %v5079 = vpop.f32.mrf.mxu0
        %v5080 = vadd.f32 0.0, %v5079
        %5081 = vmatmul.f32.gmra.mxu0 %v4970
        %v5082 = vpop.f32.mrf.mxu0
        %v5083 = vadd.f32 0.0, %v5082
        %5084 = vmatmul.f32.gmra.mxu0 %v4973
        %v5085 = vpop.f32.mrf.mxu0
        %v5086 = vadd.f32 0.0, %v5085
        %5087 = vmatmul.f32.gmra.mxu0 %v4976
        %v5088 = vpop.f32.mrf.mxu0
        %v5089 = vadd.f32 0.0, %v5088
        %5090 = vmatmul.f32.gmra.mxu0 %v4979
        %v5091 = vpop.f32.mrf.mxu0
        %v5092 = vadd.f32 0.0, %v5091
        %5093 = vmatmul.f32.gmra.mxu0 %v4982
        %v5094 = vpop.f32.mrf.mxu0
        %v5095 = vadd.f32 0.0, %v5094
        %5096 = vmatmul.f32.gmra.mxu0 %v4985
        %v5097 = vpop.f32.mrf.mxu0
        %v5098 = vadd.f32 0.0, %v5097
        %5099 = vmatmul.f32.gmra.mxu0 %v4988
        %v5100 = vpop.f32.mrf.mxu0
        %v5101 = vadd.f32 0.0, %v5100
        %5102 = vmatmul.f32.gmra.mxu0 %v4991
        %v5103 = vpop.f32.mrf.mxu0
        %v5104 = vadd.f32 0.0, %v5103
        %5105 = vmatmul.f32.gmra.mxu0 %v4994
        %v5106 = vpop.f32.mrf.mxu0
        %v5107 = vadd.f32 0.0, %v5106
        %5108 = vdwg.mxu0
        %v5110 = vsel %vm874, %v4834, 0
        %v5113 = vsel %vm874, %v4833, 0
        %v5116 = vsel %vm874, %v4864, 0
        %v5119 = vsel %vm874, %v4863, 0
        %v5122 = vsel %vm874, %v4862, 0
        %v5125 = vsel %vm874, %v4861, 0
        %v5128 = vsel %vm874, %v4860, 0
        %v5131 = vsel %vm874, %v4859, 0
        %v5134 = vsel %vm874, %v4858, 0
        %v5137 = vsel %vm874, %v4857, 0
        %v5140 = vsel %vm874, %v4856, 0
        %v5143 = vsel %vm874, %v4855, 0
        %v5146 = vsel %vm874, %v4854, 0
        %v5149 = vsel %vm874, %v4853, 0
        %v5152 = vsel %vm874, %v4852, 0
        %v5155 = vsel %vm874, %v4851, 0
        %v5158 = vsel %vm874, %v4850, 0
        %v5161 = vsel %vm874, %v4849, 0
        %v5164 = vsel %vm874, %v4848, 0
        %v5167 = vsel %vm874, %v4847, 0
        %v5170 = vsel %vm874, %v4846, 0
        %v5173 = vsel %vm874, %v4845, 0
        %v5176 = vsel %vm874, %v4844, 0
        %v5179 = vsel %vm874, %v4843, 0
        %v5182 = vsel %vm874, %v4842, 0
        %v5185 = vsel %vm874, %v4841, 0
        %v5188 = vsel %vm874, %v4840, 0
        %v5191 = vsel %vm874, %v4839, 0
        %v5194 = vsel %vm874, %v4838, 0
        %v5197 = vsel %vm874, %v4837, 0
        %v5200 = vsel %vm874, %v4836, 0
        %v5203 = vsel %vm874, %v4835, 0
        %5205 = vmatpush.msra.mxu0 0.0
        %5206 = vmatpush.msra.mxu0 0.0
        %5207 = vmatpush.msra.mxu0 0.0
        %5208 = vmatpush.msra.mxu0 0.0
        %5209 = vmatpush.msra.mxu0 0.0
        %5210 = vmatpush.msra.mxu0 0.0
        %5211 = vmatpush.msra.mxu0 0.0
        %5212 = vmatpush.msra.mxu0 0.0
        %5213 = vmatpush.msra.mxu0 0.0
        %5214 = vmatpush.msra.mxu0 0.0
        %5215 = vmatpush.msra.mxu0 0.0
        %5216 = vmatpush.msra.mxu0 0.0
        %5217 = vmatpush.msra.mxu0 0.0
        %5218 = vmatpush.msra.mxu0 0.0
        %5219 = vmatpush.msra.mxu0 0.0
        %5220 = vmatpush.msra.mxu0 %v4865
        %5221 = vmatmul.f32.gmra.mxu0 %v5110
        %v5222 = vpop.f32.mrf.mxu0
        %v5223 = vadd.f32 %v5014, %v5222
        %5224 = vmatmul.f32.gmra.mxu0 %v5113
        %v5225 = vpop.f32.mrf.mxu0
        %v5226 = vadd.f32 %v5017, %v5225
        %5227 = vmatmul.f32.gmra.mxu0 %v5116
        %v5228 = vpop.f32.mrf.mxu0
        %v5229 = vadd.f32 %v5020, %v5228
        %5230 = vmatmul.f32.gmra.mxu0 %v5119
        %v5231 = vpop.f32.mrf.mxu0
        %v5232 = vadd.f32 %v5023, %v5231
        %5233 = vmatmul.f32.gmra.mxu0 %v5122
        %v5234 = vpop.f32.mrf.mxu0
        %v5235 = vadd.f32 %v5026, %v5234
        %5236 = vmatmul.f32.gmra.mxu0 %v5125
        %v5237 = vpop.f32.mrf.mxu0
        %v5238 = vadd.f32 %v5029, %v5237
        %5239 = vmatmul.f32.gmra.mxu0 %v5128
        %v5240 = vpop.f32.mrf.mxu0
        %v5241 = vadd.f32 %v5032, %v5240
        %5242 = vmatmul.f32.gmra.mxu0 %v5131
        %v5243 = vpop.f32.mrf.mxu0
        %v5244 = vadd.f32 %v5035, %v5243
        %5245 = vmatmul.f32.gmra.mxu0 %v5134
        %v5246 = vpop.f32.mrf.mxu0
        %v5247 = vadd.f32 %v5038, %v5246
        %5248 = vmatmul.f32.gmra.mxu0 %v5137
        %v5249 = vpop.f32.mrf.mxu0
        %v5250 = vadd.f32 %v5041, %v5249
        %5251 = vmatmul.f32.gmra.mxu0 %v5140
        %v5252 = vpop.f32.mrf.mxu0
        %v5253 = vadd.f32 %v5044, %v5252
        %5254 = vmatmul.f32.gmra.mxu0 %v5143
        %v5255 = vpop.f32.mrf.mxu0
        %v5256 = vadd.f32 %v5047, %v5255
        %5257 = vmatmul.f32.gmra.mxu0 %v5146
        %v5258 = vpop.f32.mrf.mxu0
        %v5259 = vadd.f32 %v5050, %v5258
        %5260 = vmatmul.f32.gmra.mxu0 %v5149
        %v5261 = vpop.f32.mrf.mxu0
        %v5262 = vadd.f32 %v5053, %v5261
        %5263 = vmatmul.f32.gmra.mxu0 %v5152
        %v5264 = vpop.f32.mrf.mxu0
        %v5265 = vadd.f32 %v5056, %v5264
        %5266 = vmatmul.f32.gmra.mxu0 %v5155
        %v5267 = vpop.f32.mrf.mxu0
        %v5268 = vadd.f32 %v5059, %v5267
        %5269 = vmatmul.f32.gmra.mxu0 %v5158
        %v5270 = vpop.f32.mrf.mxu0
        %v5271 = vadd.f32 %v5062, %v5270
        %5272 = vmatmul.f32.gmra.mxu0 %v5161
        %v5273 = vpop.f32.mrf.mxu0
        %v5274 = vadd.f32 %v5065, %v5273
        %5275 = vmatmul.f32.gmra.mxu0 %v5164
        %v5276 = vpop.f32.mrf.mxu0
        %v5277 = vadd.f32 %v5068, %v5276
        %5278 = vmatmul.f32.gmra.mxu0 %v5167
        %v5279 = vpop.f32.mrf.mxu0
        %v5280 = vadd.f32 %v5071, %v5279
        %5281 = vmatmul.f32.gmra.mxu0 %v5170
        %v5282 = vpop.f32.mrf.mxu0
        %v5283 = vadd.f32 %v5074, %v5282
        %5284 = vmatmul.f32.gmra.mxu0 %v5173
        %v5285 = vpop.f32.mrf.mxu0
        %v5286 = vadd.f32 %v5077, %v5285
        %5287 = vmatmul.f32.gmra.mxu0 %v5176
        %v5288 = vpop.f32.mrf.mxu0
        %v5289 = vadd.f32 %v5080, %v5288
        %5290 = vmatmul.f32.gmra.mxu0 %v5179
        %v5291 = vpop.f32.mrf.mxu0
        %v5292 = vadd.f32 %v5083, %v5291
        %5293 = vmatmul.f32.gmra.mxu0 %v5182
        %v5294 = vpop.f32.mrf.mxu0
        %v5295 = vadd.f32 %v5086, %v5294
        %5296 = vmatmul.f32.gmra.mxu0 %v5185
        %v5297 = vpop.f32.mrf.mxu0
        %v5298 = vadd.f32 %v5089, %v5297
        %5299 = vmatmul.f32.gmra.mxu0 %v5188
        %v5300 = vpop.f32.mrf.mxu0
        %v5301 = vadd.f32 %v5092, %v5300
        %5302 = vmatmul.f32.gmra.mxu0 %v5191
        %v5303 = vpop.f32.mrf.mxu0
        %v5304 = vadd.f32 %v5095, %v5303
        %5305 = vmatmul.f32.gmra.mxu0 %v5194
        %v5306 = vpop.f32.mrf.mxu0
        %v5307 = vadd.f32 %v5098, %v5306
        %5308 = vmatmul.f32.gmra.mxu0 %v5197
        %v5309 = vpop.f32.mrf.mxu0
        %v5310 = vadd.f32 %v5101, %v5309
        %5311 = vmatmul.f32.gmra.mxu0 %v5200
        %v5312 = vpop.f32.mrf.mxu0
        %v5313 = vadd.f32 %v5104, %v5312
        %5314 = vmatmul.f32.gmra.mxu0 %v5203
        %v5315 = vpop.f32.mrf.mxu0
        %v5316 = vadd.f32 %v5107, %v5315
        %5317 = vdwg.mxu0
        %v5318 = vmul.f32 %v4737, %v1329
        %v5319 = vmul.f32 %v4738, %v1334
        %v5320 = vmul.f32 %v4739, %v1339
        %v5321 = vmul.f32 %v4740, %v1344
        %v5322 = vmul.f32 %v4741, %v1349
        %v5323 = vmul.f32 %v4742, %v1354
        %v5324 = vmul.f32 %v4743, %v1359
        %v5325 = vmul.f32 %v4744, %v1364
        %v5326 = vmul.f32 %v4745, %v1369
        %v5327 = vmul.f32 %v4746, %v1374
        %v5328 = vmul.f32 %v4747, %v1379
        %v5329 = vmul.f32 %v4748, %v1384
        %v5330 = vmul.f32 %v4749, %v1389
        %v5331 = vmul.f32 %v4750, %v1394
        %v5332 = vmul.f32 %v4751, %v1399
        %v5333 = vmul.f32 %v4752, %v1404
        %v5334 = vmul.f32 %v4753, %v1409
        %v5335 = vmul.f32 %v4754, %v1414
        %v5336 = vmul.f32 %v4755, %v1419
        %v5337 = vmul.f32 %v4756, %v1424
        %v5338 = vmul.f32 %v4757, %v1429
        %v5339 = vmul.f32 %v4758, %v1434
        %v5340 = vmul.f32 %v4759, %v1439
        %v5341 = vmul.f32 %v4760, %v1444
        %v5342 = vmul.f32 %v4761, %v1449
        %v5343 = vmul.f32 %v4762, %v1454
        %v5344 = vmul.f32 %v4763, %v1459
        %v5345 = vmul.f32 %v4764, %v1464
        %v5346 = vmul.f32 %v4765, %v1469
        %v5347 = vmul.f32 %v4766, %v1474
        %v5348 = vmul.f32 %v4767, %v1479
        %v5349 = vmul.f32 %v4768, %v1484
        %v5350 = vrot.slane %v5318, 1
        %v5351 = vrot.slane %v5319, 1
        %v5352 = vrot.slane %v5320, 1
        %v5353 = vrot.slane %v5321, 1
        %v5354 = vrot.slane %v5322, 1
        %v5355 = vrot.slane %v5323, 1
        %v5356 = vrot.slane %v5324, 1
        %v5357 = vrot.slane %v5325, 1
        %v5358 = vrot.slane %v5326, 1
        %v5359 = vrot.slane %v5327, 1
        %v5360 = vrot.slane %v5328, 1
        %v5361 = vrot.slane %v5329, 1
        %v5362 = vrot.slane %v5330, 1
        %v5363 = vrot.slane %v5331, 1
        %v5364 = vrot.slane %v5332, 1
        %v5365 = vrot.slane %v5333, 1
        %v5366 = vrot.slane %v5334, 1
        %v5367 = vrot.slane %v5335, 1
        %v5368 = vrot.slane %v5336, 1
        %v5369 = vrot.slane %v5337, 1
        %v5370 = vrot.slane %v5338, 1
        %v5371 = vrot.slane %v5339, 1
        %v5372 = vrot.slane %v5340, 1
        %v5373 = vrot.slane %v5341, 1
        %v5374 = vrot.slane %v5342, 1
        %v5375 = vrot.slane %v5343, 1
        %v5376 = vrot.slane %v5344, 1
        %v5377 = vrot.slane %v5345, 1
        %v5378 = vrot.slane %v5346, 1
        %v5379 = vrot.slane %v5347, 1
        %v5380 = vrot.slane %v5348, 1
        %v5381 = vrot.slane %v5349, 1
        %v5382 = vsel %vm1550, %v5380, %v5381
        %v5383 = vsel %vm1550, %v5379, %v5380
        %v5384 = vsel %vm1550, %v5378, %v5379
        %v5385 = vsel %vm1550, %v5377, %v5378
        %v5386 = vsel %vm1550, %v5376, %v5377
        %v5387 = vsel %vm1550, %v5375, %v5376
        %v5388 = vsel %vm1550, %v5374, %v5375
        %v5389 = vsel %vm1550, %v5373, %v5374
        %v5390 = vsel %vm1550, %v5372, %v5373
        %v5391 = vsel %vm1550, %v5371, %v5372
        %v5392 = vsel %vm1550, %v5370, %v5371
        %v5393 = vsel %vm1550, %v5369, %v5370
        %v5394 = vsel %vm1550, %v5368, %v5369
        %v5395 = vsel %vm1550, %v5367, %v5368
        %v5396 = vsel %vm1550, %v5366, %v5367
        %v5397 = vsel %vm1550, %v5365, %v5366
        %v5398 = vsel %vm1550, %v5364, %v5365
        %v5399 = vsel %vm1550, %v5363, %v5364
        %v5400 = vsel %vm1550, %v5362, %v5363
        %v5401 = vsel %vm1550, %v5361, %v5362
        %v5402 = vsel %vm1550, %v5360, %v5361
        %v5403 = vsel %vm1550, %v5359, %v5360
        %v5404 = vsel %vm1550, %v5358, %v5359
        %v5405 = vsel %vm1550, %v5357, %v5358
        %v5406 = vsel %vm1550, %v5356, %v5357
        %v5407 = vsel %vm1550, %v5355, %v5356
        %v5408 = vsel %vm1550, %v5354, %v5355
        %v5409 = vsel %vm1550, %v5353, %v5354
        %v5410 = vsel %vm1550, %v5352, %v5353
        %v5411 = vsel %vm1550, %v5351, %v5352
        %v5412 = vsel %vm1550, %v5350, %v5351
        %v5413 = vsel %vm1550, %v5381, %v5350
        %s5414 = scalar_lea.vmem %s3, 16
        %v5415 = vld [vmem:[%s5414] sm:$0xff]
        %v5417 = vsel %vm874, %v5382, 0
        %v5420 = vsel %vm874, %v5413, 0
        %v5423 = vsel %vm874, %v5412, 0
        %v5426 = vsel %vm874, %v5411, 0
        %v5429 = vsel %vm874, %v5410, 0
        %v5432 = vsel %vm874, %v5409, 0
        %v5435 = vsel %vm874, %v5408, 0
        %v5438 = vsel %vm874, %v5407, 0
        %v5441 = vsel %vm874, %v5406, 0
        %v5444 = vsel %vm874, %v5405, 0
        %v5447 = vsel %vm874, %v5404, 0
        %v5450 = vsel %vm874, %v5403, 0
        %v5453 = vsel %vm874, %v5402, 0
        %v5456 = vsel %vm874, %v5401, 0
        %v5459 = vsel %vm874, %v5400, 0
        %v5462 = vsel %vm874, %v5399, 0
        %v5465 = vsel %vm874, %v5398, 0
        %v5468 = vsel %vm874, %v5397, 0
        %v5471 = vsel %vm874, %v5396, 0
        %v5474 = vsel %vm874, %v5395, 0
        %v5477 = vsel %vm874, %v5394, 0
        %v5480 = vsel %vm874, %v5393, 0
        %v5483 = vsel %vm874, %v5392, 0
        %v5486 = vsel %vm874, %v5391, 0
        %v5489 = vsel %vm874, %v5390, 0
        %v5492 = vsel %vm874, %v5389, 0
        %v5495 = vsel %vm874, %v5388, 0
        %v5498 = vsel %vm874, %v5387, 0
        %v5501 = vsel %vm874, %v5386, 0
        %v5504 = vsel %vm874, %v5385, 0
        %v5507 = vsel %vm874, %v5384, 0
        %v5510 = vsel %vm874, %v5383, 0
        %5512 = vmatpush.msra.mxu0 0.0
        %5513 = vmatpush.msra.mxu0 0.0
        %5514 = vmatpush.msra.mxu0 0.0
        %5515 = vmatpush.msra.mxu0 0.0
        %5516 = vmatpush.msra.mxu0 0.0
        %5517 = vmatpush.msra.mxu0 0.0
        %5518 = vmatpush.msra.mxu0 0.0
        %5519 = vmatpush.msra.mxu0 0.0
        %5520 = vmatpush.msra.mxu0 0.0
        %5521 = vmatpush.msra.mxu0 0.0
        %5522 = vmatpush.msra.mxu0 0.0
        %5523 = vmatpush.msra.mxu0 0.0
        %5524 = vmatpush.msra.mxu0 0.0
        %5525 = vmatpush.msra.mxu0 0.0
        %5526 = vmatpush.msra.mxu0 0.0
        %5527 = vmatpush.msra.mxu0 %v5415
        %5528 = vmatmul.f32.gmra.mxu0 %v5417
        %v5529 = vpop.f32.mrf.mxu0
        %v5530 = vadd.f32 0.0, %v5529
        %5531 = vmatmul.f32.gmra.mxu0 %v5420
        %v5532 = vpop.f32.mrf.mxu0
        %v5533 = vadd.f32 0.0, %v5532
        %5534 = vmatmul.f32.gmra.mxu0 %v5423
        %v5535 = vpop.f32.mrf.mxu0
        %v5536 = vadd.f32 0.0, %v5535
        %5537 = vmatmul.f32.gmra.mxu0 %v5426
        %v5538 = vpop.f32.mrf.mxu0
        %v5539 = vadd.f32 0.0, %v5538
        %5540 = vmatmul.f32.gmra.mxu0 %v5429
        %v5541 = vpop.f32.mrf.mxu0
        %v5542 = vadd.f32 0.0, %v5541
        %5543 = vmatmul.f32.gmra.mxu0 %v5432
        %v5544 = vpop.f32.mrf.mxu0
        %v5545 = vadd.f32 0.0, %v5544
        %5546 = vmatmul.f32.gmra.mxu0 %v5435
        %v5547 = vpop.f32.mrf.mxu0
        %v5548 = vadd.f32 0.0, %v5547
        %5549 = vmatmul.f32.gmra.mxu0 %v5438
        %v5550 = vpop.f32.mrf.mxu0
        %v5551 = vadd.f32 0.0, %v5550
        %5552 = vmatmul.f32.gmra.mxu0 %v5441
        %v5553 = vpop.f32.mrf.mxu0
        %v5554 = vadd.f32 0.0, %v5553
        %5555 = vmatmul.f32.gmra.mxu0 %v5444
        %v5556 = vpop.f32.mrf.mxu0
        %v5557 = vadd.f32 0.0, %v5556
        %5558 = vmatmul.f32.gmra.mxu0 %v5447
        %v5559 = vpop.f32.mrf.mxu0
        %v5560 = vadd.f32 0.0, %v5559
        %5561 = vmatmul.f32.gmra.mxu0 %v5450
        %v5562 = vpop.f32.mrf.mxu0
        %v5563 = vadd.f32 0.0, %v5562
        %5564 = vmatmul.f32.gmra.mxu0 %v5453
        %v5565 = vpop.f32.mrf.mxu0
        %v5566 = vadd.f32 0.0, %v5565
        %5567 = vmatmul.f32.gmra.mxu0 %v5456
        %v5568 = vpop.f32.mrf.mxu0
        %v5569 = vadd.f32 0.0, %v5568
        %5570 = vmatmul.f32.gmra.mxu0 %v5459
        %v5571 = vpop.f32.mrf.mxu0
        %v5572 = vadd.f32 0.0, %v5571
        %5573 = vmatmul.f32.gmra.mxu0 %v5462
        %v5574 = vpop.f32.mrf.mxu0
        %v5575 = vadd.f32 0.0, %v5574
        %5576 = vmatmul.f32.gmra.mxu0 %v5465
        %v5577 = vpop.f32.mrf.mxu0
        %v5578 = vadd.f32 0.0, %v5577
        %5579 = vmatmul.f32.gmra.mxu0 %v5468
        %v5580 = vpop.f32.mrf.mxu0
        %v5581 = vadd.f32 0.0, %v5580
        %5582 = vmatmul.f32.gmra.mxu0 %v5471
        %v5583 = vpop.f32.mrf.mxu0
        %v5584 = vadd.f32 0.0, %v5583
        %5585 = vmatmul.f32.gmra.mxu0 %v5474
        %v5586 = vpop.f32.mrf.mxu0
        %v5587 = vadd.f32 0.0, %v5586
        %5588 = vmatmul.f32.gmra.mxu0 %v5477
        %v5589 = vpop.f32.mrf.mxu0
        %v5590 = vadd.f32 0.0, %v5589
        %5591 = vmatmul.f32.gmra.mxu0 %v5480
        %v5592 = vpop.f32.mrf.mxu0
        %v5593 = vadd.f32 0.0, %v5592
        %5594 = vmatmul.f32.gmra.mxu0 %v5483
        %v5595 = vpop.f32.mrf.mxu0
        %v5596 = vadd.f32 0.0, %v5595
        %5597 = vmatmul.f32.gmra.mxu0 %v5486
        %v5598 = vpop.f32.mrf.mxu0
        %v5599 = vadd.f32 0.0, %v5598
        %5600 = vmatmul.f32.gmra.mxu0 %v5489
        %v5601 = vpop.f32.mrf.mxu0
        %v5602 = vadd.f32 0.0, %v5601
        %5603 = vmatmul.f32.gmra.mxu0 %v5492
        %v5604 = vpop.f32.mrf.mxu0
        %v5605 = vadd.f32 0.0, %v5604
        %5606 = vmatmul.f32.gmra.mxu0 %v5495
        %v5607 = vpop.f32.mrf.mxu0
        %v5608 = vadd.f32 0.0, %v5607
        %5609 = vmatmul.f32.gmra.mxu0 %v5498
        %v5610 = vpop.f32.mrf.mxu0
        %v5611 = vadd.f32 0.0, %v5610
        %5612 = vmatmul.f32.gmra.mxu0 %v5501
        %v5613 = vpop.f32.mrf.mxu0
        %v5614 = vadd.f32 0.0, %v5613
        %5615 = vmatmul.f32.gmra.mxu0 %v5504
        %v5616 = vpop.f32.mrf.mxu0
        %v5617 = vadd.f32 0.0, %v5616
        %5618 = vmatmul.f32.gmra.mxu0 %v5507
        %v5619 = vpop.f32.mrf.mxu0
        %v5620 = vadd.f32 0.0, %v5619
        %5621 = vmatmul.f32.gmra.mxu0 %v5510
        %v5622 = vpop.f32.mrf.mxu0
        %v5623 = vadd.f32 0.0, %v5622
        %5624 = vdwg.mxu0
        %v5625 = vadd.f32 %v5223, %v5530
        %v5626 = vadd.f32 %v5226, %v5533
        %v5627 = vadd.f32 %v5229, %v5536
        %v5628 = vadd.f32 %v5232, %v5539
        %v5629 = vadd.f32 %v5235, %v5542
        %v5630 = vadd.f32 %v5238, %v5545
        %v5631 = vadd.f32 %v5241, %v5548
        %v5632 = vadd.f32 %v5244, %v5551
        %v5633 = vadd.f32 %v5247, %v5554
        %v5634 = vadd.f32 %v5250, %v5557
        %v5635 = vadd.f32 %v5253, %v5560
        %v5636 = vadd.f32 %v5256, %v5563
        %v5637 = vadd.f32 %v5259, %v5566
        %v5638 = vadd.f32 %v5262, %v5569
        %v5639 = vadd.f32 %v5265, %v5572
        %v5640 = vadd.f32 %v5268, %v5575
        %v5641 = vadd.f32 %v5271, %v5578
        %v5642 = vadd.f32 %v5274, %v5581
        %v5643 = vadd.f32 %v5277, %v5584
        %v5644 = vadd.f32 %v5280, %v5587
        %v5645 = vadd.f32 %v5283, %v5590
        %v5646 = vadd.f32 %v5286, %v5593
        %v5647 = vadd.f32 %v5289, %v5596
        %v5648 = vadd.f32 %v5292, %v5599
        %v5649 = vadd.f32 %v5295, %v5602
        %v5650 = vadd.f32 %v5298, %v5605
        %v5651 = vadd.f32 %v5301, %v5608
        %v5652 = vadd.f32 %v5304, %v5611
        %v5653 = vadd.f32 %v5307, %v5614
        %v5654 = vadd.f32 %v5310, %v5617
        %v5655 = vadd.f32 %v5313, %v5620
        %v5656 = vadd.f32 %v5316, %v5623
        %v5657 = vmul.f32 %v4737, %v1862
        %v5658 = vmul.f32 %v4738, %v1867
        %v5659 = vmul.f32 %v4739, %v1872
        %v5660 = vmul.f32 %v4740, %v1877
        %v5661 = vmul.f32 %v4741, %v1882
        %v5662 = vmul.f32 %v4742, %v1887
        %v5663 = vmul.f32 %v4743, %v1892
        %v5664 = vmul.f32 %v4744, %v1897
        %v5665 = vmul.f32 %v4745, %v1902
        %v5666 = vmul.f32 %v4746, %v1907
        %v5667 = vmul.f32 %v4747, %v1912
        %v5668 = vmul.f32 %v4748, %v1917
        %v5669 = vmul.f32 %v4749, %v1922
        %v5670 = vmul.f32 %v4750, %v1927
        %v5671 = vmul.f32 %v4751, %v1932
        %v5672 = vmul.f32 %v4752, %v1937
        %v5673 = vmul.f32 %v4753, %v1942
        %v5674 = vmul.f32 %v4754, %v1947
        %v5675 = vmul.f32 %v4755, %v1952
        %v5676 = vmul.f32 %v4756, %v1957
        %v5677 = vmul.f32 %v4757, %v1962
        %v5678 = vmul.f32 %v4758, %v1967
        %v5679 = vmul.f32 %v4759, %v1972
        %v5680 = vmul.f32 %v4760, %v1977
        %v5681 = vmul.f32 %v4761, %v1982
        %v5682 = vmul.f32 %v4762, %v1987
        %v5683 = vmul.f32 %v4763, %v1992
        %v5684 = vmul.f32 %v4764, %v1997
        %v5685 = vmul.f32 %v4765, %v2002
        %v5686 = vmul.f32 %v4766, %v2007
        %v5687 = vmul.f32 %v4767, %v2012
        %v5688 = vmul.f32 %v4768, %v2017
        %v5689 = vrot.slane %v5657, 7
        %v5690 = vrot.slane %v5658, 7
        %v5691 = vrot.slane %v5659, 7
        %v5692 = vrot.slane %v5660, 7
        %v5693 = vrot.slane %v5661, 7
        %v5694 = vrot.slane %v5662, 7
        %v5695 = vrot.slane %v5663, 7
        %v5696 = vrot.slane %v5664, 7
        %v5697 = vrot.slane %v5665, 7
        %v5698 = vrot.slane %v5666, 7
        %v5699 = vrot.slane %v5667, 7
        %v5700 = vrot.slane %v5668, 7
        %v5701 = vrot.slane %v5669, 7
        %v5702 = vrot.slane %v5670, 7
        %v5703 = vrot.slane %v5671, 7
        %v5704 = vrot.slane %v5672, 7
        %v5705 = vrot.slane %v5673, 7
        %v5706 = vrot.slane %v5674, 7
        %v5707 = vrot.slane %v5675, 7
        %v5708 = vrot.slane %v5676, 7
        %v5709 = vrot.slane %v5677, 7
        %v5710 = vrot.slane %v5678, 7
        %v5711 = vrot.slane %v5679, 7
        %v5712 = vrot.slane %v5680, 7
        %v5713 = vrot.slane %v5681, 7
        %v5714 = vrot.slane %v5682, 7
        %v5715 = vrot.slane %v5683, 7
        %v5716 = vrot.slane %v5684, 7
        %v5717 = vrot.slane %v5685, 7
        %v5718 = vrot.slane %v5686, 7
        %v5719 = vrot.slane %v5687, 7
        %v5720 = vrot.slane %v5688, 7
        %v5721 = vsel %vm613, %v5719, %v5720
        %v5722 = vsel %vm613, %v5718, %v5719
        %v5723 = vsel %vm613, %v5717, %v5718
        %v5724 = vsel %vm613, %v5716, %v5717
        %v5725 = vsel %vm613, %v5715, %v5716
        %v5726 = vsel %vm613, %v5714, %v5715
        %v5727 = vsel %vm613, %v5713, %v5714
        %v5728 = vsel %vm613, %v5712, %v5713
        %v5729 = vsel %vm613, %v5711, %v5712
        %v5730 = vsel %vm613, %v5710, %v5711
        %v5731 = vsel %vm613, %v5709, %v5710
        %v5732 = vsel %vm613, %v5708, %v5709
        %v5733 = vsel %vm613, %v5707, %v5708
        %v5734 = vsel %vm613, %v5706, %v5707
        %v5735 = vsel %vm613, %v5705, %v5706
        %v5736 = vsel %vm613, %v5704, %v5705
        %v5737 = vsel %vm613, %v5703, %v5704
        %v5738 = vsel %vm613, %v5702, %v5703
        %v5739 = vsel %vm613, %v5701, %v5702
        %v5740 = vsel %vm613, %v5700, %v5701
        %v5741 = vsel %vm613, %v5699, %v5700
        %v5742 = vsel %vm613, %v5698, %v5699
        %v5743 = vsel %vm613, %v5697, %v5698
        %v5744 = vsel %vm613, %v5696, %v5697
        %v5745 = vsel %vm613, %v5695, %v5696
        %v5746 = vsel %vm613, %v5694, %v5695
        %v5747 = vsel %vm613, %v5693, %v5694
        %v5748 = vsel %vm613, %v5692, %v5693
        %v5749 = vsel %vm613, %v5691, %v5692
        %v5750 = vsel %vm613, %v5690, %v5691
        %v5751 = vsel %vm613, %v5689, %v5690
        %v5752 = vsel %vm613, %v5720, %v5689
        %s5753 = scalar_lea.vmem %s3, 24
        %v5754 = vld [vmem:[%s5753] sm:$0xff]
        %v5756 = vsel %vm874, %v5752, 0
        %v5759 = vsel %vm874, %v5751, 0
        %v5762 = vsel %vm874, %v5750, 0
        %v5765 = vsel %vm874, %v5749, 0
        %v5768 = vsel %vm874, %v5748, 0
        %v5771 = vsel %vm874, %v5747, 0
        %v5774 = vsel %vm874, %v5746, 0
        %v5777 = vsel %vm874, %v5745, 0
        %v5780 = vsel %vm874, %v5744, 0
        %v5783 = vsel %vm874, %v5743, 0
        %v5786 = vsel %vm874, %v5742, 0
        %v5789 = vsel %vm874, %v5741, 0
        %v5792 = vsel %vm874, %v5740, 0
        %v5795 = vsel %vm874, %v5739, 0
        %v5798 = vsel %vm874, %v5738, 0
        %v5801 = vsel %vm874, %v5737, 0
        %v5804 = vsel %vm874, %v5736, 0
        %v5807 = vsel %vm874, %v5735, 0
        %v5810 = vsel %vm874, %v5734, 0
        %v5813 = vsel %vm874, %v5733, 0
        %v5816 = vsel %vm874, %v5732, 0
        %v5819 = vsel %vm874, %v5731, 0
        %v5822 = vsel %vm874, %v5730, 0
        %v5825 = vsel %vm874, %v5729, 0
        %v5828 = vsel %vm874, %v5728, 0
        %v5831 = vsel %vm874, %v5727, 0
        %v5834 = vsel %vm874, %v5726, 0
        %v5837 = vsel %vm874, %v5725, 0
        %v5840 = vsel %vm874, %v5724, 0
        %v5843 = vsel %vm874, %v5723, 0
        %v5846 = vsel %vm874, %v5722, 0
        %v5849 = vsel %vm874, %v5721, 0
        %5851 = vmatpush.msra.mxu0 0.0
        %5852 = vmatpush.msra.mxu0 0.0
        %5853 = vmatpush.msra.mxu0 0.0
        %5854 = vmatpush.msra.mxu0 0.0
        %5855 = vmatpush.msra.mxu0 0.0
        %5856 = vmatpush.msra.mxu0 0.0
        %5857 = vmatpush.msra.mxu0 0.0
        %5858 = vmatpush.msra.mxu0 0.0
        %5859 = vmatpush.msra.mxu0 0.0
        %5860 = vmatpush.msra.mxu0 0.0
        %5861 = vmatpush.msra.mxu0 0.0
        %5862 = vmatpush.msra.mxu0 0.0
        %5863 = vmatpush.msra.mxu0 0.0
        %5864 = vmatpush.msra.mxu0 0.0
        %5865 = vmatpush.msra.mxu0 0.0
        %5866 = vmatpush.msra.mxu0 %v5754
        %5867 = vmatmul.f32.gmra.mxu0 %v5756
        %v5868 = vpop.f32.mrf.mxu0
        %v5869 = vadd.f32 0.0, %v5868
        %5870 = vmatmul.f32.gmra.mxu0 %v5759
        %v5871 = vpop.f32.mrf.mxu0
        %v5872 = vadd.f32 0.0, %v5871
        %5873 = vmatmul.f32.gmra.mxu0 %v5762
        %v5874 = vpop.f32.mrf.mxu0
        %v5875 = vadd.f32 0.0, %v5874
        %5876 = vmatmul.f32.gmra.mxu0 %v5765
        %v5877 = vpop.f32.mrf.mxu0
        %v5878 = vadd.f32 0.0, %v5877
        %5879 = vmatmul.f32.gmra.mxu0 %v5768
        %v5880 = vpop.f32.mrf.mxu0
        %v5881 = vadd.f32 0.0, %v5880
        %5882 = vmatmul.f32.gmra.mxu0 %v5771
        %v5883 = vpop.f32.mrf.mxu0
        %v5884 = vadd.f32 0.0, %v5883
        %5885 = vmatmul.f32.gmra.mxu0 %v5774
        %v5886 = vpop.f32.mrf.mxu0
        %v5887 = vadd.f32 0.0, %v5886
        %5888 = vmatmul.f32.gmra.mxu0 %v5777
        %v5889 = vpop.f32.mrf.mxu0
        %v5890 = vadd.f32 0.0, %v5889
        %5891 = vmatmul.f32.gmra.mxu0 %v5780
        %v5892 = vpop.f32.mrf.mxu0
        %v5893 = vadd.f32 0.0, %v5892
        %5894 = vmatmul.f32.gmra.mxu0 %v5783
        %v5895 = vpop.f32.mrf.mxu0
        %v5896 = vadd.f32 0.0, %v5895
        %5897 = vmatmul.f32.gmra.mxu0 %v5786
        %v5898 = vpop.f32.mrf.mxu0
        %v5899 = vadd.f32 0.0, %v5898
        %5900 = vmatmul.f32.gmra.mxu0 %v5789
        %v5901 = vpop.f32.mrf.mxu0
        %v5902 = vadd.f32 0.0, %v5901
        %5903 = vmatmul.f32.gmra.mxu0 %v5792
        %v5904 = vpop.f32.mrf.mxu0
        %v5905 = vadd.f32 0.0, %v5904
        %5906 = vmatmul.f32.gmra.mxu0 %v5795
        %v5907 = vpop.f32.mrf.mxu0
        %v5908 = vadd.f32 0.0, %v5907
        %5909 = vmatmul.f32.gmra.mxu0 %v5798
        %v5910 = vpop.f32.mrf.mxu0
        %v5911 = vadd.f32 0.0, %v5910
        %5912 = vmatmul.f32.gmra.mxu0 %v5801
        %v5913 = vpop.f32.mrf.mxu0
        %v5914 = vadd.f32 0.0, %v5913
        %5915 = vmatmul.f32.gmra.mxu0 %v5804
        %v5916 = vpop.f32.mrf.mxu0
        %v5917 = vadd.f32 0.0, %v5916
        %5918 = vmatmul.f32.gmra.mxu0 %v5807
        %v5919 = vpop.f32.mrf.mxu0
        %v5920 = vadd.f32 0.0, %v5919
        %5921 = vmatmul.f32.gmra.mxu0 %v5810
        %v5922 = vpop.f32.mrf.mxu0
        %v5923 = vadd.f32 0.0, %v5922
        %5924 = vmatmul.f32.gmra.mxu0 %v5813
        %v5925 = vpop.f32.mrf.mxu0
        %v5926 = vadd.f32 0.0, %v5925
        %5927 = vmatmul.f32.gmra.mxu0 %v5816
        %v5928 = vpop.f32.mrf.mxu0
        %v5929 = vadd.f32 0.0, %v5928
        %5930 = vmatmul.f32.gmra.mxu0 %v5819
        %v5931 = vpop.f32.mrf.mxu0
        %v5932 = vadd.f32 0.0, %v5931
        %5933 = vmatmul.f32.gmra.mxu0 %v5822
        %v5934 = vpop.f32.mrf.mxu0
        %v5935 = vadd.f32 0.0, %v5934
        %5936 = vmatmul.f32.gmra.mxu0 %v5825
        %v5937 = vpop.f32.mrf.mxu0
        %v5938 = vadd.f32 0.0, %v5937
        %5939 = vmatmul.f32.gmra.mxu0 %v5828
        %v5940 = vpop.f32.mrf.mxu0
        %v5941 = vadd.f32 0.0, %v5940
        %5942 = vmatmul.f32.gmra.mxu0 %v5831
        %v5943 = vpop.f32.mrf.mxu0
        %v5944 = vadd.f32 0.0, %v5943
        %5945 = vmatmul.f32.gmra.mxu0 %v5834
        %v5946 = vpop.f32.mrf.mxu0
        %v5947 = vadd.f32 0.0, %v5946
        %5948 = vmatmul.f32.gmra.mxu0 %v5837
        %v5949 = vpop.f32.mrf.mxu0
        %v5950 = vadd.f32 0.0, %v5949
        %5951 = vmatmul.f32.gmra.mxu0 %v5840
        %v5952 = vpop.f32.mrf.mxu0
        %v5953 = vadd.f32 0.0, %v5952
        %5954 = vmatmul.f32.gmra.mxu0 %v5843
        %v5955 = vpop.f32.mrf.mxu0
        %v5956 = vadd.f32 0.0, %v5955
        %5957 = vmatmul.f32.gmra.mxu0 %v5846
        %v5958 = vpop.f32.mrf.mxu0
        %v5959 = vadd.f32 0.0, %v5958
        %5960 = vmatmul.f32.gmra.mxu0 %v5849
        %v5961 = vpop.f32.mrf.mxu0
        %v5962 = vadd.f32 0.0, %v5961
        %5963 = vdwg.mxu0
        %v5964 = vadd.f32 %v5625, %v5869
        %v5965 = vadd.f32 %v5626, %v5872
        %v5966 = vadd.f32 %v5627, %v5875
        %v5967 = vadd.f32 %v5628, %v5878
        %v5968 = vadd.f32 %v5629, %v5881
        %v5969 = vadd.f32 %v5630, %v5884
        %v5970 = vadd.f32 %v5631, %v5887
        %v5971 = vadd.f32 %v5632, %v5890
        %v5972 = vadd.f32 %v5633, %v5893
        %v5973 = vadd.f32 %v5634, %v5896
        %v5974 = vadd.f32 %v5635, %v5899
        %v5975 = vadd.f32 %v5636, %v5902
        %v5976 = vadd.f32 %v5637, %v5905
        %v5977 = vadd.f32 %v5638, %v5908
        %v5978 = vadd.f32 %v5639, %v5911
        %v5979 = vadd.f32 %v5640, %v5914
        %v5980 = vadd.f32 %v5641, %v5917
        %v5981 = vadd.f32 %v5642, %v5920
        %v5982 = vadd.f32 %v5643, %v5923
        %v5983 = vadd.f32 %v5644, %v5926
        %v5984 = vadd.f32 %v5645, %v5929
        %v5985 = vadd.f32 %v5646, %v5932
        %v5986 = vadd.f32 %v5647, %v5935
        %v5987 = vadd.f32 %v5648, %v5938
        %v5988 = vadd.f32 %v5649, %v5941
        %v5989 = vadd.f32 %v5650, %v5944
        %v5990 = vadd.f32 %v5651, %v5947
        %v5991 = vadd.f32 %v5652, %v5950
        %v5992 = vadd.f32 %v5653, %v5953
        %v5993 = vadd.f32 %v5654, %v5956
        %v5994 = vadd.f32 %v5655, %v5959
        %v5995 = vadd.f32 %v5656, %v5962
        %s5996 = scalar_lea.vmem %s3, 32
        %v5997 = vld [vmem:[%s5996] sm:$0xff]
        %v5999 = vsel %vm874, %v4737, 0
        %v6002 = vsel %vm874, %v4738, 0
        %v6005 = vsel %vm874, %v4739, 0
        %v6008 = vsel %vm874, %v4740, 0
        %v6011 = vsel %vm874, %v4741, 0
        %v6014 = vsel %vm874, %v4742, 0
        %v6017 = vsel %vm874, %v4743, 0
        %v6020 = vsel %vm874, %v4744, 0
        %v6023 = vsel %vm874, %v4745, 0
        %v6026 = vsel %vm874, %v4746, 0
        %v6029 = vsel %vm874, %v4747, 0
        %v6032 = vsel %vm874, %v4748, 0
        %v6035 = vsel %vm874, %v4749, 0
        %v6038 = vsel %vm874, %v4750, 0
        %v6041 = vsel %vm874, %v4751, 0
        %v6044 = vsel %vm874, %v4752, 0
        %v6047 = vsel %vm874, %v4753, 0
        %v6050 = vsel %vm874, %v4754, 0
        %v6053 = vsel %vm874, %v4755, 0
        %v6056 = vsel %vm874, %v4756, 0
        %v6059 = vsel %vm874, %v4757, 0
        %v6062 = vsel %vm874, %v4758, 0
        %v6065 = vsel %vm874, %v4759, 0
        %v6068 = vsel %vm874, %v4760, 0
        %v6071 = vsel %vm874, %v4761, 0
        %v6074 = vsel %vm874, %v4762, 0
        %v6077 = vsel %vm874, %v4763, 0
        %v6080 = vsel %vm874, %v4764, 0
        %v6083 = vsel %vm874, %v4765, 0
        %v6086 = vsel %vm874, %v4766, 0
        %v6089 = vsel %vm874, %v4767, 0
        %v6092 = vsel %vm874, %v4768, 0
        %6094 = vmatpush.msra.mxu0 0.0
        %6095 = vmatpush.msra.mxu0 0.0
        %6096 = vmatpush.msra.mxu0 0.0
        %6097 = vmatpush.msra.mxu0 0.0
        %6098 = vmatpush.msra.mxu0 0.0
        %6099 = vmatpush.msra.mxu0 0.0
        %6100 = vmatpush.msra.mxu0 0.0
        %6101 = vmatpush.msra.mxu0 0.0
        %6102 = vmatpush.msra.mxu0 0.0
        %6103 = vmatpush.msra.mxu0 0.0
        %6104 = vmatpush.msra.mxu0 0.0
        %6105 = vmatpush.msra.mxu0 0.0
        %6106 = vmatpush.msra.mxu0 0.0
        %6107 = vmatpush.msra.mxu0 0.0
        %6108 = vmatpush.msra.mxu0 0.0
        %6109 = vmatpush.msra.mxu0 %v5997
        %6110 = vmatmul.f32.gmra.mxu0 %v5999
        %v6111 = vpop.f32.mrf.mxu0
        %v6112 = vadd.f32 0.0, %v6111
        %6113 = vmatmul.f32.gmra.mxu0 %v6002
        %v6114 = vpop.f32.mrf.mxu0
        %v6115 = vadd.f32 0.0, %v6114
        %6116 = vmatmul.f32.gmra.mxu0 %v6005
        %v6117 = vpop.f32.mrf.mxu0
        %v6118 = vadd.f32 0.0, %v6117
        %6119 = vmatmul.f32.gmra.mxu0 %v6008
        %v6120 = vpop.f32.mrf.mxu0
        %v6121 = vadd.f32 0.0, %v6120
        %6122 = vmatmul.f32.gmra.mxu0 %v6011
        %v6123 = vpop.f32.mrf.mxu0
        %v6124 = vadd.f32 0.0, %v6123
        %6125 = vmatmul.f32.gmra.mxu0 %v6014
        %v6126 = vpop.f32.mrf.mxu0
        %v6127 = vadd.f32 0.0, %v6126
        %6128 = vmatmul.f32.gmra.mxu0 %v6017
        %v6129 = vpop.f32.mrf.mxu0
        %v6130 = vadd.f32 0.0, %v6129
        %6131 = vmatmul.f32.gmra.mxu0 %v6020
        %v6132 = vpop.f32.mrf.mxu0
        %v6133 = vadd.f32 0.0, %v6132
        %6134 = vmatmul.f32.gmra.mxu0 %v6023
        %v6135 = vpop.f32.mrf.mxu0
        %v6136 = vadd.f32 0.0, %v6135
        %6137 = vmatmul.f32.gmra.mxu0 %v6026
        %v6138 = vpop.f32.mrf.mxu0
        %v6139 = vadd.f32 0.0, %v6138
        %6140 = vmatmul.f32.gmra.mxu0 %v6029
        %v6141 = vpop.f32.mrf.mxu0
        %v6142 = vadd.f32 0.0, %v6141
        %6143 = vmatmul.f32.gmra.mxu0 %v6032
        %v6144 = vpop.f32.mrf.mxu0
        %v6145 = vadd.f32 0.0, %v6144
        %6146 = vmatmul.f32.gmra.mxu0 %v6035
        %v6147 = vpop.f32.mrf.mxu0
        %v6148 = vadd.f32 0.0, %v6147
        %6149 = vmatmul.f32.gmra.mxu0 %v6038
        %v6150 = vpop.f32.mrf.mxu0
        %v6151 = vadd.f32 0.0, %v6150
        %6152 = vmatmul.f32.gmra.mxu0 %v6041
        %v6153 = vpop.f32.mrf.mxu0
        %v6154 = vadd.f32 0.0, %v6153
        %6155 = vmatmul.f32.gmra.mxu0 %v6044
        %v6156 = vpop.f32.mrf.mxu0
        %v6157 = vadd.f32 0.0, %v6156
        %6158 = vmatmul.f32.gmra.mxu0 %v6047
        %v6159 = vpop.f32.mrf.mxu0
        %v6160 = vadd.f32 0.0, %v6159
        %6161 = vmatmul.f32.gmra.mxu0 %v6050
        %v6162 = vpop.f32.mrf.mxu0
        %v6163 = vadd.f32 0.0, %v6162
        %6164 = vmatmul.f32.gmra.mxu0 %v6053
        %v6165 = vpop.f32.mrf.mxu0
        %v6166 = vadd.f32 0.0, %v6165
        %6167 = vmatmul.f32.gmra.mxu0 %v6056
        %v6168 = vpop.f32.mrf.mxu0
        %v6169 = vadd.f32 0.0, %v6168
        %6170 = vmatmul.f32.gmra.mxu0 %v6059
        %v6171 = vpop.f32.mrf.mxu0
        %v6172 = vadd.f32 0.0, %v6171
        %6173 = vmatmul.f32.gmra.mxu0 %v6062
        %v6174 = vpop.f32.mrf.mxu0
        %v6175 = vadd.f32 0.0, %v6174
        %6176 = vmatmul.f32.gmra.mxu0 %v6065
        %v6177 = vpop.f32.mrf.mxu0
        %v6178 = vadd.f32 0.0, %v6177
        %6179 = vmatmul.f32.gmra.mxu0 %v6068
        %v6180 = vpop.f32.mrf.mxu0
        %v6181 = vadd.f32 0.0, %v6180
        %6182 = vmatmul.f32.gmra.mxu0 %v6071
        %v6183 = vpop.f32.mrf.mxu0
        %v6184 = vadd.f32 0.0, %v6183
        %6185 = vmatmul.f32.gmra.mxu0 %v6074
        %v6186 = vpop.f32.mrf.mxu0
        %v6187 = vadd.f32 0.0, %v6186
        %6188 = vmatmul.f32.gmra.mxu0 %v6077
        %v6189 = vpop.f32.mrf.mxu0
        %v6190 = vadd.f32 0.0, %v6189
        %6191 = vmatmul.f32.gmra.mxu0 %v6080
        %v6192 = vpop.f32.mrf.mxu0
        %v6193 = vadd.f32 0.0, %v6192
        %6194 = vmatmul.f32.gmra.mxu0 %v6083
        %v6195 = vpop.f32.mrf.mxu0
        %v6196 = vadd.f32 0.0, %v6195
        %6197 = vmatmul.f32.gmra.mxu0 %v6086
        %v6198 = vpop.f32.mrf.mxu0
        %v6199 = vadd.f32 0.0, %v6198
        %6200 = vmatmul.f32.gmra.mxu0 %v6089
        %v6201 = vpop.f32.mrf.mxu0
        %v6202 = vadd.f32 0.0, %v6201
        %6203 = vmatmul.f32.gmra.mxu0 %v6092
        %v6204 = vpop.f32.mrf.mxu0
        %v6205 = vadd.f32 0.0, %v6204
        %6206 = vdwg.mxu0
        %v6207 = vadd.f32 %v5964, %v6112
        %v6208 = vadd.f32 %v5965, %v6115
        %v6209 = vadd.f32 %v5966, %v6118
        %v6210 = vadd.f32 %v5967, %v6121
        %v6211 = vadd.f32 %v5968, %v6124
        %v6212 = vadd.f32 %v5969, %v6127
        %v6213 = vadd.f32 %v5970, %v6130
        %v6214 = vadd.f32 %v5971, %v6133
        %v6215 = vadd.f32 %v5972, %v6136
        %v6216 = vadd.f32 %v5973, %v6139
        %v6217 = vadd.f32 %v5974, %v6142
        %v6218 = vadd.f32 %v5975, %v6145
        %v6219 = vadd.f32 %v5976, %v6148
        %v6220 = vadd.f32 %v5977, %v6151
        %v6221 = vadd.f32 %v5978, %v6154
        %v6222 = vadd.f32 %v5979, %v6157
        %v6223 = vadd.f32 %v5980, %v6160
        %v6224 = vadd.f32 %v5981, %v6163
        %v6225 = vadd.f32 %v5982, %v6166
        %v6226 = vadd.f32 %v5983, %v6169
        %v6227 = vadd.f32 %v5984, %v6172
        %v6228 = vadd.f32 %v5985, %v6175
        %v6229 = vadd.f32 %v5986, %v6178
        %v6230 = vadd.f32 %v5987, %v6181
        %v6231 = vadd.f32 %v5988, %v6184
        %v6232 = vadd.f32 %v5989, %v6187
        %v6233 = vadd.f32 %v5990, %v6190
        %v6234 = vadd.f32 %v5991, %v6193
        %v6235 = vadd.f32 %v5992, %v6196
        %v6236 = vadd.f32 %v5993, %v6199
        %v6237 = vadd.f32 %v5994, %v6202
        %v6238 = vadd.f32 %v5995, %v6205
        %v6239 = vmul.f32 %v4737, %v2637
        %v6240 = vmul.f32 %v4738, %v2642
        %v6241 = vmul.f32 %v4739, %v2647
        %v6242 = vmul.f32 %v4740, %v2652
        %v6243 = vmul.f32 %v4741, %v2657
        %v6244 = vmul.f32 %v4742, %v2662
        %v6245 = vmul.f32 %v4743, %v2667
        %v6246 = vmul.f32 %v4744, %v2672
        %v6247 = vmul.f32 %v4745, %v2677
        %v6248 = vmul.f32 %v4746, %v2682
        %v6249 = vmul.f32 %v4747, %v2687
        %v6250 = vmul.f32 %v4748, %v2692
        %v6251 = vmul.f32 %v4749, %v2697
        %v6252 = vmul.f32 %v4750, %v2702
        %v6253 = vmul.f32 %v4751, %v2707
        %v6254 = vmul.f32 %v4752, %v2712
        %v6255 = vmul.f32 %v4753, %v2717
        %v6256 = vmul.f32 %v4754, %v2722
        %v6257 = vmul.f32 %v4755, %v2727
        %v6258 = vmul.f32 %v4756, %v2732
        %v6259 = vmul.f32 %v4757, %v2737
        %v6260 = vmul.f32 %v4758, %v2742
        %v6261 = vmul.f32 %v4759, %v2747
        %v6262 = vmul.f32 %v4760, %v2752
        %v6263 = vmul.f32 %v4761, %v2757
        %v6264 = vmul.f32 %v4762, %v2762
        %v6265 = vmul.f32 %v4763, %v2767
        %v6266 = vmul.f32 %v4764, %v2772
        %v6267 = vmul.f32 %v4765, %v2777
        %v6268 = vmul.f32 %v4766, %v2782
        %v6269 = vmul.f32 %v4767, %v2787
        %v6270 = vmul.f32 %v4768, %v2792
        %v6271 = vrot.slane %v6239, 1
        %v6272 = vrot.slane %v6240, 1
        %v6273 = vrot.slane %v6241, 1
        %v6274 = vrot.slane %v6242, 1
        %v6275 = vrot.slane %v6243, 1
        %v6276 = vrot.slane %v6244, 1
        %v6277 = vrot.slane %v6245, 1
        %v6278 = vrot.slane %v6246, 1
        %v6279 = vrot.slane %v6247, 1
        %v6280 = vrot.slane %v6248, 1
        %v6281 = vrot.slane %v6249, 1
        %v6282 = vrot.slane %v6250, 1
        %v6283 = vrot.slane %v6251, 1
        %v6284 = vrot.slane %v6252, 1
        %v6285 = vrot.slane %v6253, 1
        %v6286 = vrot.slane %v6254, 1
        %v6287 = vrot.slane %v6255, 1
        %v6288 = vrot.slane %v6256, 1
        %v6289 = vrot.slane %v6257, 1
        %v6290 = vrot.slane %v6258, 1
        %v6291 = vrot.slane %v6259, 1
        %v6292 = vrot.slane %v6260, 1
        %v6293 = vrot.slane %v6261, 1
        %v6294 = vrot.slane %v6262, 1
        %v6295 = vrot.slane %v6263, 1
        %v6296 = vrot.slane %v6264, 1
        %v6297 = vrot.slane %v6265, 1
        %v6298 = vrot.slane %v6266, 1
        %v6299 = vrot.slane %v6267, 1
        %v6300 = vrot.slane %v6268, 1
        %v6301 = vrot.slane %v6269, 1
        %v6302 = vrot.slane %v6270, 1
        %v6303 = vsel %vm1550, %v6301, %v6302
        %v6304 = vsel %vm1550, %v6300, %v6301
        %v6305 = vsel %vm1550, %v6299, %v6300
        %v6306 = vsel %vm1550, %v6298, %v6299
        %v6307 = vsel %vm1550, %v6297, %v6298
        %v6308 = vsel %vm1550, %v6296, %v6297
        %v6309 = vsel %vm1550, %v6295, %v6296
        %v6310 = vsel %vm1550, %v6294, %v6295
        %v6311 = vsel %vm1550, %v6293, %v6294
        %v6312 = vsel %vm1550, %v6292, %v6293
        %v6313 = vsel %vm1550, %v6291, %v6292
        %v6314 = vsel %vm1550, %v6290, %v6291
        %v6315 = vsel %vm1550, %v6289, %v6290
        %v6316 = vsel %vm1550, %v6288, %v6289
        %v6317 = vsel %vm1550, %v6287, %v6288
        %v6318 = vsel %vm1550, %v6286, %v6287
        %v6319 = vsel %vm1550, %v6285, %v6286
        %v6320 = vsel %vm1550, %v6284, %v6285
        %v6321 = vsel %vm1550, %v6283, %v6284
        %v6322 = vsel %vm1550, %v6282, %v6283
        %v6323 = vsel %vm1550, %v6281, %v6282
        %v6324 = vsel %vm1550, %v6280, %v6281
        %v6325 = vsel %vm1550, %v6279, %v6280
        %v6326 = vsel %vm1550, %v6278, %v6279
        %v6327 = vsel %vm1550, %v6277, %v6278
        %v6328 = vsel %vm1550, %v6276, %v6277
        %v6329 = vsel %vm1550, %v6275, %v6276
        %v6330 = vsel %vm1550, %v6274, %v6275
        %v6331 = vsel %vm1550, %v6273, %v6274
        %v6332 = vsel %vm1550, %v6272, %v6273
        %v6333 = vsel %vm1550, %v6271, %v6272
        %v6334 = vsel %vm1550, %v6302, %v6271
        %s6335 = scalar_lea.vmem %s3, 40
        %v6336 = vld [vmem:[%s6335] sm:$0xff]
        %v6338 = vsel %vm874, %v6333, 0
        %v6341 = vsel %vm874, %v6332, 0
        %v6344 = vsel %vm874, %v6331, 0
        %v6347 = vsel %vm874, %v6330, 0
        %v6350 = vsel %vm874, %v6329, 0
        %v6353 = vsel %vm874, %v6328, 0
        %v6356 = vsel %vm874, %v6327, 0
        %v6359 = vsel %vm874, %v6326, 0
        %v6362 = vsel %vm874, %v6325, 0
        %v6365 = vsel %vm874, %v6324, 0
        %v6368 = vsel %vm874, %v6323, 0
        %v6371 = vsel %vm874, %v6322, 0
        %v6374 = vsel %vm874, %v6321, 0
        %v6377 = vsel %vm874, %v6320, 0
        %v6380 = vsel %vm874, %v6319, 0
        %v6383 = vsel %vm874, %v6318, 0
        %v6386 = vsel %vm874, %v6317, 0
        %v6389 = vsel %vm874, %v6316, 0
        %v6392 = vsel %vm874, %v6315, 0
        %v6395 = vsel %vm874, %v6314, 0
        %v6398 = vsel %vm874, %v6313, 0
        %v6401 = vsel %vm874, %v6312, 0
        %v6404 = vsel %vm874, %v6311, 0
        %v6407 = vsel %vm874, %v6310, 0
        %v6410 = vsel %vm874, %v6309, 0
        %v6413 = vsel %vm874, %v6308, 0
        %v6416 = vsel %vm874, %v6307, 0
        %v6419 = vsel %vm874, %v6306, 0
        %v6422 = vsel %vm874, %v6305, 0
        %v6425 = vsel %vm874, %v6304, 0
        %v6428 = vsel %vm874, %v6303, 0
        %v6431 = vsel %vm874, %v6334, 0
        %6433 = vmatpush.msra.mxu0 0.0
        %6434 = vmatpush.msra.mxu0 0.0
        %6435 = vmatpush.msra.mxu0 0.0
        %6436 = vmatpush.msra.mxu0 0.0
        %6437 = vmatpush.msra.mxu0 0.0
        %6438 = vmatpush.msra.mxu0 0.0
        %6439 = vmatpush.msra.mxu0 0.0
        %6440 = vmatpush.msra.mxu0 0.0
        %6441 = vmatpush.msra.mxu0 0.0
        %6442 = vmatpush.msra.mxu0 0.0
        %6443 = vmatpush.msra.mxu0 0.0
        %6444 = vmatpush.msra.mxu0 0.0
        %6445 = vmatpush.msra.mxu0 0.0
        %6446 = vmatpush.msra.mxu0 0.0
        %6447 = vmatpush.msra.mxu0 0.0
        %6448 = vmatpush.msra.mxu0 %v6336
        %6449 = vmatmul.f32.gmra.mxu0 %v6338
        %v6450 = vpop.f32.mrf.mxu0
        %v6451 = vadd.f32 0.0, %v6450
        %6452 = vmatmul.f32.gmra.mxu0 %v6341
        %v6453 = vpop.f32.mrf.mxu0
        %v6454 = vadd.f32 0.0, %v6453
        %6455 = vmatmul.f32.gmra.mxu0 %v6344
        %v6456 = vpop.f32.mrf.mxu0
        %v6457 = vadd.f32 0.0, %v6456
        %6458 = vmatmul.f32.gmra.mxu0 %v6347
        %v6459 = vpop.f32.mrf.mxu0
        %v6460 = vadd.f32 0.0, %v6459
        %6461 = vmatmul.f32.gmra.mxu0 %v6350
        %v6462 = vpop.f32.mrf.mxu0
        %v6463 = vadd.f32 0.0, %v6462
        %6464 = vmatmul.f32.gmra.mxu0 %v6353
        %v6465 = vpop.f32.mrf.mxu0
        %v6466 = vadd.f32 0.0, %v6465
        %6467 = vmatmul.f32.gmra.mxu0 %v6356
        %v6468 = vpop.f32.mrf.mxu0
        %v6469 = vadd.f32 0.0, %v6468
        %6470 = vmatmul.f32.gmra.mxu0 %v6359
        %v6471 = vpop.f32.mrf.mxu0
        %v6472 = vadd.f32 0.0, %v6471
        %6473 = vmatmul.f32.gmra.mxu0 %v6362
        %v6474 = vpop.f32.mrf.mxu0
        %v6475 = vadd.f32 0.0, %v6474
        %6476 = vmatmul.f32.gmra.mxu0 %v6365
        %v6477 = vpop.f32.mrf.mxu0
        %v6478 = vadd.f32 0.0, %v6477
        %6479 = vmatmul.f32.gmra.mxu0 %v6368
        %v6480 = vpop.f32.mrf.mxu0
        %v6481 = vadd.f32 0.0, %v6480
        %6482 = vmatmul.f32.gmra.mxu0 %v6371
        %v6483 = vpop.f32.mrf.mxu0
        %v6484 = vadd.f32 0.0, %v6483
        %6485 = vmatmul.f32.gmra.mxu0 %v6374
        %v6486 = vpop.f32.mrf.mxu0
        %v6487 = vadd.f32 0.0, %v6486
        %6488 = vmatmul.f32.gmra.mxu0 %v6377
        %v6489 = vpop.f32.mrf.mxu0
        %v6490 = vadd.f32 0.0, %v6489
        %6491 = vmatmul.f32.gmra.mxu0 %v6380
        %v6492 = vpop.f32.mrf.mxu0
        %v6493 = vadd.f32 0.0, %v6492
        %6494 = vmatmul.f32.gmra.mxu0 %v6383
        %v6495 = vpop.f32.mrf.mxu0
        %v6496 = vadd.f32 0.0, %v6495
        %6497 = vmatmul.f32.gmra.mxu0 %v6386
        %v6498 = vpop.f32.mrf.mxu0
        %v6499 = vadd.f32 0.0, %v6498
        %6500 = vmatmul.f32.gmra.mxu0 %v6389
        %v6501 = vpop.f32.mrf.mxu0
        %v6502 = vadd.f32 0.0, %v6501
        %6503 = vmatmul.f32.gmra.mxu0 %v6392
        %v6504 = vpop.f32.mrf.mxu0
        %v6505 = vadd.f32 0.0, %v6504
        %6506 = vmatmul.f32.gmra.mxu0 %v6395
        %v6507 = vpop.f32.mrf.mxu0
        %v6508 = vadd.f32 0.0, %v6507
        %6509 = vmatmul.f32.gmra.mxu0 %v6398
        %v6510 = vpop.f32.mrf.mxu0
        %v6511 = vadd.f32 0.0, %v6510
        %6512 = vmatmul.f32.gmra.mxu0 %v6401
        %v6513 = vpop.f32.mrf.mxu0
        %v6514 = vadd.f32 0.0, %v6513
        %6515 = vmatmul.f32.gmra.mxu0 %v6404
        %v6516 = vpop.f32.mrf.mxu0
        %v6517 = vadd.f32 0.0, %v6516
        %6518 = vmatmul.f32.gmra.mxu0 %v6407
        %v6519 = vpop.f32.mrf.mxu0
        %v6520 = vadd.f32 0.0, %v6519
        %6521 = vmatmul.f32.gmra.mxu0 %v6410
        %v6522 = vpop.f32.mrf.mxu0
        %v6523 = vadd.f32 0.0, %v6522
        %6524 = vmatmul.f32.gmra.mxu0 %v6413
        %v6525 = vpop.f32.mrf.mxu0
        %v6526 = vadd.f32 0.0, %v6525
        %6527 = vmatmul.f32.gmra.mxu0 %v6416
        %v6528 = vpop.f32.mrf.mxu0
        %v6529 = vadd.f32 0.0, %v6528
        %6530 = vmatmul.f32.gmra.mxu0 %v6419
        %v6531 = vpop.f32.mrf.mxu0
        %v6532 = vadd.f32 0.0, %v6531
        %6533 = vmatmul.f32.gmra.mxu0 %v6422
        %v6534 = vpop.f32.mrf.mxu0
        %v6535 = vadd.f32 0.0, %v6534
        %6536 = vmatmul.f32.gmra.mxu0 %v6425
        %v6537 = vpop.f32.mrf.mxu0
        %v6538 = vadd.f32 0.0, %v6537
        %6539 = vmatmul.f32.gmra.mxu0 %v6428
        %v6540 = vpop.f32.mrf.mxu0
        %v6541 = vadd.f32 0.0, %v6540
        %6542 = vmatmul.f32.gmra.mxu0 %v6431
        %v6543 = vpop.f32.mrf.mxu0
        %v6544 = vadd.f32 0.0, %v6543
        %6545 = vdwg.mxu0
        %v6546 = vadd.f32 %v6207, %v6451
        %v6547 = vadd.f32 %v6208, %v6454
        %v6548 = vadd.f32 %v6209, %v6457
        %v6549 = vadd.f32 %v6210, %v6460
        %v6550 = vadd.f32 %v6211, %v6463
        %v6551 = vadd.f32 %v6212, %v6466
        %v6552 = vadd.f32 %v6213, %v6469
        %v6553 = vadd.f32 %v6214, %v6472
        %v6554 = vadd.f32 %v6215, %v6475
        %v6555 = vadd.f32 %v6216, %v6478
        %v6556 = vadd.f32 %v6217, %v6481
        %v6557 = vadd.f32 %v6218, %v6484
        %v6558 = vadd.f32 %v6219, %v6487
        %v6559 = vadd.f32 %v6220, %v6490
        %v6560 = vadd.f32 %v6221, %v6493
        %v6561 = vadd.f32 %v6222, %v6496
        %v6562 = vadd.f32 %v6223, %v6499
        %v6563 = vadd.f32 %v6224, %v6502
        %v6564 = vadd.f32 %v6225, %v6505
        %v6565 = vadd.f32 %v6226, %v6508
        %v6566 = vadd.f32 %v6227, %v6511
        %v6567 = vadd.f32 %v6228, %v6514
        %v6568 = vadd.f32 %v6229, %v6517
        %v6569 = vadd.f32 %v6230, %v6520
        %v6570 = vadd.f32 %v6231, %v6523
        %v6571 = vadd.f32 %v6232, %v6526
        %v6572 = vadd.f32 %v6233, %v6529
        %v6573 = vadd.f32 %v6234, %v6532
        %v6574 = vadd.f32 %v6235, %v6535
        %v6575 = vadd.f32 %v6236, %v6538
        %v6576 = vadd.f32 %v6237, %v6541
        %v6577 = vadd.f32 %v6238, %v6544
        %v6578 = vmul.f32 %v4737, %v3169
        %v6579 = vmul.f32 %v4738, %v3174
        %v6580 = vmul.f32 %v4739, %v3179
        %v6581 = vmul.f32 %v4740, %v3184
        %v6582 = vmul.f32 %v4741, %v3189
        %v6583 = vmul.f32 %v4742, %v3194
        %v6584 = vmul.f32 %v4743, %v3199
        %v6585 = vmul.f32 %v4744, %v3204
        %v6586 = vmul.f32 %v4745, %v3209
        %v6587 = vmul.f32 %v4746, %v3214
        %v6588 = vmul.f32 %v4747, %v3219
        %v6589 = vmul.f32 %v4748, %v3224
        %v6590 = vmul.f32 %v4749, %v3229
        %v6591 = vmul.f32 %v4750, %v3234
        %v6592 = vmul.f32 %v4751, %v3239
        %v6593 = vmul.f32 %v4752, %v3244
        %v6594 = vmul.f32 %v4753, %v3249
        %v6595 = vmul.f32 %v4754, %v3254
        %v6596 = vmul.f32 %v4755, %v3259
        %v6597 = vmul.f32 %v4756, %v3264
        %v6598 = vmul.f32 %v4757, %v3269
        %v6599 = vmul.f32 %v4758, %v3274
        %v6600 = vmul.f32 %v4759, %v3279
        %v6601 = vmul.f32 %v4760, %v3284
        %v6602 = vmul.f32 %v4761, %v3289
        %v6603 = vmul.f32 %v4762, %v3294
        %v6604 = vmul.f32 %v4763, %v3299
        %v6605 = vmul.f32 %v4764, %v3304
        %v6606 = vmul.f32 %v4765, %v3309
        %v6607 = vmul.f32 %v4766, %v3314
        %v6608 = vmul.f32 %v4767, %v3319
        %v6609 = vmul.f32 %v4768, %v3324
        %v6610 = vrot.slane %v6578, 7
        %v6611 = vrot.slane %v6579, 7
        %v6612 = vrot.slane %v6580, 7
        %v6613 = vrot.slane %v6581, 7
        %v6614 = vrot.slane %v6582, 7
        %v6615 = vrot.slane %v6583, 7
        %v6616 = vrot.slane %v6584, 7
        %v6617 = vrot.slane %v6585, 7
        %v6618 = vrot.slane %v6586, 7
        %v6619 = vrot.slane %v6587, 7
        %v6620 = vrot.slane %v6588, 7
        %v6621 = vrot.slane %v6589, 7
        %v6622 = vrot.slane %v6590, 7
        %v6623 = vrot.slane %v6591, 7
        %v6624 = vrot.slane %v6592, 7
        %v6625 = vrot.slane %v6593, 7
        %v6626 = vrot.slane %v6594, 7
        %v6627 = vrot.slane %v6595, 7
        %v6628 = vrot.slane %v6596, 7
        %v6629 = vrot.slane %v6597, 7
        %v6630 = vrot.slane %v6598, 7
        %v6631 = vrot.slane %v6599, 7
        %v6632 = vrot.slane %v6600, 7
        %v6633 = vrot.slane %v6601, 7
        %v6634 = vrot.slane %v6602, 7
        %v6635 = vrot.slane %v6603, 7
        %v6636 = vrot.slane %v6604, 7
        %v6637 = vrot.slane %v6605, 7
        %v6638 = vrot.slane %v6606, 7
        %v6639 = vrot.slane %v6607, 7
        %v6640 = vrot.slane %v6608, 7
        %v6641 = vrot.slane %v6609, 7
        %v6642 = vsel %vm613, %v6640, %v6641
        %v6643 = vsel %vm613, %v6639, %v6640
        %v6644 = vsel %vm613, %v6638, %v6639
        %v6645 = vsel %vm613, %v6637, %v6638
        %v6646 = vsel %vm613, %v6636, %v6637
        %v6647 = vsel %vm613, %v6635, %v6636
        %v6648 = vsel %vm613, %v6634, %v6635
        %v6649 = vsel %vm613, %v6633, %v6634
        %v6650 = vsel %vm613, %v6632, %v6633
        %v6651 = vsel %vm613, %v6631, %v6632
        %v6652 = vsel %vm613, %v6630, %v6631
        %v6653 = vsel %vm613, %v6629, %v6630
        %v6654 = vsel %vm613, %v6628, %v6629
        %v6655 = vsel %vm613, %v6627, %v6628
        %v6656 = vsel %vm613, %v6626, %v6627
        %v6657 = vsel %vm613, %v6625, %v6626
        %v6658 = vsel %vm613, %v6624, %v6625
        %v6659 = vsel %vm613, %v6623, %v6624
        %v6660 = vsel %vm613, %v6622, %v6623
        %v6661 = vsel %vm613, %v6621, %v6622
        %v6662 = vsel %vm613, %v6620, %v6621
        %v6663 = vsel %vm613, %v6619, %v6620
        %v6664 = vsel %vm613, %v6618, %v6619
        %v6665 = vsel %vm613, %v6617, %v6618
        %v6666 = vsel %vm613, %v6616, %v6617
        %v6667 = vsel %vm613, %v6615, %v6616
        %v6668 = vsel %vm613, %v6614, %v6615
        %v6669 = vsel %vm613, %v6613, %v6614
        %v6670 = vsel %vm613, %v6612, %v6613
        %v6671 = vsel %vm613, %v6611, %v6612
        %v6672 = vsel %vm613, %v6610, %v6611
        %v6673 = vsel %vm613, %v6641, %v6610
        %s6674 = scalar_lea.vmem %s3, 48
        %v6675 = vld [vmem:[%s6674] sm:$0xff]
        %v6677 = vsel %vm874, %v6671, 0
        %v6680 = vsel %vm874, %v6670, 0
        %v6683 = vsel %vm874, %v6669, 0
        %v6686 = vsel %vm874, %v6668, 0
        %v6689 = vsel %vm874, %v6667, 0
        %v6692 = vsel %vm874, %v6666, 0
        %v6695 = vsel %vm874, %v6665, 0
        %v6698 = vsel %vm874, %v6664, 0
        %v6701 = vsel %vm874, %v6663, 0
        %v6704 = vsel %vm874, %v6662, 0
        %v6707 = vsel %vm874, %v6661, 0
        %v6710 = vsel %vm874, %v6660, 0
        %v6713 = vsel %vm874, %v6659, 0
        %v6716 = vsel %vm874, %v6658, 0
        %v6719 = vsel %vm874, %v6657, 0
        %v6722 = vsel %vm874, %v6656, 0
        %v6725 = vsel %vm874, %v6655, 0
        %v6728 = vsel %vm874, %v6654, 0
        %v6731 = vsel %vm874, %v6653, 0
        %v6734 = vsel %vm874, %v6652, 0
        %v6737 = vsel %vm874, %v6651, 0
        %v6740 = vsel %vm874, %v6650, 0
        %v6743 = vsel %vm874, %v6649, 0
        %v6746 = vsel %vm874, %v6648, 0
        %v6749 = vsel %vm874, %v6647, 0
        %v6752 = vsel %vm874, %v6646, 0
        %v6755 = vsel %vm874, %v6645, 0
        %v6758 = vsel %vm874, %v6644, 0
        %v6761 = vsel %vm874, %v6643, 0
        %v6764 = vsel %vm874, %v6642, 0
        %v6767 = vsel %vm874, %v6673, 0
        %v6770 = vsel %vm874, %v6672, 0
        %6772 = vmatpush.msra.mxu0 0.0
        %6773 = vmatpush.msra.mxu0 0.0
        %6774 = vmatpush.msra.mxu0 0.0
        %6775 = vmatpush.msra.mxu0 0.0
        %6776 = vmatpush.msra.mxu0 0.0
        %6777 = vmatpush.msra.mxu0 0.0
        %6778 = vmatpush.msra.mxu0 0.0
        %6779 = vmatpush.msra.mxu0 0.0
        %6780 = vmatpush.msra.mxu0 0.0
        %6781 = vmatpush.msra.mxu0 0.0
        %6782 = vmatpush.msra.mxu0 0.0
        %6783 = vmatpush.msra.mxu0 0.0
        %6784 = vmatpush.msra.mxu0 0.0
        %6785 = vmatpush.msra.mxu0 0.0
        %6786 = vmatpush.msra.mxu0 0.0
        %6787 = vmatpush.msra.mxu0 %v6675
        %6788 = vmatmul.f32.gmra.mxu0 %v6677
        %v6789 = vpop.f32.mrf.mxu0
        %v6790 = vadd.f32 0.0, %v6789
        %6791 = vmatmul.f32.gmra.mxu0 %v6680
        %v6792 = vpop.f32.mrf.mxu0
        %v6793 = vadd.f32 0.0, %v6792
        %6794 = vmatmul.f32.gmra.mxu0 %v6683
        %v6795 = vpop.f32.mrf.mxu0
        %v6796 = vadd.f32 0.0, %v6795
        %6797 = vmatmul.f32.gmra.mxu0 %v6686
        %v6798 = vpop.f32.mrf.mxu0
        %v6799 = vadd.f32 0.0, %v6798
        %6800 = vmatmul.f32.gmra.mxu0 %v6689
        %v6801 = vpop.f32.mrf.mxu0
        %v6802 = vadd.f32 0.0, %v6801
        %6803 = vmatmul.f32.gmra.mxu0 %v6692
        %v6804 = vpop.f32.mrf.mxu0
        %v6805 = vadd.f32 0.0, %v6804
        %6806 = vmatmul.f32.gmra.mxu0 %v6695
        %v6807 = vpop.f32.mrf.mxu0
        %v6808 = vadd.f32 0.0, %v6807
        %6809 = vmatmul.f32.gmra.mxu0 %v6698
        %v6810 = vpop.f32.mrf.mxu0
        %v6811 = vadd.f32 0.0, %v6810
        %6812 = vmatmul.f32.gmra.mxu0 %v6701
        %v6813 = vpop.f32.mrf.mxu0
        %v6814 = vadd.f32 0.0, %v6813
        %6815 = vmatmul.f32.gmra.mxu0 %v6704
        %v6816 = vpop.f32.mrf.mxu0
        %v6817 = vadd.f32 0.0, %v6816
        %6818 = vmatmul.f32.gmra.mxu0 %v6707
        %v6819 = vpop.f32.mrf.mxu0
        %v6820 = vadd.f32 0.0, %v6819
        %6821 = vmatmul.f32.gmra.mxu0 %v6710
        %v6822 = vpop.f32.mrf.mxu0
        %v6823 = vadd.f32 0.0, %v6822
        %6824 = vmatmul.f32.gmra.mxu0 %v6713
        %v6825 = vpop.f32.mrf.mxu0
        %v6826 = vadd.f32 0.0, %v6825
        %6827 = vmatmul.f32.gmra.mxu0 %v6716
        %v6828 = vpop.f32.mrf.mxu0
        %v6829 = vadd.f32 0.0, %v6828
        %6830 = vmatmul.f32.gmra.mxu0 %v6719
        %v6831 = vpop.f32.mrf.mxu0
        %v6832 = vadd.f32 0.0, %v6831
        %6833 = vmatmul.f32.gmra.mxu0 %v6722
        %v6834 = vpop.f32.mrf.mxu0
        %v6835 = vadd.f32 0.0, %v6834
        %6836 = vmatmul.f32.gmra.mxu0 %v6725
        %v6837 = vpop.f32.mrf.mxu0
        %v6838 = vadd.f32 0.0, %v6837
        %6839 = vmatmul.f32.gmra.mxu0 %v6728
        %v6840 = vpop.f32.mrf.mxu0
        %v6841 = vadd.f32 0.0, %v6840
        %6842 = vmatmul.f32.gmra.mxu0 %v6731
        %v6843 = vpop.f32.mrf.mxu0
        %v6844 = vadd.f32 0.0, %v6843
        %6845 = vmatmul.f32.gmra.mxu0 %v6734
        %v6846 = vpop.f32.mrf.mxu0
        %v6847 = vadd.f32 0.0, %v6846
        %6848 = vmatmul.f32.gmra.mxu0 %v6737
        %v6849 = vpop.f32.mrf.mxu0
        %v6850 = vadd.f32 0.0, %v6849
        %6851 = vmatmul.f32.gmra.mxu0 %v6740
        %v6852 = vpop.f32.mrf.mxu0
        %v6853 = vadd.f32 0.0, %v6852
        %6854 = vmatmul.f32.gmra.mxu0 %v6743
        %v6855 = vpop.f32.mrf.mxu0
        %v6856 = vadd.f32 0.0, %v6855
        %6857 = vmatmul.f32.gmra.mxu0 %v6746
        %v6858 = vpop.f32.mrf.mxu0
        %v6859 = vadd.f32 0.0, %v6858
        %6860 = vmatmul.f32.gmra.mxu0 %v6749
        %v6861 = vpop.f32.mrf.mxu0
        %v6862 = vadd.f32 0.0, %v6861
        %6863 = vmatmul.f32.gmra.mxu0 %v6752
        %v6864 = vpop.f32.mrf.mxu0
        %v6865 = vadd.f32 0.0, %v6864
        %6866 = vmatmul.f32.gmra.mxu0 %v6755
        %v6867 = vpop.f32.mrf.mxu0
        %v6868 = vadd.f32 0.0, %v6867
        %6869 = vmatmul.f32.gmra.mxu0 %v6758
        %v6870 = vpop.f32.mrf.mxu0
        %v6871 = vadd.f32 0.0, %v6870
        %6872 = vmatmul.f32.gmra.mxu0 %v6761
        %v6873 = vpop.f32.mrf.mxu0
        %v6874 = vadd.f32 0.0, %v6873
        %6875 = vmatmul.f32.gmra.mxu0 %v6764
        %v6876 = vpop.f32.mrf.mxu0
        %v6877 = vadd.f32 0.0, %v6876
        %6878 = vmatmul.f32.gmra.mxu0 %v6767
        %v6879 = vpop.f32.mrf.mxu0
        %v6880 = vadd.f32 0.0, %v6879
        %6881 = vmatmul.f32.gmra.mxu0 %v6770
        %v6882 = vpop.f32.mrf.mxu0
        %v6883 = vadd.f32 0.0, %v6882
        %6884 = vdwg.mxu0
        %v6885 = vadd.f32 %v6546, %v6790
        %v6886 = vadd.f32 %v6547, %v6793
        %v6887 = vadd.f32 %v6548, %v6796
        %v6888 = vadd.f32 %v6549, %v6799
        %v6889 = vadd.f32 %v6550, %v6802
        %v6890 = vadd.f32 %v6551, %v6805
        %v6891 = vadd.f32 %v6552, %v6808
        %v6892 = vadd.f32 %v6553, %v6811
        %v6893 = vadd.f32 %v6554, %v6814
        %v6894 = vadd.f32 %v6555, %v6817
        %v6895 = vadd.f32 %v6556, %v6820
        %v6896 = vadd.f32 %v6557, %v6823
        %v6897 = vadd.f32 %v6558, %v6826
        %v6898 = vadd.f32 %v6559, %v6829
        %v6899 = vadd.f32 %v6560, %v6832
        %v6900 = vadd.f32 %v6561, %v6835
        %v6901 = vadd.f32 %v6562, %v6838
        %v6902 = vadd.f32 %v6563, %v6841
        %v6903 = vadd.f32 %v6564, %v6844
        %v6904 = vadd.f32 %v6565, %v6847
        %v6905 = vadd.f32 %v6566, %v6850
        %v6906 = vadd.f32 %v6567, %v6853
        %v6907 = vadd.f32 %v6568, %v6856
        %v6908 = vadd.f32 %v6569, %v6859
        %v6909 = vadd.f32 %v6570, %v6862
        %v6910 = vadd.f32 %v6571, %v6865
        %v6911 = vadd.f32 %v6572, %v6868
        %v6912 = vadd.f32 %v6573, %v6871
        %v6913 = vadd.f32 %v6574, %v6874
        %v6914 = vadd.f32 %v6575, %v6877
        %v6915 = vadd.f32 %v6576, %v6880
        %v6916 = vadd.f32 %v6577, %v6883
        %v6917 = vmul.f32 %v4737, %v3701
        %v6918 = vmul.f32 %v4738, %v3706
        %v6919 = vmul.f32 %v4739, %v3711
        %v6920 = vmul.f32 %v4740, %v3716
        %v6921 = vmul.f32 %v4741, %v3721
        %v6922 = vmul.f32 %v4742, %v3726
        %v6923 = vmul.f32 %v4743, %v3731
        %v6924 = vmul.f32 %v4744, %v3736
        %v6925 = vmul.f32 %v4745, %v3741
        %v6926 = vmul.f32 %v4746, %v3746
        %v6927 = vmul.f32 %v4747, %v3751
        %v6928 = vmul.f32 %v4748, %v3756
        %v6929 = vmul.f32 %v4749, %v3761
        %v6930 = vmul.f32 %v4750, %v3766
        %v6931 = vmul.f32 %v4751, %v3771
        %v6932 = vmul.f32 %v4752, %v3776
        %v6933 = vmul.f32 %v4753, %v3781
        %v6934 = vmul.f32 %v4754, %v3786
        %v6935 = vmul.f32 %v4755, %v3791
        %v6936 = vmul.f32 %v4756, %v3796
        %v6937 = vmul.f32 %v4757, %v3801
        %v6938 = vmul.f32 %v4758, %v3806
        %v6939 = vmul.f32 %v4759, %v3811
        %v6940 = vmul.f32 %v4760, %v3816
        %v6941 = vmul.f32 %v4761, %v3821
        %v6942 = vmul.f32 %v4762, %v3826
        %v6943 = vmul.f32 %v4763, %v3831
        %v6944 = vmul.f32 %v4764, %v3836
        %v6945 = vmul.f32 %v4765, %v3841
        %v6946 = vmul.f32 %v4766, %v3846
        %v6947 = vmul.f32 %v4767, %v3851
        %v6948 = vmul.f32 %v4768, %v3856
        %s6949 = scalar_lea.vmem %s3, 56
        %v6950 = vld [vmem:[%s6949] sm:$0xff]
        %v6952 = vsel %vm874, %v6919, 0
        %v6955 = vsel %vm874, %v6920, 0
        %v6958 = vsel %vm874, %v6921, 0
        %v6961 = vsel %vm874, %v6922, 0
        %v6964 = vsel %vm874, %v6923, 0
        %v6967 = vsel %vm874, %v6924, 0
        %v6970 = vsel %vm874, %v6925, 0
        %v6973 = vsel %vm874, %v6926, 0
        %v6976 = vsel %vm874, %v6927, 0
        %v6979 = vsel %vm874, %v6928, 0
        %v6982 = vsel %vm874, %v6929, 0
        %v6985 = vsel %vm874, %v6930, 0
        %v6988 = vsel %vm874, %v6931, 0
        %v6991 = vsel %vm874, %v6932, 0
        %v6994 = vsel %vm874, %v6933, 0
        %v6997 = vsel %vm874, %v6934, 0
        %v7000 = vsel %vm874, %v6935, 0
        %v7003 = vsel %vm874, %v6936, 0
        %v7006 = vsel %vm874, %v6937, 0
        %v7009 = vsel %vm874, %v6938, 0
        %v7012 = vsel %vm874, %v6939, 0
        %v7015 = vsel %vm874, %v6940, 0
        %v7018 = vsel %vm874, %v6941, 0
        %v7021 = vsel %vm874, %v6942, 0
        %v7024 = vsel %vm874, %v6943, 0
        %v7027 = vsel %vm874, %v6944, 0
        %v7030 = vsel %vm874, %v6945, 0
        %v7033 = vsel %vm874, %v6946, 0
        %v7036 = vsel %vm874, %v6947, 0
        %v7039 = vsel %vm874, %v6948, 0
        %v7042 = vsel %vm874, %v6917, 0
        %v7045 = vsel %vm874, %v6918, 0
        %7047 = vmatpush.msra.mxu0 0.0
        %7048 = vmatpush.msra.mxu0 0.0
        %7049 = vmatpush.msra.mxu0 0.0
        %7050 = vmatpush.msra.mxu0 0.0
        %7051 = vmatpush.msra.mxu0 0.0
        %7052 = vmatpush.msra.mxu0 0.0
        %7053 = vmatpush.msra.mxu0 0.0
        %7054 = vmatpush.msra.mxu0 0.0
        %7055 = vmatpush.msra.mxu0 0.0
        %7056 = vmatpush.msra.mxu0 0.0
        %7057 = vmatpush.msra.mxu0 0.0
        %7058 = vmatpush.msra.mxu0 0.0
        %7059 = vmatpush.msra.mxu0 0.0
        %7060 = vmatpush.msra.mxu0 0.0
        %7061 = vmatpush.msra.mxu0 0.0
        %7062 = vmatpush.msra.mxu0 %v6950
        %7063 = vmatmul.f32.gmra.mxu0 %v6952
        %v7064 = vpop.f32.mrf.mxu0
        %v7065 = vadd.f32 0.0, %v7064
        %7066 = vmatmul.f32.gmra.mxu0 %v6955
        %v7067 = vpop.f32.mrf.mxu0
        %v7068 = vadd.f32 0.0, %v7067
        %7069 = vmatmul.f32.gmra.mxu0 %v6958
        %v7070 = vpop.f32.mrf.mxu0
        %v7071 = vadd.f32 0.0, %v7070
        %7072 = vmatmul.f32.gmra.mxu0 %v6961
        %v7073 = vpop.f32.mrf.mxu0
        %v7074 = vadd.f32 0.0, %v7073
        %7075 = vmatmul.f32.gmra.mxu0 %v6964
        %v7076 = vpop.f32.mrf.mxu0
        %v7077 = vadd.f32 0.0, %v7076
        %7078 = vmatmul.f32.gmra.mxu0 %v6967
        %v7079 = vpop.f32.mrf.mxu0
        %v7080 = vadd.f32 0.0, %v7079
        %7081 = vmatmul.f32.gmra.mxu0 %v6970
        %v7082 = vpop.f32.mrf.mxu0
        %v7083 = vadd.f32 0.0, %v7082
        %7084 = vmatmul.f32.gmra.mxu0 %v6973
        %v7085 = vpop.f32.mrf.mxu0
        %v7086 = vadd.f32 0.0, %v7085
        %7087 = vmatmul.f32.gmra.mxu0 %v6976
        %v7088 = vpop.f32.mrf.mxu0
        %v7089 = vadd.f32 0.0, %v7088
        %7090 = vmatmul.f32.gmra.mxu0 %v6979
        %v7091 = vpop.f32.mrf.mxu0
        %v7092 = vadd.f32 0.0, %v7091
        %7093 = vmatmul.f32.gmra.mxu0 %v6982
        %v7094 = vpop.f32.mrf.mxu0
        %v7095 = vadd.f32 0.0, %v7094
        %7096 = vmatmul.f32.gmra.mxu0 %v6985
        %v7097 = vpop.f32.mrf.mxu0
        %v7098 = vadd.f32 0.0, %v7097
        %7099 = vmatmul.f32.gmra.mxu0 %v6988
        %v7100 = vpop.f32.mrf.mxu0
        %v7101 = vadd.f32 0.0, %v7100
        %7102 = vmatmul.f32.gmra.mxu0 %v6991
        %v7103 = vpop.f32.mrf.mxu0
        %v7104 = vadd.f32 0.0, %v7103
        %7105 = vmatmul.f32.gmra.mxu0 %v6994
        %v7106 = vpop.f32.mrf.mxu0
        %v7107 = vadd.f32 0.0, %v7106
        %7108 = vmatmul.f32.gmra.mxu0 %v6997
        %v7109 = vpop.f32.mrf.mxu0
        %v7110 = vadd.f32 0.0, %v7109
        %7111 = vmatmul.f32.gmra.mxu0 %v7000
        %v7112 = vpop.f32.mrf.mxu0
        %v7113 = vadd.f32 0.0, %v7112
        %7114 = vmatmul.f32.gmra.mxu0 %v7003
        %v7115 = vpop.f32.mrf.mxu0
        %v7116 = vadd.f32 0.0, %v7115
        %7117 = vmatmul.f32.gmra.mxu0 %v7006
        %v7118 = vpop.f32.mrf.mxu0
        %v7119 = vadd.f32 0.0, %v7118
        %7120 = vmatmul.f32.gmra.mxu0 %v7009
        %v7121 = vpop.f32.mrf.mxu0
        %v7122 = vadd.f32 0.0, %v7121
        %7123 = vmatmul.f32.gmra.mxu0 %v7012
        %v7124 = vpop.f32.mrf.mxu0
        %v7125 = vadd.f32 0.0, %v7124
        %7126 = vmatmul.f32.gmra.mxu0 %v7015
        %v7127 = vpop.f32.mrf.mxu0
        %v7128 = vadd.f32 0.0, %v7127
        %7129 = vmatmul.f32.gmra.mxu0 %v7018
        %v7130 = vpop.f32.mrf.mxu0
        %v7131 = vadd.f32 0.0, %v7130
        %7132 = vmatmul.f32.gmra.mxu0 %v7021
        %v7133 = vpop.f32.mrf.mxu0
        %v7134 = vadd.f32 0.0, %v7133
        %7135 = vmatmul.f32.gmra.mxu0 %v7024
        %v7136 = vpop.f32.mrf.mxu0
        %v7137 = vadd.f32 0.0, %v7136
        %7138 = vmatmul.f32.gmra.mxu0 %v7027
        %v7139 = vpop.f32.mrf.mxu0
        %v7140 = vadd.f32 0.0, %v7139
        %7141 = vmatmul.f32.gmra.mxu0 %v7030
        %v7142 = vpop.f32.mrf.mxu0
        %v7143 = vadd.f32 0.0, %v7142
        %7144 = vmatmul.f32.gmra.mxu0 %v7033
        %v7145 = vpop.f32.mrf.mxu0
        %v7146 = vadd.f32 0.0, %v7145
        %7147 = vmatmul.f32.gmra.mxu0 %v7036
        %v7148 = vpop.f32.mrf.mxu0
        %v7149 = vadd.f32 0.0, %v7148
        %7150 = vmatmul.f32.gmra.mxu0 %v7039
        %v7151 = vpop.f32.mrf.mxu0
        %v7152 = vadd.f32 0.0, %v7151
        %7153 = vmatmul.f32.gmra.mxu0 %v7042
        %v7154 = vpop.f32.mrf.mxu0
        %v7155 = vadd.f32 0.0, %v7154
        %7156 = vmatmul.f32.gmra.mxu0 %v7045
        %v7157 = vpop.f32.mrf.mxu0
        %v7158 = vadd.f32 0.0, %v7157
        %7159 = vdwg.mxu0
        %v7160 = vadd.f32 %v6885, %v7065
        %v7161 = vadd.f32 %v6886, %v7068
        %v7162 = vadd.f32 %v6887, %v7071
        %v7163 = vadd.f32 %v6888, %v7074
        %v7164 = vadd.f32 %v6889, %v7077
        %v7165 = vadd.f32 %v6890, %v7080
        %v7166 = vadd.f32 %v6891, %v7083
        %v7167 = vadd.f32 %v6892, %v7086
        %v7168 = vadd.f32 %v6893, %v7089
        %v7169 = vadd.f32 %v6894, %v7092
        %v7170 = vadd.f32 %v6895, %v7095
        %v7171 = vadd.f32 %v6896, %v7098
        %v7172 = vadd.f32 %v6897, %v7101
        %v7173 = vadd.f32 %v6898, %v7104
        %v7174 = vadd.f32 %v6899, %v7107
        %v7175 = vadd.f32 %v6900, %v7110
        %v7176 = vadd.f32 %v6901, %v7113
        %v7177 = vadd.f32 %v6902, %v7116
        %v7178 = vadd.f32 %v6903, %v7119
        %v7179 = vadd.f32 %v6904, %v7122
        %v7180 = vadd.f32 %v6905, %v7125
        %v7181 = vadd.f32 %v6906, %v7128
        %v7182 = vadd.f32 %v6907, %v7131
        %v7183 = vadd.f32 %v6908, %v7134
        %v7184 = vadd.f32 %v6909, %v7137
        %v7185 = vadd.f32 %v6910, %v7140
        %v7186 = vadd.f32 %v6911, %v7143
        %v7187 = vadd.f32 %v6912, %v7146
        %v7188 = vadd.f32 %v6913, %v7149
        %v7189 = vadd.f32 %v6914, %v7152
        %v7190 = vadd.f32 %v6915, %v7155
        %v7191 = vadd.f32 %v6916, %v7158
        %v7192 = vmul.f32 %v4737, %v4169
        %v7193 = vmul.f32 %v4738, %v4174
        %v7194 = vmul.f32 %v4739, %v4179
        %v7195 = vmul.f32 %v4740, %v4184
        %v7196 = vmul.f32 %v4741, %v4189
        %v7197 = vmul.f32 %v4742, %v4194
        %v7198 = vmul.f32 %v4743, %v4199
        %v7199 = vmul.f32 %v4744, %v4204
        %v7200 = vmul.f32 %v4745, %v4209
        %v7201 = vmul.f32 %v4746, %v4214
        %v7202 = vmul.f32 %v4747, %v4219
        %v7203 = vmul.f32 %v4748, %v4224
        %v7204 = vmul.f32 %v4749, %v4229
        %v7205 = vmul.f32 %v4750, %v4234
        %v7206 = vmul.f32 %v4751, %v4239
        %v7207 = vmul.f32 %v4752, %v4244
        %v7208 = vmul.f32 %v4753, %v4249
        %v7209 = vmul.f32 %v4754, %v4254
        %v7210 = vmul.f32 %v4755, %v4259
        %v7211 = vmul.f32 %v4756, %v4264
        %v7212 = vmul.f32 %v4757, %v4269
        %v7213 = vmul.f32 %v4758, %v4274
        %v7214 = vmul.f32 %v4759, %v4279
        %v7215 = vmul.f32 %v4760, %v4284
        %v7216 = vmul.f32 %v4761, %v4289
        %v7217 = vmul.f32 %v4762, %v4294
        %v7218 = vmul.f32 %v4763, %v4299
        %v7219 = vmul.f32 %v4764, %v4304
        %v7220 = vmul.f32 %v4765, %v4309
        %v7221 = vmul.f32 %v4766, %v4314
        %v7222 = vmul.f32 %v4767, %v4319
        %v7223 = vmul.f32 %v4768, %v4324
        %v7224 = vrot.slane %v7192, 1
        %v7225 = vrot.slane %v7193, 1
        %v7226 = vrot.slane %v7194, 1
        %v7227 = vrot.slane %v7195, 1
        %v7228 = vrot.slane %v7196, 1
        %v7229 = vrot.slane %v7197, 1
        %v7230 = vrot.slane %v7198, 1
        %v7231 = vrot.slane %v7199, 1
        %v7232 = vrot.slane %v7200, 1
        %v7233 = vrot.slane %v7201, 1
        %v7234 = vrot.slane %v7202, 1
        %v7235 = vrot.slane %v7203, 1
        %v7236 = vrot.slane %v7204, 1
        %v7237 = vrot.slane %v7205, 1
        %v7238 = vrot.slane %v7206, 1
        %v7239 = vrot.slane %v7207, 1
        %v7240 = vrot.slane %v7208, 1
        %v7241 = vrot.slane %v7209, 1
        %v7242 = vrot.slane %v7210, 1
        %v7243 = vrot.slane %v7211, 1
        %v7244 = vrot.slane %v7212, 1
        %v7245 = vrot.slane %v7213, 1
        %v7246 = vrot.slane %v7214, 1
        %v7247 = vrot.slane %v7215, 1
        %v7248 = vrot.slane %v7216, 1
        %v7249 = vrot.slane %v7217, 1
        %v7250 = vrot.slane %v7218, 1
        %v7251 = vrot.slane %v7219, 1
        %v7252 = vrot.slane %v7220, 1
        %v7253 = vrot.slane %v7221, 1
        %v7254 = vrot.slane %v7222, 1
        %v7255 = vrot.slane %v7223, 1
        %v7256 = vsel %vm1550, %v7254, %v7255
        %v7257 = vsel %vm1550, %v7253, %v7254
        %v7258 = vsel %vm1550, %v7252, %v7253
        %v7259 = vsel %vm1550, %v7251, %v7252
        %v7260 = vsel %vm1550, %v7250, %v7251
        %v7261 = vsel %vm1550, %v7249, %v7250
        %v7262 = vsel %vm1550, %v7248, %v7249
        %v7263 = vsel %vm1550, %v7247, %v7248
        %v7264 = vsel %vm1550, %v7246, %v7247
        %v7265 = vsel %vm1550, %v7245, %v7246
        %v7266 = vsel %vm1550, %v7244, %v7245
        %v7267 = vsel %vm1550, %v7243, %v7244
        %v7268 = vsel %vm1550, %v7242, %v7243
        %v7269 = vsel %vm1550, %v7241, %v7242
        %v7270 = vsel %vm1550, %v7240, %v7241
        %v7271 = vsel %vm1550, %v7239, %v7240
        %v7272 = vsel %vm1550, %v7238, %v7239
        %v7273 = vsel %vm1550, %v7237, %v7238
        %v7274 = vsel %vm1550, %v7236, %v7237
        %v7275 = vsel %vm1550, %v7235, %v7236
        %v7276 = vsel %vm1550, %v7234, %v7235
        %v7277 = vsel %vm1550, %v7233, %v7234
        %v7278 = vsel %vm1550, %v7232, %v7233
        %v7279 = vsel %vm1550, %v7231, %v7232
        %v7280 = vsel %vm1550, %v7230, %v7231
        %v7281 = vsel %vm1550, %v7229, %v7230
        %v7282 = vsel %vm1550, %v7228, %v7229
        %v7283 = vsel %vm1550, %v7227, %v7228
        %v7284 = vsel %vm1550, %v7226, %v7227
        %v7285 = vsel %vm1550, %v7225, %v7226
        %v7286 = vsel %vm1550, %v7224, %v7225
        %v7287 = vsel %vm1550, %v7255, %v7224
        %s7288 = scalar_lea.vmem %s3, 64
        %v7289 = vld [vmem:[%s7288] sm:$0xff]
        %v7291 = vsel %vm874, %v7284, 0
        %v7294 = vsel %vm874, %v7283, 0
        %v7297 = vsel %vm874, %v7282, 0
        %v7300 = vsel %vm874, %v7281, 0
        %v7303 = vsel %vm874, %v7280, 0
        %v7306 = vsel %vm874, %v7279, 0
        %v7309 = vsel %vm874, %v7278, 0
        %v7312 = vsel %vm874, %v7277, 0
        %v7315 = vsel %vm874, %v7276, 0
        %v7318 = vsel %vm874, %v7275, 0
        %v7321 = vsel %vm874, %v7274, 0
        %v7324 = vsel %vm874, %v7273, 0
        %v7327 = vsel %vm874, %v7272, 0
        %v7330 = vsel %vm874, %v7271, 0
        %v7333 = vsel %vm874, %v7270, 0
        %v7336 = vsel %vm874, %v7269, 0
        %v7339 = vsel %vm874, %v7268, 0
        %v7342 = vsel %vm874, %v7267, 0
        %v7345 = vsel %vm874, %v7266, 0
        %v7348 = vsel %vm874, %v7265, 0
        %v7351 = vsel %vm874, %v7264, 0
        %v7354 = vsel %vm874, %v7263, 0
        %v7357 = vsel %vm874, %v7262, 0
        %v7360 = vsel %vm874, %v7261, 0
        %v7363 = vsel %vm874, %v7260, 0
        %v7366 = vsel %vm874, %v7259, 0
        %v7369 = vsel %vm874, %v7258, 0
        %v7372 = vsel %vm874, %v7257, 0
        %v7375 = vsel %vm874, %v7256, 0
        %v7378 = vsel %vm874, %v7287, 0
        %v7381 = vsel %vm874, %v7286, 0
        %v7384 = vsel %vm874, %v7285, 0
        %7386 = vmatpush.msra.mxu0 0.0
        %7387 = vmatpush.msra.mxu0 0.0
        %7388 = vmatpush.msra.mxu0 0.0
        %7389 = vmatpush.msra.mxu0 0.0
        %7390 = vmatpush.msra.mxu0 0.0
        %7391 = vmatpush.msra.mxu0 0.0
        %7392 = vmatpush.msra.mxu0 0.0
        %7393 = vmatpush.msra.mxu0 0.0
        %7394 = vmatpush.msra.mxu0 0.0
        %7395 = vmatpush.msra.mxu0 0.0
        %7396 = vmatpush.msra.mxu0 0.0
        %7397 = vmatpush.msra.mxu0 0.0
        %7398 = vmatpush.msra.mxu0 0.0
        %7399 = vmatpush.msra.mxu0 0.0
        %7400 = vmatpush.msra.mxu0 0.0
        %7401 = vmatpush.msra.mxu0 %v7289
        %7402 = vmatmul.f32.gmra.mxu0 %v7291
        %v7403 = vpop.f32.mrf.mxu0
        %v7404 = vadd.f32 0.0, %v7403
        %7405 = vmatmul.f32.gmra.mxu0 %v7294
        %v7406 = vpop.f32.mrf.mxu0
        %v7407 = vadd.f32 0.0, %v7406
        %7408 = vmatmul.f32.gmra.mxu0 %v7297
        %v7409 = vpop.f32.mrf.mxu0
        %v7410 = vadd.f32 0.0, %v7409
        %7411 = vmatmul.f32.gmra.mxu0 %v7300
        %v7412 = vpop.f32.mrf.mxu0
        %v7413 = vadd.f32 0.0, %v7412
        %7414 = vmatmul.f32.gmra.mxu0 %v7303
        %v7415 = vpop.f32.mrf.mxu0
        %v7416 = vadd.f32 0.0, %v7415
        %7417 = vmatmul.f32.gmra.mxu0 %v7306
        %v7418 = vpop.f32.mrf.mxu0
        %v7419 = vadd.f32 0.0, %v7418
        %7420 = vmatmul.f32.gmra.mxu0 %v7309
        %v7421 = vpop.f32.mrf.mxu0
        %v7422 = vadd.f32 0.0, %v7421
        %7423 = vmatmul.f32.gmra.mxu0 %v7312
        %v7424 = vpop.f32.mrf.mxu0
        %v7425 = vadd.f32 0.0, %v7424
        %7426 = vmatmul.f32.gmra.mxu0 %v7315
        %v7427 = vpop.f32.mrf.mxu0
        %v7428 = vadd.f32 0.0, %v7427
        %7429 = vmatmul.f32.gmra.mxu0 %v7318
        %v7430 = vpop.f32.mrf.mxu0
        %v7431 = vadd.f32 0.0, %v7430
        %7432 = vmatmul.f32.gmra.mxu0 %v7321
        %v7433 = vpop.f32.mrf.mxu0
        %v7434 = vadd.f32 0.0, %v7433
        %7435 = vmatmul.f32.gmra.mxu0 %v7324
        %v7436 = vpop.f32.mrf.mxu0
        %v7437 = vadd.f32 0.0, %v7436
        %7438 = vmatmul.f32.gmra.mxu0 %v7327
        %v7439 = vpop.f32.mrf.mxu0
        %v7440 = vadd.f32 0.0, %v7439
        %7441 = vmatmul.f32.gmra.mxu0 %v7330
        %v7442 = vpop.f32.mrf.mxu0
        %v7443 = vadd.f32 0.0, %v7442
        %7444 = vmatmul.f32.gmra.mxu0 %v7333
        %v7445 = vpop.f32.mrf.mxu0
        %v7446 = vadd.f32 0.0, %v7445
        %7447 = vmatmul.f32.gmra.mxu0 %v7336
        %v7448 = vpop.f32.mrf.mxu0
        %v7449 = vadd.f32 0.0, %v7448
        %7450 = vmatmul.f32.gmra.mxu0 %v7339
        %v7451 = vpop.f32.mrf.mxu0
        %v7452 = vadd.f32 0.0, %v7451
        %7453 = vmatmul.f32.gmra.mxu0 %v7342
        %v7454 = vpop.f32.mrf.mxu0
        %v7455 = vadd.f32 0.0, %v7454
        %7456 = vmatmul.f32.gmra.mxu0 %v7345
        %v7457 = vpop.f32.mrf.mxu0
        %v7458 = vadd.f32 0.0, %v7457
        %7459 = vmatmul.f32.gmra.mxu0 %v7348
        %v7460 = vpop.f32.mrf.mxu0
        %v7461 = vadd.f32 0.0, %v7460
        %7462 = vmatmul.f32.gmra.mxu0 %v7351
        %v7463 = vpop.f32.mrf.mxu0
        %v7464 = vadd.f32 0.0, %v7463
        %7465 = vmatmul.f32.gmra.mxu0 %v7354
        %v7466 = vpop.f32.mrf.mxu0
        %v7467 = vadd.f32 0.0, %v7466
        %7468 = vmatmul.f32.gmra.mxu0 %v7357
        %v7469 = vpop.f32.mrf.mxu0
        %v7470 = vadd.f32 0.0, %v7469
        %7471 = vmatmul.f32.gmra.mxu0 %v7360
        %v7472 = vpop.f32.mrf.mxu0
        %v7473 = vadd.f32 0.0, %v7472
        %7474 = vmatmul.f32.gmra.mxu0 %v7363
        %v7475 = vpop.f32.mrf.mxu0
        %v7476 = vadd.f32 0.0, %v7475
        %7477 = vmatmul.f32.gmra.mxu0 %v7366
        %v7478 = vpop.f32.mrf.mxu0
        %v7479 = vadd.f32 0.0, %v7478
        %7480 = vmatmul.f32.gmra.mxu0 %v7369
        %v7481 = vpop.f32.mrf.mxu0
        %v7482 = vadd.f32 0.0, %v7481
        %7483 = vmatmul.f32.gmra.mxu0 %v7372
        %v7484 = vpop.f32.mrf.mxu0
        %v7485 = vadd.f32 0.0, %v7484
        %7486 = vmatmul.f32.gmra.mxu0 %v7375
        %v7487 = vpop.f32.mrf.mxu0
        %v7488 = vadd.f32 0.0, %v7487
        %7489 = vmatmul.f32.gmra.mxu0 %v7378
        %v7490 = vpop.f32.mrf.mxu0
        %v7491 = vadd.f32 0.0, %v7490
        %7492 = vmatmul.f32.gmra.mxu0 %v7381
        %v7493 = vpop.f32.mrf.mxu0
        %v7494 = vadd.f32 0.0, %v7493
        %7495 = vmatmul.f32.gmra.mxu0 %v7384
        %v7496 = vpop.f32.mrf.mxu0
        %v7497 = vadd.f32 0.0, %v7496
        %7498 = vdwg.mxu0
        %v7499 = vadd.f32 %v7160, %v7404
        %v7500 = vadd.f32 %v7161, %v7407
        %v7501 = vadd.f32 %v7162, %v7410
        %v7502 = vadd.f32 %v7163, %v7413
        %v7503 = vadd.f32 %v7164, %v7416
        %v7504 = vadd.f32 %v7165, %v7419
        %v7505 = vadd.f32 %v7166, %v7422
        %v7506 = vadd.f32 %v7167, %v7425
        %v7507 = vadd.f32 %v7168, %v7428
        %v7508 = vadd.f32 %v7169, %v7431
        %v7509 = vadd.f32 %v7170, %v7434
        %v7510 = vadd.f32 %v7171, %v7437
        %v7511 = vadd.f32 %v7172, %v7440
        %v7512 = vadd.f32 %v7173, %v7443
        %v7513 = vadd.f32 %v7174, %v7446
        %v7514 = vadd.f32 %v7175, %v7449
        %v7515 = vadd.f32 %v7176, %v7452
        %v7516 = vadd.f32 %v7177, %v7455
        %v7517 = vadd.f32 %v7178, %v7458
        %v7518 = vadd.f32 %v7179, %v7461
        %v7519 = vadd.f32 %v7180, %v7464
        %v7520 = vadd.f32 %v7181, %v7467
        %v7521 = vadd.f32 %v7182, %v7470
        %v7522 = vadd.f32 %v7183, %v7473
        %v7523 = vadd.f32 %v7184, %v7476
        %v7524 = vadd.f32 %v7185, %v7479
        %v7525 = vadd.f32 %v7186, %v7482
        %v7526 = vadd.f32 %v7187, %v7485
        %v7527 = vadd.f32 %v7188, %v7488
        %v7528 = vadd.f32 %v7189, %v7491
        %v7529 = vadd.f32 %v7190, %v7494
        %v7530 = vadd.f32 %v7191, %v7497
        %v7531 = vld [vmem:[%s6] sm:$0x1]
        %v7533 = vperm.slane %v7531, 0
        %v7535 = vmul.f32 %v7499, %v7533
        %v7536 = vmul.f32 %v7500, %v7533
        %v7537 = vmul.f32 %v7501, %v7533
        %v7538 = vmul.f32 %v7502, %v7533
        %v7539 = vmul.f32 %v7503, %v7533
        %v7540 = vmul.f32 %v7504, %v7533
        %v7541 = vmul.f32 %v7505, %v7533
        %v7542 = vmul.f32 %v7506, %v7533
        %v7543 = vmul.f32 %v7507, %v7533
        %v7544 = vmul.f32 %v7508, %v7533
        %v7545 = vmul.f32 %v7509, %v7533
        %v7546 = vmul.f32 %v7510, %v7533
        %v7547 = vmul.f32 %v7511, %v7533
        %v7548 = vmul.f32 %v7512, %v7533
        %v7549 = vmul.f32 %v7513, %v7533
        %v7550 = vmul.f32 %v7514, %v7533
        %v7551 = vmul.f32 %v7515, %v7533
        %v7552 = vmul.f32 %v7516, %v7533
        %v7553 = vmul.f32 %v7517, %v7533
        %v7554 = vmul.f32 %v7518, %v7533
        %v7555 = vmul.f32 %v7519, %v7533
        %v7556 = vmul.f32 %v7520, %v7533
        %v7557 = vmul.f32 %v7521, %v7533
        %v7558 = vmul.f32 %v7522, %v7533
        %v7559 = vmul.f32 %v7523, %v7533
        %v7560 = vmul.f32 %v7524, %v7533
        %v7561 = vmul.f32 %v7525, %v7533
        %v7562 = vmul.f32 %v7526, %v7533
        %v7563 = vmul.f32 %v7527, %v7533
        %v7564 = vmul.f32 %v7528, %v7533
        %v7565 = vmul.f32 %v7529, %v7533
        %v7566 = vmul.f32 %v7530, %v7533
        %v7567 = vld [vmem:[%s7] sm:$0x1]
        %v7569 = vperm.slane %v7567, 0
        %v7571 = vadd.f32 %v7535, %v7569
        %v7572 = vadd.f32 %v7536, %v7569
        %v7573 = vadd.f32 %v7537, %v7569
        %v7574 = vadd.f32 %v7538, %v7569
        %v7575 = vadd.f32 %v7539, %v7569
        %v7576 = vadd.f32 %v7540, %v7569
        %v7577 = vadd.f32 %v7541, %v7569
        %v7578 = vadd.f32 %v7542, %v7569
        %v7579 = vadd.f32 %v7543, %v7569
        %v7580 = vadd.f32 %v7544, %v7569
        %v7581 = vadd.f32 %v7545, %v7569
        %v7582 = vadd.f32 %v7546, %v7569
        %v7583 = vadd.f32 %v7547, %v7569
        %v7584 = vadd.f32 %v7548, %v7569
        %v7585 = vadd.f32 %v7549, %v7569
        %v7586 = vadd.f32 %v7550, %v7569
        %v7587 = vadd.f32 %v7551, %v7569
        %v7588 = vadd.f32 %v7552, %v7569
        %v7589 = vadd.f32 %v7553, %v7569
        %v7590 = vadd.f32 %v7554, %v7569
        %v7591 = vadd.f32 %v7555, %v7569
        %v7592 = vadd.f32 %v7556, %v7569
        %v7593 = vadd.f32 %v7557, %v7569
        %v7594 = vadd.f32 %v7558, %v7569
        %v7595 = vadd.f32 %v7559, %v7569
        %v7596 = vadd.f32 %v7560, %v7569
        %v7597 = vadd.f32 %v7561, %v7569
        %v7598 = vadd.f32 %v7562, %v7569
        %v7599 = vadd.f32 %v7563, %v7569
        %v7600 = vadd.f32 %v7564, %v7569
        %v7601 = vadd.f32 %v7565, %v7569
        %v7602 = vadd.f32 %v7566, %v7569
        %v7603 = vadd.f32 %v7571, %v323
        %v7604 = vadd.f32 %v7572, %v324
        %v7605 = vadd.f32 %v7573, %v325
        %v7606 = vadd.f32 %v7574, %v326
        %v7607 = vadd.f32 %v7575, %v327
        %v7608 = vadd.f32 %v7576, %v328
        %v7609 = vadd.f32 %v7577, %v329
        %v7610 = vadd.f32 %v7578, %v330
        %v7611 = vadd.f32 %v7579, %v331
        %v7612 = vadd.f32 %v7580, %v332
        %v7613 = vadd.f32 %v7581, %v333
        %v7614 = vadd.f32 %v7582, %v334
        %v7615 = vadd.f32 %v7583, %v335
        %v7616 = vadd.f32 %v7584, %v336
        %v7617 = vadd.f32 %v7585, %v337
        %v7618 = vadd.f32 %v7586, %v338
        %v7619 = vadd.f32 %v7587, %v339
        %v7620 = vadd.f32 %v7588, %v340
        %v7621 = vadd.f32 %v7589, %v341
        %v7622 = vadd.f32 %v7590, %v342
        %v7623 = vadd.f32 %v7591, %v343
        %v7624 = vadd.f32 %v7592, %v344
        %v7625 = vadd.f32 %v7593, %v345
        %v7626 = vadd.f32 %v7594, %v346
        %v7627 = vadd.f32 %v7595, %v347
        %v7628 = vadd.f32 %v7596, %v348
        %v7629 = vadd.f32 %v7597, %v349
        %v7630 = vadd.f32 %v7598, %v350
        %v7631 = vadd.f32 %v7599, %v351
        %v7632 = vadd.f32 %v7600, %v352
        %v7633 = vadd.f32 %v7601, %v353
        %v7634 = vadd.f32 %v7602, %v354
        %v7635 = vmax.f32 %v7603, 0.0
        %v7636 = vmax.f32 %v7604, 0.0
        %v7637 = vmax.f32 %v7605, 0.0
        %v7638 = vmax.f32 %v7606, 0.0
        %v7639 = vmax.f32 %v7607, 0.0
        %v7640 = vmax.f32 %v7608, 0.0
        %v7641 = vmax.f32 %v7609, 0.0
        %v7642 = vmax.f32 %v7610, 0.0
        %v7643 = vmax.f32 %v7611, 0.0
        %v7644 = vmax.f32 %v7612, 0.0
        %v7645 = vmax.f32 %v7613, 0.0
        %v7646 = vmax.f32 %v7614, 0.0
        %v7647 = vmax.f32 %v7615, 0.0
        %v7648 = vmax.f32 %v7616, 0.0
        %v7649 = vmax.f32 %v7617, 0.0
        %v7650 = vmax.f32 %v7618, 0.0
        %v7651 = vmax.f32 %v7619, 0.0
        %v7652 = vmax.f32 %v7620, 0.0
        %v7653 = vmax.f32 %v7621, 0.0
        %v7654 = vmax.f32 %v7622, 0.0
        %v7655 = vmax.f32 %v7623, 0.0
        %v7656 = vmax.f32 %v7624, 0.0
        %v7657 = vmax.f32 %v7625, 0.0
        %v7658 = vmax.f32 %v7626, 0.0
        %v7659 = vmax.f32 %v7627, 0.0
        %v7660 = vmax.f32 %v7628, 0.0
        %v7661 = vmax.f32 %v7629, 0.0
        %v7662 = vmax.f32 %v7630, 0.0
        %v7663 = vmax.f32 %v7631, 0.0
        %v7664 = vmax.f32 %v7632, 0.0
        %v7665 = vmax.f32 %v7633, 0.0
        %v7666 = vmax.f32 %v7634, 0.0
        %7667 = vst.msk [vmem:[%s322] sm:$0xff] %vm874, %v7635
        %7668 = vst.msk [vmem:[%s322 + $0x8] sm:$0xff] %vm874, %v7636
        %7669 = vst.msk [vmem:[%s322 + $0x10] sm:$0xff] %vm874, %v7637
        %7670 = vst.msk [vmem:[%s322 + $0x18] sm:$0xff] %vm874, %v7638
        %7671 = vst.msk [vmem:[%s322 + $0x20] sm:$0xff] %vm874, %v7639
        %7672 = vst.msk [vmem:[%s322 + $0x28] sm:$0xff] %vm874, %v7640
        %7673 = vst.msk [vmem:[%s322 + $0x30] sm:$0xff] %vm874, %v7641
        %7674 = vst.msk [vmem:[%s322 + $0x38] sm:$0xff] %vm874, %v7642
        %7675 = vst.msk [vmem:[%s322 + $0x40] sm:$0xff] %vm874, %v7643
        %7676 = vst.msk [vmem:[%s322 + $0x48] sm:$0xff] %vm874, %v7644
        %7677 = vst.msk [vmem:[%s322 + $0x50] sm:$0xff] %vm874, %v7645
        %7678 = vst.msk [vmem:[%s322 + $0x58] sm:$0xff] %vm874, %v7646
        %7679 = vst.msk [vmem:[%s322 + $0x60] sm:$0xff] %vm874, %v7647
        %7680 = vst.msk [vmem:[%s322 + $0x68] sm:$0xff] %vm874, %v7648
        %7681 = vst.msk [vmem:[%s322 + $0x70] sm:$0xff] %vm874, %v7649
        %7682 = vst.msk [vmem:[%s322 + $0x78] sm:$0xff] %vm874, %v7650
        %7683 = vst.msk [vmem:[%s322 + $0x80] sm:$0xff] %vm874, %v7651
        %7684 = vst.msk [vmem:[%s322 + $0x88] sm:$0xff] %vm874, %v7652
        %7685 = vst.msk [vmem:[%s322 + $0x90] sm:$0xff] %vm874, %v7653
        %7686 = vst.msk [vmem:[%s322 + $0x98] sm:$0xff] %vm874, %v7654
        %7687 = vst.msk [vmem:[%s322 + $0xa0] sm:$0xff] %vm874, %v7655
        %7688 = vst.msk [vmem:[%s322 + $0xa8] sm:$0xff] %vm874, %v7656
        %7689 = vst.msk [vmem:[%s322 + $0xb0] sm:$0xff] %vm874, %v7657
        %7690 = vst.msk [vmem:[%s322 + $0xb8] sm:$0xff] %vm874, %v7658
        %7691 = vst.msk [vmem:[%s322 + $0xc0] sm:$0xff] %vm874, %v7659
        %7692 = vst.msk [vmem:[%s322 + $0xc8] sm:$0xff] %vm874, %v7660
        %7693 = vst.msk [vmem:[%s322 + $0xd0] sm:$0xff] %vm874, %v7661
        %7694 = vst.msk [vmem:[%s322 + $0xd8] sm:$0xff] %vm874, %v7662
        %7695 = vst.msk [vmem:[%s322 + $0xe0] sm:$0xff] %vm874, %v7663
        %7696 = vst.msk [vmem:[%s322 + $0xe8] sm:$0xff] %vm874, %v7664
        %7697 = vst.msk [vmem:[%s322 + $0xf0] sm:$0xff] %vm874, %v7665
        %7698 = vst.msk [vmem:[%s322 + $0xf8] sm:$0xff] %vm874, %v7666
        %p7699 = scmp.lt.s32.totalorder %s20, 1
        %s7700 = scalar_select %p7699, %s20, 1
        %s7701 = smul.addr %s7700, 32
        %s7702 = smul.addr %s7701, 8
        %s7703 = scalar_lea.vmem %s8, %s7702
        // Predicated region
        $region57: #{residual_block.1} parent=51 // pred_check
          %p7704 = pneg %p211
        $region58: #{residual_block.1} parent=51 // pred_check_branch
          %7706 = sbr.rel (%p7704) target = $region60
        $region59: #{residual_block.1} parent=51 // pred_region
          _
        $region60: #{residual_block.1} parent=51 // pred_fallthru
          _
      $region52: #{residual_block.1} parent=5 // pred_fallthru
        _
      %p7707 = scmp.le.s32.totalorder 2, %s15
      // Predicated region
      $region61: #{residual_block.1} parent=5 // pred_check
        %p7708 = pneg %p7707
      $region62: #{residual_block.1} parent=5 // pred_check_branch
        %7710 = sbr.rel (%p7708) target = $region64
      $region63: #{residual_block.1} parent=5 // pred_region
        %s7711 = ssub.s32 %s15, 2
        // Predicated region
        $region65: #{residual_block.1} parent=63 // pred_check
          %p7712 = pneg %p217
        $region66: #{residual_block.1} parent=63 // pred_check_branch
          %7714 = sbr.rel (%p7712) target = $region68
        $region67: #{residual_block.1} parent=63 // pred_region
          %p7715 = scmp.lt.s32.totalorder %s21, 1
          %s7716 = scalar_select %p7715, %s21, 1
          %s7717 = smul.addr %s7716, 32
          %s7718 = smul.addr %s7717, 8
          %s7719 = scalar_lea.vmem %s8, %s7718
        $region68: #{residual_block.1} parent=63 // pred_fallthru
          _
      $region64: #{residual_block.1} parent=5 // pred_fallthru
        _
    $region6: #{residual_block.1} parent=1 // loop_footer
      %s19 = sadd.s32 1, %s15
    $region7: #{residual_block.1} parent=1 // loop_footer_branch
      %14 = sbr.rel target = $region3
    $region8: #{residual_block.1} parent=1 // loop_exit
      _
    %7720 = vsyncpa [#allocation3], 1
    %s7721 = scalar_lea.sflag [#allocation3], 1
    %7722 = vsyncpa %s7721, 1

</llo_original>
